<compile_context>
chip_gen: v7x
topology: tpu7x:2x2x1
jax: 0.10.0
libtpu: 0.0.40
codegen_flags: <defaults>
</compile_context>

<pallas_src>
import functools

import jax
import jax.numpy as jnp
from jax.experimental import pallas as pl
from jax.experimental.pallas import tpu as pltpu


def tfilm_kernel(x_ref, w_ih_ref, w_hh_ref, b_ref, o_ref,
                 h_ref, c_ref, hs_ref, *,
                 block_size, blocks_per_chunk, hidden):
    C = hidden
    bpc = blocks_per_chunk
    bs = block_size
    Bt = x_ref.shape[0]
    chunk_len = bpc * bs

    # Reset the LSTM carry at the start of each batch tile's time sweep.
    # Time is grid axis 1 (the sequential/"arbitrary" axis).
    @pl.when(pl.program_id(1) == 0)
    def _():
        h_ref[...] = jnp.zeros_like(h_ref)
        c_ref[...] = jnp.zeros_like(c_ref)

    w_ih = w_ih_ref[...]          # (C, 4C), gate columns permuted (i, f, o, g)
    w_hh = w_hh_ref[...]          # (C, 4C)

    # ---------- Bulk per-chunk work, off the serial LSTM chain -------------
    x_chunk = x_ref[...]                                   # (Bt, C, chunk_len)
    x_blocks = x_chunk.reshape(Bt, C, bpc, bs)             # (Bt, C, bpc, bs)
    # MaxPool1d(kernel_size=block_size) for all steps of the chunk at once.
    pooled = jnp.max(x_blocks, axis=-1)                    # (Bt, C, bpc)
    pooled_t = jnp.transpose(pooled, (2, 0, 1)).astype(jnp.float32)  # (bpc, Bt, C)
    # One MXU matmul computes the input projection for every LSTM step.
    xw = jnp.dot(pooled_t.reshape(bpc * Bt, C).astype(w_ih.dtype), w_ih,
                 preferred_element_type=jnp.float32)       # (bpc*Bt, 4C)
    x_proj = xw.reshape(bpc, Bt, 4 * C) + b_ref[...]       # (bpc, Bt, 4C) f32

    # ---------- Serial recurrence: only h @ w_hh + gate math ---------------
    h = h_ref[...]                                         # (Bt, C) f32 carry
    c = c_ref[...]
    for k in range(bpc):
        hw = jnp.dot(h.astype(w_hh.dtype), w_hh,
                     preferred_element_type=jnp.float32)   # (Bt, 4C)
        gates = x_proj[k] + hw                             # (Bt, 4C)
        sig = jax.nn.sigmoid(gates[:, :3 * C])             # i | f | o (one EUP pass)
        g = jnp.tanh(gates[:, 3 * C:])                     # g
        c = sig[:, C:2 * C] * c + sig[:, :C] * g
        h = sig[:, 2 * C:3 * C] * jnp.tanh(c)
        hs_ref[k] = h          # off-chain stash; bounds vreg live ranges
    h_ref[...] = h             # carry to the next time chunk
    c_ref[...] = c

    # ---------- FiLM apply + one wide lane-dense store per chunk -----------
    norm = jnp.transpose(hs_ref[...], (1, 2, 0))           # (Bt, C, bpc)
    out = x_blocks * norm[..., None]                       # (Bt, C, bpc, bs)
    o_ref[...] = out.reshape(Bt, C, chunk_len).astype(o_ref.dtype)


def _choose_blocks_per_chunk(n_blocks, block_size, B, C, itemsize,
                             vmem_budget_bytes, max_unroll=32):
    """Largest divisor of n_blocks whose chunk satisfies the (8,128) lane
    constraint, fits the VMEM budget, and keeps the unrolled loop bounded."""
    candidates = []
    for d in range(1, n_blocks + 1):
        if n_blocks % d:
            continue
        chunk_len = d * block_size
        if chunk_len % 128 != 0 and d != n_blocks:
            continue                      # BlockSpec lane constraint
        candidates.append(d)
    best = candidates[0]                  # d == n_blocks always qualifies
    for d in candidates:
        est = 4 * B * C * d * block_size * itemsize   # in+out, double-buffered
        if d <= max_unroll and est <= vmem_budget_bytes:
            best = d
    return best


def tfilm_pallas(x, w_ih, w_hh, b_ih, b_hh, block_size, *,
                 blocks_per_chunk=None, batch_tile=None, matmul_dtype=None,
                 vmem_budget_bytes=40 * 1024 * 1024):
    B, C, T = x.shape
    assert T % block_size == 0, "T must be a multiple of block_size"
    assert C % 8 == 0, "n_filters must be a multiple of 8 (sublane constraint)"
    n_blocks = T // block_size

    if blocks_per_chunk is None:
        blocks_per_chunk = _choose_blocks_per_chunk(
            n_blocks, block_size, B, C, x.dtype.itemsize, vmem_budget_bytes)
    assert n_blocks % blocks_per_chunk == 0
    chunk_len = blocks_per_chunk * block_size
    assert chunk_len % 128 == 0 or chunk_len == T, \
        "chunk_len must be a multiple of 128 (or equal T)"
    n_chunks = n_blocks // blocks_per_chunk

    if batch_tile is None:
        batch_tile = B                       # no batch split by default
    assert B % batch_tile == 0
    n_b_tiles = B // batch_tile

    # matmul operand dtype: set to jnp.bfloat16 on v6e/v7x to halve weight
    # footprint / double MXU throughput; gate math & carries stay f32.
    w_dtype = jnp.float32 if matmul_dtype is None else matmul_dtype

    # Permute gate rows from PyTorch order (i, f, g, o) -> (i, f, o, g) so one
    # sigmoid covers the contiguous i|f|o span inside the kernel.
    def perm_rows(m):
        return jnp.concatenate([m[:2 * C], m[3 * C:], m[2 * C:3 * C]], axis=0)

    w_ih_t = perm_rows(w_ih).T.astype(w_dtype)          # (C, 4C)
    w_hh_t = perm_rows(w_hh).T.astype(w_dtype)          # (C, 4C)
    bias = perm_rows(b_ih + b_hh).reshape(1, 4 * C).astype(jnp.float32)

    kernel = functools.partial(tfilm_kernel, block_size=block_size,
                               blocks_per_chunk=blocks_per_chunk, hidden=C)

    # Explicit scoped-VMEM limit (don't rely on the 16/32 MiB default); keep
    # the cap at 48 MiB so the same tiling is safe on v7x's 64 MiB VMEM.
    chunk_bytes = 4 * batch_tile * C * chunk_len * x.dtype.itemsize
    w_bytes = 2 * (2 * C * 4 * C * jnp.dtype(w_dtype).itemsize + 4 * C * 4)
    scratch_bytes = (2 + blocks_per_chunk) * batch_tile * C * 4
    vmem_limit = int(min(max(chunk_bytes + w_bytes + scratch_bytes + (4 << 20),
                             32 << 20), 48 << 20))

    return pl.pallas_call(
        kernel,
        out_shape=jax.ShapeDtypeStruct((B, C, T), x.dtype),
        grid_spec=pltpu.PrefetchScalarGridSpec(
            num_scalar_prefetch=0,
            grid=(n_b_tiles, n_chunks),
            in_specs=[
                pl.BlockSpec((batch_tile, C, chunk_len), lambda b, t: (b, 0, t)),
                # Grid-invariant weights / bias: constant index maps.
                pl.BlockSpec((C, 4 * C), lambda b, t: (0, 0)),
                pl.BlockSpec((C, 4 * C), lambda b, t: (0, 0)),
                pl.BlockSpec((1, 4 * C), lambda b, t: (0, 0)),
            ],
            out_specs=pl.BlockSpec((batch_tile, C, chunk_len),
                                   lambda b, t: (b, 0, t)),
            scratch_shapes=[
                pltpu.VMEM((batch_tile, C), jnp.float32),             # h carry
                pltpu.VMEM((batch_tile, C), jnp.float32),             # c carry
                pltpu.VMEM((blocks_per_chunk, batch_tile, C), jnp.float32),  # per-step h
            ],
        ),
        compiler_params=pltpu.CompilerParams(
            dimension_semantics=("parallel", "arbitrary"),
            vmem_limit_bytes=vmem_limit),
    )(x, w_ih_t, w_hh_t, bias)


def tfilm_ref(x, w_ih, w_hh, b_ih, b_hh, block_size):
    """Pure-JAX reference matching the PyTorch TFiLM forward."""
    B, C, T = x.shape
    nb = T // block_size
    pooled = jnp.max(x.reshape(B, C, nb, block_size), axis=-1)   # (B, C, nb)
    xs = jnp.transpose(pooled, (2, 0, 1))                        # (nb, B, C)

    def step(carry, x_t):
        h, c = carry
        gates = x_t @ w_ih.T + h @ w_hh.T + b_ih + b_hh          # (B, 4C)
        i = jax.nn.sigmoid(gates[:, 0:C])
        f = jax.nn.sigmoid(gates[:, C:2 * C])
        g = jnp.tanh(gates[:, 2 * C:3 * C])
        o = jax.nn.sigmoid(gates[:, 3 * C:4 * C])
        c = f * c + i * g
        h = o * jnp.tanh(c)
        return (h, c), h

    init = (jnp.zeros((B, C), x.dtype), jnp.zeros((B, C), x.dtype))
    _, hs = jax.lax.scan(step, init, xs)                         # (nb, B, C)
    norm = jnp.transpose(hs, (1, 2, 0))                          # (B, C, nb)
    out = x.reshape(B, C, nb, block_size) * norm[..., None]
    return out.reshape(B, C, T)


if __name__ == "__main__":
    # Module config: TFiLM(block_size=128, input_dim=32)
    B, C = 2, 32
    block_size = 128
    n_blocks = 8
    T = block_size * n_blocks

    key = jax.random.PRNGKey(0)
    kx, k1, k2, k3, k4 = jax.random.split(key, 5)

    x = jax.random.normal(kx, (B, C, T), dtype=jnp.float32)

    # LSTM(input_size=C, hidden_size=C) parameter shapes, PyTorch-style
    # uniform(-1/sqrt(C), 1/sqrt(C)) init.
    kinit = 1.0 / jnp.sqrt(jnp.float32(C))
    w_ih = jax.random.uniform(k1, (4 * C, C), jnp.float32, -kinit, kinit)
    w_hh = jax.random.uniform(k2, (4 * C, C), jnp.float32, -kinit, kinit)
    b_ih = jax.random.uniform(k3, (4 * C,), jnp.float32, -kinit, kinit)
    b_hh = jax.random.uniform(k4, (4 * C,), jnp.float32, -kinit, kinit)

    ref = jax.block_until_ready(tfilm_ref(x, w_ih, w_hh, b_ih, b_hh, block_size))

    # 1) Explicit chunking (2 time chunks) -> exercises the cross-chunk carry.
    out = jax.block_until_ready(
        tfilm_pallas(x, w_ih, w_hh, b_ih, b_hh, block_size, blocks_per_chunk=4))
    assert out.shape == (B, C, T) and out.dtype == jnp.float32
    assert jnp.allclose(out, ref, rtol=1e-3, atol=1e-3), "mismatch (chunked)"

    # 2) Auto chunking from the VMEM budget (single chunk here).
    out2 = jax.block_until_ready(
        tfilm_pallas(x, w_ih, w_hh, b_ih, b_hh, block_size))
    assert jnp.allclose(out2, ref, rtol=1e-3, atol=1e-3), "mismatch (auto)"

    # 3) Batch-tiled path (parallel batch grid axis, e.g. for v7x 2 TCs).
    out3 = jax.block_until_ready(
        tfilm_pallas(x, w_ih, w_hh, b_ih, b_hh, block_size,
                     blocks_per_chunk=2, batch_tile=1))
    assert jnp.allclose(out3, ref, rtol=1e-3, atol=1e-3), "mismatch (batch-tiled)"

    print("KERNEL_OK")
</pallas_src>

<mosaic_0001>
module attributes {stable_mosaic.version = 11 : i64} {
  func.func @tfilm_kernel(%arg0: i32, %arg1: i32, %arg2: memref<2x32x512xf32, #tpu.memory_space<vmem>>, %arg3: memref<32x128xf32, #tpu.memory_space<vmem>>, %arg4: memref<32x128xf32, #tpu.memory_space<vmem>>, %arg5: memref<1x128xf32, #tpu.memory_space<vmem>>, %arg6: memref<2x32x512xf32, #tpu.memory_space<vmem>>, %arg7: memref<2x32xf32, #tpu.memory_space<vmem>>, %arg8: memref<2x32xf32, #tpu.memory_space<vmem>>, %arg9: memref<4x2x32xf32, #tpu.memory_space<vmem>>) attributes {dimension_semantics = [#tpu.dimension_semantics<parallel>, #tpu.dimension_semantics<arbitrary>], iteration_bounds = array<i64: 1, 2>, scalar_prefetch = 0 : i64, scratch_operands = 3 : i64, tpu.core_type = #tpu.core_type<tc>, window_params = [{transform_indices = @transform_0, window_bounds = array<i64: 2, 32, 512>}, {pipeline_mode = #tpu.pipeline_mode<synchronous>, transform_indices = @transform_1, window_bounds = array<i64: 32, 128>}, {pipeline_mode = #tpu.pipeline_mode<synchronous>, transform_indices = @transform_2, window_bounds = array<i64: 32, 128>}, {pipeline_mode = #tpu.pipeline_mode<synchronous>, transform_indices = @transform_3, window_bounds = array<i64: 1, 128>}, {transform_indices = @transform_4, window_bounds = array<i64: 2, 32, 512>}]} {
    %c0_i32 = arith.constant 0 : i32
    %0 = arith.cmpi eq, %arg1, %c0_i32 : i32
    %1 = arith.extui %0 : i1 to i32
    %c0_i32_0 = arith.constant 0 : i32
    %2 = arith.cmpi ne, %1, %c0_i32_0 : i32
    scf.if %2 {
      %cst_41 = arith.constant 0.000000e+00 : f32
      %119 = vector.broadcast %cst_41 : f32 to vector<2x32xf32>
      %c0_42 = arith.constant 0 : index
      %c0_43 = arith.constant 0 : index
      %120 = vector.load %arg7[%c0_42, %c0_43] : memref<2x32xf32, #tpu.memory_space<vmem>>, vector<2x32xf32>
      tpu.vector_store %arg7[%c0_42, %c0_43], %119 {strides = array<i32>} : memref<2x32xf32, #tpu.memory_space<vmem>>, vector<2x32xf32>,
      %cst_44 = arith.constant 0.000000e+00 : f32
      %121 = vector.broadcast %cst_44 : f32 to vector<2x32xf32>
      %c0_45 = arith.constant 0 : index
      %c0_46 = arith.constant 0 : index
      %122 = vector.load %arg8[%c0_45, %c0_46] : memref<2x32xf32, #tpu.memory_space<vmem>>, vector<2x32xf32>
      tpu.vector_store %arg8[%c0_45, %c0_46], %121 {strides = array<i32>} : memref<2x32xf32, #tpu.memory_space<vmem>>, vector<2x32xf32>,
    } else {
    }
    %c0 = arith.constant 0 : index
    %c0_1 = arith.constant 0 : index
    %3 = vector.load %arg3[%c0, %c0_1] : memref<32x128xf32, #tpu.memory_space<vmem>>, vector<32x128xf32>
    %c0_2 = arith.constant 0 : index
    %c0_3 = arith.constant 0 : index
    %4 = vector.load %arg4[%c0_2, %c0_3] : memref<32x128xf32, #tpu.memory_space<vmem>>, vector<32x128xf32>
    %c0_4 = arith.constant 0 : index
    %c0_5 = arith.constant 0 : index
    %c0_6 = arith.constant 0 : index
    %5 = vector.load %arg2[%c0_4, %c0_5, %c0_6] : memref<2x32x512xf32, #tpu.memory_space<vmem>>, vector<2x32x512xf32>
    %6 = vector.shape_cast %5 : vector<2x32x512xf32> to vector<2x32x4x128xf32>
    %cst = arith.constant dense<0xFF800000> : vector<2x32x4xf32>
    %7 = vector.multi_reduction <maximumf>, %6, %cst [3] : vector<2x32x4x128xf32> to vector<2x32x4xf32>
    %8 = tpu.transpose %7, [2, 0, 1] : vector<2x32x4xf32> -> vector<4x2x32xf32>
    %9 = vector.shape_cast %8 : vector<4x2x32xf32> to vector<8x32xf32>
    %cst_7 = arith.constant dense<0.000000e+00> : vector<8x128xf32>
    %10 = tpu.matmul %9, %3, %cst_7 {dimension_numbers = #tpu.dot_dimension_numbers<[1], [0], [0], [1], [0, 0, 1, 1], [], []>} : vector<8x32xf32>, vector<32x128xf32>, vector<8x128xf32> -> vector<8x128xf32>
    %11 = vector.shape_cast %10 : vector<8x128xf32> to vector<4x2x128xf32>
    %c0_8 = arith.constant 0 : index
    %c0_9 = arith.constant 0 : index
    %12 = vector.load %arg5[%c0_8, %c0_9] : memref<1x128xf32, #tpu.memory_space<vmem>>, vector<1x128xf32>
    %13 = vector.shape_cast %12 : vector<1x128xf32> to vector<1x1x128xf32>
    %14 = vector.broadcast %13 : vector<1x1x128xf32> to vector<4x2x128xf32>
    %15 = arith.addf %11, %14 : vector<4x2x128xf32>
    %c0_10 = arith.constant 0 : index
    %c0_11 = arith.constant 0 : index
    %16 = vector.load %arg7[%c0_10, %c0_11] : memref<2x32xf32, #tpu.memory_space<vmem>>, vector<2x32xf32>
    %c0_12 = arith.constant 0 : index
    %c0_13 = arith.constant 0 : index
    %17 = vector.load %arg8[%c0_12, %c0_13] : memref<2x32xf32, #tpu.memory_space<vmem>>, vector<2x32xf32>
    %cst_14 = arith.constant dense<0.000000e+00> : vector<2x128xf32>
    %18 = tpu.matmul %16, %4, %cst_14 {dimension_numbers = #tpu.dot_dimension_numbers<[1], [0], [0], [1], [0, 0, 1, 1], [], []>} : vector<2x32xf32>, vector<32x128xf32>, vector<2x128xf32> -> vector<2x128xf32>
    %19 = vector.extract_strided_slice %15 {offsets = [0, 0, 0], sizes = [1, 2, 128], strides = [1, 1, 1]} : vector<4x2x128xf32> to vector<1x2x128xf32>
    %20 = vector.shape_cast %19 : vector<1x2x128xf32> to vector<2x128xf32>
    %21 = arith.addf %20, %18 : vector<2x128xf32>
    %22 = vector.extract_strided_slice %21 {offsets = [0, 0], sizes = [2, 96], strides = [1, 1]} : vector<2x128xf32> to vector<2x96xf32>
    %23 = arith.negf %22 : vector<2x96xf32>
    %24 = math.exp %23 : vector<2x96xf32>
    %cst_15 = arith.constant 1.000000e+00 : f32
    %25 = vector.broadcast %cst_15 : f32 to vector<2x96xf32>
    %26 = arith.addf %25, %24 : vector<2x96xf32>
    %27 = arith.divf %25, %26 : vector<2x96xf32>
    %28 = vector.extract_strided_slice %21 {offsets = [0, 96], sizes = [2, 32], strides = [1, 1]} : vector<2x128xf32> to vector<2x32xf32>
    %29 = math.tanh %28 : vector<2x32xf32>
    %30 = vector.extract_strided_slice %27 {offsets = [0, 32], sizes = [2, 32], strides = [1, 1]} : vector<2x96xf32> to vector<2x32xf32>
    %31 = arith.mulf %30, %17 : vector<2x32xf32>
    %32 = vector.extract_strided_slice %27 {offsets = [0, 0], sizes = [2, 32], strides = [1, 1]} : vector<2x96xf32> to vector<2x32xf32>
    %33 = arith.mulf %32, %29 : vector<2x32xf32>
    %34 = arith.addf %31, %33 : vector<2x32xf32>
    %35 = vector.extract_strided_slice %27 {offsets = [0, 64], sizes = [2, 32], strides = [1, 1]} : vector<2x96xf32> to vector<2x32xf32>
    %36 = math.tanh %34 : vector<2x32xf32>
    %37 = arith.mulf %35, %36 : vector<2x32xf32>
    %c0_16 = arith.constant 0 : index
    %c0_17 = arith.constant 0 : index
    %c0_18 = arith.constant 0 : index
    %38 = vector.load %arg9[%c0_16, %c0_17, %c0_18] : memref<4x2x32xf32, #tpu.memory_space<vmem>>, vector<1x2x32xf32>
    %39 = vector.shape_cast %38 : vector<1x2x32xf32> to vector<2x32xf32>
    %40 = vector.shape_cast %37 : vector<2x32xf32> to vector<1x2x32xf32>
    tpu.vector_store %arg9[%c0_16, %c0_17, %c0_18], %40 {strides = array<i32>} : memref<4x2x32xf32, #tpu.memory_space<vmem>>, vector<1x2x32xf32>,
    %cst_19 = arith.constant dense<0.000000e+00> : vector<2x128xf32>
    %41 = tpu.matmul %37, %4, %cst_19 {dimension_numbers = #tpu.dot_dimension_numbers<[1], [0], [0], [1], [0, 0, 1, 1], [], []>} : vector<2x32xf32>, vector<32x128xf32>, vector<2x128xf32> -> vector<2x128xf32>
    %42 = vector.extract_strided_slice %15 {offsets = [1, 0, 0], sizes = [1, 2, 128], strides = [1, 1, 1]} : vector<4x2x128xf32> to vector<1x2x128xf32>
    %43 = vector.shape_cast %42 : vector<1x2x128xf32> to vector<2x128xf32>
    %44 = arith.addf %43, %41 : vector<2x128xf32>
    %45 = vector.extract_strided_slice %44 {offsets = [0, 0], sizes = [2, 96], strides = [1, 1]} : vector<2x128xf32> to vector<2x96xf32>
    %46 = arith.negf %45 : vector<2x96xf32>
    %47 = math.exp %46 : vector<2x96xf32>
    %cst_20 = arith.constant 1.000000e+00 : f32
    %48 = vector.broadcast %cst_20 : f32 to vector<2x96xf32>
    %49 = arith.addf %48, %47 : vector<2x96xf32>
    %50 = arith.divf %48, %49 : vector<2x96xf32>
    %51 = vector.extract_strided_slice %44 {offsets = [0, 96], sizes = [2, 32], strides = [1, 1]} : vector<2x128xf32> to vector<2x32xf32>
    %52 = math.tanh %51 : vector<2x32xf32>
    %53 = vector.extract_strided_slice %50 {offsets = [0, 32], sizes = [2, 32], strides = [1, 1]} : vector<2x96xf32> to vector<2x32xf32>
    %54 = arith.mulf %53, %34 : vector<2x32xf32>
    %55 = vector.extract_strided_slice %50 {offsets = [0, 0], sizes = [2, 32], strides = [1, 1]} : vector<2x96xf32> to vector<2x32xf32>
    %56 = arith.mulf %55, %52 : vector<2x32xf32>
    %57 = arith.addf %54, %56 : vector<2x32xf32>
    %58 = vector.extract_strided_slice %50 {offsets = [0, 64], sizes = [2, 32], strides = [1, 1]} : vector<2x96xf32> to vector<2x32xf32>
    %59 = math.tanh %57 : vector<2x32xf32>
    %60 = arith.mulf %58, %59 : vector<2x32xf32>
    %c1 = arith.constant 1 : index
    %c0_21 = arith.constant 0 : index
    %c0_22 = arith.constant 0 : index
    %61 = vector.load %arg9[%c1, %c0_21, %c0_22] : memref<4x2x32xf32, #tpu.memory_space<vmem>>, vector<1x2x32xf32>
    %62 = vector.shape_cast %61 : vector<1x2x32xf32> to vector<2x32xf32>
    %63 = vector.shape_cast %60 : vector<2x32xf32> to vector<1x2x32xf32>
    tpu.vector_store %arg9[%c1, %c0_21, %c0_22], %63 {strides = array<i32>} : memref<4x2x32xf32, #tpu.memory_space<vmem>>, vector<1x2x32xf32>,
    %cst_23 = arith.constant dense<0.000000e+00> : vector<2x128xf32>
    %64 = tpu.matmul %60, %4, %cst_23 {dimension_numbers = #tpu.dot_dimension_numbers<[1], [0], [0], [1], [0, 0, 1, 1], [], []>} : vector<2x32xf32>, vector<32x128xf32>, vector<2x128xf32> -> vector<2x128xf32>
    %65 = vector.extract_strided_slice %15 {offsets = [2, 0, 0], sizes = [1, 2, 128], strides = [1, 1, 1]} : vector<4x2x128xf32> to vector<1x2x128xf32>
    %66 = vector.shape_cast %65 : vector<1x2x128xf32> to vector<2x128xf32>
    %67 = arith.addf %66, %64 : vector<2x128xf32>
    %68 = vector.extract_strided_slice %67 {offsets = [0, 0], sizes = [2, 96], strides = [1, 1]} : vector<2x128xf32> to vector<2x96xf32>
    %69 = arith.negf %68 : vector<2x96xf32>
    %70 = math.exp %69 : vector<2x96xf32>
    %cst_24 = arith.constant 1.000000e+00 : f32
    %71 = vector.broadcast %cst_24 : f32 to vector<2x96xf32>
    %72 = arith.addf %71, %70 : vector<2x96xf32>
    %73 = arith.divf %71, %72 : vector<2x96xf32>
    %74 = vector.extract_strided_slice %67 {offsets = [0, 96], sizes = [2, 32], strides = [1, 1]} : vector<2x128xf32> to vector<2x32xf32>
    %75 = math.tanh %74 : vector<2x32xf32>
    %76 = vector.extract_strided_slice %73 {offsets = [0, 32], sizes = [2, 32], strides = [1, 1]} : vector<2x96xf32> to vector<2x32xf32>
    %77 = arith.mulf %76, %57 : vector<2x32xf32>
    %78 = vector.extract_strided_slice %73 {offsets = [0, 0], sizes = [2, 32], strides = [1, 1]} : vector<2x96xf32> to vector<2x32xf32>
    %79 = arith.mulf %78, %75 : vector<2x32xf32>
    %80 = arith.addf %77, %79 : vector<2x32xf32>
    %81 = vector.extract_strided_slice %73 {offsets = [0, 64], sizes = [2, 32], strides = [1, 1]} : vector<2x96xf32> to vector<2x32xf32>
    %82 = math.tanh %80 : vector<2x32xf32>
    %83 = arith.mulf %81, %82 : vector<2x32xf32>
    %c2 = arith.constant 2 : index
    %c0_25 = arith.constant 0 : index
    %c0_26 = arith.constant 0 : index
    %84 = vector.load %arg9[%c2, %c0_25, %c0_26] : memref<4x2x32xf32, #tpu.memory_space<vmem>>, vector<1x2x32xf32>
    %85 = vector.shape_cast %84 : vector<1x2x32xf32> to vector<2x32xf32>
    %86 = vector.shape_cast %83 : vector<2x32xf32> to vector<1x2x32xf32>
    tpu.vector_store %arg9[%c2, %c0_25, %c0_26], %86 {strides = array<i32>} : memref<4x2x32xf32, #tpu.memory_space<vmem>>, vector<1x2x32xf32>,
    %cst_27 = arith.constant dense<0.000000e+00> : vector<2x128xf32>
    %87 = tpu.matmul %83, %4, %cst_27 {dimension_numbers = #tpu.dot_dimension_numbers<[1], [0], [0], [1], [0, 0, 1, 1], [], []>} : vector<2x32xf32>, vector<32x128xf32>, vector<2x128xf32> -> vector<2x128xf32>
    %88 = vector.extract_strided_slice %15 {offsets = [3, 0, 0], sizes = [1, 2, 128], strides = [1, 1, 1]} : vector<4x2x128xf32> to vector<1x2x128xf32>
    %89 = vector.shape_cast %88 : vector<1x2x128xf32> to vector<2x128xf32>
    %90 = arith.addf %89, %87 : vector<2x128xf32>
    %91 = vector.extract_strided_slice %90 {offsets = [0, 0], sizes = [2, 96], strides = [1, 1]} : vector<2x128xf32> to vector<2x96xf32>
    %92 = arith.negf %91 : vector<2x96xf32>
    %93 = math.exp %92 : vector<2x96xf32>
    %cst_28 = arith.constant 1.000000e+00 : f32
    %94 = vector.broadcast %cst_28 : f32 to vector<2x96xf32>
    %95 = arith.addf %94, %93 : vector<2x96xf32>
    %96 = arith.divf %94, %95 : vector<2x96xf32>
    %97 = vector.extract_strided_slice %90 {offsets = [0, 96], sizes = [2, 32], strides = [1, 1]} : vector<2x128xf32> to vector<2x32xf32>
    %98 = math.tanh %97 : vector<2x32xf32>
    %99 = vector.extract_strided_slice %96 {offsets = [0, 32], sizes = [2, 32], strides = [1, 1]} : vector<2x96xf32> to vector<2x32xf32>
    %100 = arith.mulf %99, %80 : vector<2x32xf32>
    %101 = vector.extract_strided_slice %96 {offsets = [0, 0], sizes = [2, 32], strides = [1, 1]} : vector<2x96xf32> to vector<2x32xf32>
    %102 = arith.mulf %101, %98 : vector<2x32xf32>
    %103 = arith.addf %100, %102 : vector<2x32xf32>
    %104 = vector.extract_strided_slice %96 {offsets = [0, 64], sizes = [2, 32], strides = [1, 1]} : vector<2x96xf32> to vector<2x32xf32>
    %105 = math.tanh %103 : vector<2x32xf32>
    %106 = arith.mulf %104, %105 : vector<2x32xf32>
    %c3 = arith.constant 3 : index
    %c0_29 = arith.constant 0 : index
    %c0_30 = arith.constant 0 : index
    %107 = vector.load %arg9[%c3, %c0_29, %c0_30] : memref<4x2x32xf32, #tpu.memory_space<vmem>>, vector<1x2x32xf32>
    %108 = vector.shape_cast %107 : vector<1x2x32xf32> to vector<2x32xf32>
    %109 = vector.shape_cast %106 : vector<2x32xf32> to vector<1x2x32xf32>
    tpu.vector_store %arg9[%c3, %c0_29, %c0_30], %109 {strides = array<i32>} : memref<4x2x32xf32, #tpu.memory_space<vmem>>, vector<1x2x32xf32>,
    %c0_31 = arith.constant 0 : index
    %c0_32 = arith.constant 0 : index
    %110 = vector.load %arg7[%c0_31, %c0_32] : memref<2x32xf32, #tpu.memory_space<vmem>>, vector<2x32xf32>
    tpu.vector_store %arg7[%c0_31, %c0_32], %106 {strides = array<i32>} : memref<2x32xf32, #tpu.memory_space<vmem>>, vector<2x32xf32>,
    %c0_33 = arith.constant 0 : index
    %c0_34 = arith.constant 0 : index
    %111 = vector.load %arg8[%c0_33, %c0_34] : memref<2x32xf32, #tpu.memory_space<vmem>>, vector<2x32xf32>
    tpu.vector_store %arg8[%c0_33, %c0_34], %103 {strides = array<i32>} : memref<2x32xf32, #tpu.memory_space<vmem>>, vector<2x32xf32>,
    %c0_35 = arith.constant 0 : index
    %c0_36 = arith.constant 0 : index
    %c0_37 = arith.constant 0 : index
    %112 = vector.load %arg9[%c0_35, %c0_36, %c0_37] : memref<4x2x32xf32, #tpu.memory_space<vmem>>, vector<4x2x32xf32>
    %113 = tpu.transpose %112, [1, 2, 0] : vector<4x2x32xf32> -> vector<2x32x4xf32>
    %114 = vector.shape_cast %113 : vector<2x32x4xf32> to vector<2x32x4x1xf32>
    %115 = vector.broadcast %114 : vector<2x32x4x1xf32> to vector<2x32x4x128xf32>
    %116 = arith.mulf %6, %115 : vector<2x32x4x128xf32>
    %117 = vector.shape_cast %116 : vector<2x32x4x128xf32> to vector<2x32x512xf32>
    %c0_38 = arith.constant 0 : index
    %c0_39 = arith.constant 0 : index
    %c0_40 = arith.constant 0 : index
    %118 = vector.load %arg6[%c0_38, %c0_39, %c0_40] : memref<2x32x512xf32, #tpu.memory_space<vmem>>, vector<2x32x512xf32>
    tpu.vector_store %arg6[%c0_38, %c0_39, %c0_40], %117 {strides = array<i32>} : memref<2x32x512xf32, #tpu.memory_space<vmem>>, vector<2x32x512xf32>,
    return
  }
  func.func @transform_0(%arg0: i32, %arg1: i32) -> (i32, i32, i32) {
    %c0_i32 = arith.constant 0 : i32
    %c0_i32_0 = arith.constant 0 : i32
    return %arg0, %c0_i32, %arg1 : i32, i32, i32
  }
  func.func @transform_1(%arg0: i32, %arg1: i32) -> (i32, i32) {
    %c0_i32 = arith.constant 0 : i32
    %c0_i32_0 = arith.constant 0 : i32
    %c0_i32_1 = arith.constant 0 : i32
    return %c0_i32, %c0_i32_0 : i32, i32
  }
  func.func @transform_2(%arg0: i32, %arg1: i32) -> (i32, i32) {
    %c0_i32 = arith.constant 0 : i32
    %c0_i32_0 = arith.constant 0 : i32
    %c0_i32_1 = arith.constant 0 : i32
    return %c0_i32, %c0_i32_0 : i32, i32
  }
  func.func @transform_3(%arg0: i32, %arg1: i32) -> (i32, i32) {
    %c0_i32 = arith.constant 0 : i32
    %c0_i32_0 = arith.constant 0 : i32
    %c0_i32_1 = arith.constant 0 : i32
    return %c0_i32, %c0_i32_0 : i32, i32
  }
  func.func @transform_4(%arg0: i32, %arg1: i32) -> (i32, i32, i32) {
    %c0_i32 = arith.constant 0 : i32
    %c0_i32_0 = arith.constant 0 : i32
    return %arg0, %c0_i32, %arg1 : i32, i32, i32
  }
}

</mosaic_0001>

<llo_original>
// kernel: tpu_custom_call.1
$region0: #{tpu_custom_call.1}
  #allocation0 [shape = 'u32[]', space=smem, size = 0x4, offset = 0x4, fixed_abs, tag = 'smem constant byte address 0x4 - core index']
  #allocation1 [shape = 'u32[144,128]{1,0:T(1,128)}', space=vmem, size = 0x12000, scoped, tag = 'internal scratch']
  #allocation2 [shape = 'f32[2,32]{1,0:T(2,128)}', space=vmem, size = 0x400, scoped, tag = 'scratch operand']
  #allocation3 [shape = 'f32[2,32]{1,0:T(2,128)}', space=vmem, size = 0x400, scoped, tag = 'scratch operand']
  #allocation4 [shape = 'f32[4,2,32]{2,1,0:T(2,128)}', space=vmem, size = 0x1000, scoped, tag = 'scratch operand']
  %s0 = inlined_call_operand.hbm [shape: f32[2,32,1024], index: 0, kind: input, shape index: {}]
  %s1 = inlined_call_operand.hbm [shape: f32[32,128], index: 1, kind: input, shape index: {}]
  %s2 = inlined_call_operand.hbm [shape: f32[32,128], index: 2, kind: input, shape index: {}]
  %s3 = inlined_call_operand.vmem [shape: f32[1,128], index: 3, kind: input, shape index: {}]
  %s4 = inlined_call_operand.hbm [shape: f32[2,32,1024], index: 4, kind: output, shape index: {}]
  %s5 = sld [smem:[#allocation0]]
  $region65: #{tpu_custom_call.1} parent=0
    _
  %s7 = ssub.s32 1, %s5
  %s8 = scalar_select 0, %s7, %s5
  $region1: #{tpu_custom_call.1} parent=0
    #allocation5 [shape = 'u8[262144]{0}', space=vmem, size = 0x40000, scoped, tag = 'input window, operand 0']
    #allocation6 [shape = 's32[2]{0}', space=sflag, size = 0x8, scoped, tag = 'scoped memory for tpu_custom_call.1']
    #allocation7 [shape = 's32[2]{0}', space=sflag, size = 0x8, scoped, tag = 'scoped memory for tpu_custom_call.1']
    #allocation8 [shape = 'u8[16384]{0}', space=vmem, size = 0x4000, scoped, tag = 'input window, operand 1, single buffered']
    #allocation9 [shape = 's32[1]{0}', space=sflag, size = 0x4, scoped, tag = 'scoped memory for tpu_custom_call.1']
    #allocation10 [shape = 'u8[16384]{0}', space=vmem, size = 0x4000, scoped, tag = 'input window, operand 2, single buffered']
    #allocation11 [shape = 'u8[262144]{0}', space=vmem, size = 0x40000, scoped, tag = 'output window, operand 0']
    %9 = vsyncpa [#allocation6], 0
    %s10 = scalar_lea.sflag [#allocation6], 1
    %11 = vsyncpa %s10, 0
    %12 = vsyncpa [#allocation9], 0
    %13 = vsyncpa [#allocation7], 0
    %s14 = scalar_lea.sflag [#allocation7], 1
    %15 = vsyncpa %s14, 0
    loop: start=0, step=1, limit=4
    $region2: #{tpu_custom_call.1} parent=1 // loop_pre_header
      _
    $region3: #{tpu_custom_call.1} parent=1 // loop_header
      %s17 = sphi 0, %s21
      %p18 = scmp.ge.s32.totalorder %s17, 4
      %s24 = sphi 0, %s36
      %s25 = sphi 0, %s32
      %s26 = sphi 0, %s24
      %s27 = sphi 0, %s25
      %s28 = sphi 0, %s26
      %s29 = sphi 0, %s27
      %s41 = sphi 0, %s43
      %s44 = sphi 0, %s41
      %s45 = sphi 0, %s44
      %s61 = sphi 0, %s45
      %s65 = sphi 0, %s65
      %s67 = sphi 0, %s65
      %s68 = sphi 0, %s67
      %s82 = sphi 0, %s68
      %s86 = sphi 0, %s86
      %s88 = sphi 0, %s86
      %s89 = sphi 0, %s88
      %s103 = sphi 0, %s89
      %s107 = sphi 0, %s107
      %s109 = sphi 0, %s107
      %s110 = sphi 0, %s109
      %s124 = sphi 0, %s110
      %s132 = sphi 0, %s134
      %s135 = sphi 0, %s132
      %s136 = sphi 0, %s135
      %s152 = sphi 0, %s136
    $region4: #{tpu_custom_call.1} parent=1 // loop_header_branch
      %20 = sbr.rel (%p18) target = $region8
    $region5: #{tpu_custom_call.1} parent=1 // loop_body
      %s22 = ssub.s32 %s17, 1
      %s23 = ssub.s32 %s17, 2
      %s30 = sadd.s32 1, %s25
      %p31 = scmp.ge.s32.totalorder %s30, 2
      %s32 = scalar_select %p31, 0, %s30
      %s33 = sadd.s32 1, %s24
      %s34 = scalar_select %p31, %s33, %s24
      %p35 = scmp.ge.s32.totalorder %s34, 1
      %s36 = scalar_select %p35, 0, %s34
      %s37 = ssub.s32 %s24, %s36
      %s38 = ssub.s32 %s25, %s32
      %s39 = sor.u32 %s37, %s38
      %p40 = scmp.eq.s32.totalorder %s39, 0
      %s42 = sadd.s32 %s41, 1
      %s43 = scalar_select %p40, %s41, %s42
      %p46 = pneg %p40
      %p47 = scmp.eq.s32.totalorder %s17, 1
      %p48 = por %p46, %p47
      %p49 = scmp.ne.s32.totalorder %s41, %s44
      %p50 = scmp.eq.s32.totalorder %s17, 0
      %p51 = por %p49, %p50
      %p52 = scmp.ne.s32.totalorder %s41, %s44
      %p53 = scmp.eq.s32.totalorder %s22, 1
      %p54 = por %p52, %p53
      %p55 = scmp.ne.s32.totalorder %s44, %s45
      %p56 = scmp.eq.s32.totalorder %s22, 0
      %p57 = por %p55, %p56
      %p58 = scmp.ne.s32.totalorder %s44, %s45
      %p59 = scmp.eq.s32.totalorder %s23, 1
      %p60 = por %p58, %p59
      %p62 = scmp.ne.s32.totalorder %s45, %s61
      %p63 = scmp.eq.s32.totalorder %s23, 0
      %p64 = por %p62, %p63
      %s66 = sadd.s32 %s65, 1
      %p69 = scmp.eq.s32.totalorder %s17, 1
      %p70 = scmp.ne.s32.totalorder %s65, %s67
      %p71 = scmp.eq.s32.totalorder %s17, 0
      %p72 = por %p70, %p71
      %p73 = scmp.ne.s32.totalorder %s65, %s67
      %p74 = scmp.eq.s32.totalorder %s22, 1
      %p75 = por %p73, %p74
      %p76 = scmp.ne.s32.totalorder %s67, %s68
      %p77 = scmp.eq.s32.totalorder %s22, 0
      %p78 = por %p76, %p77
      %p79 = scmp.ne.s32.totalorder %s67, %s68
      %p80 = scmp.eq.s32.totalorder %s23, 1
      %p81 = por %p79, %p80
      %p83 = scmp.ne.s32.totalorder %s68, %s82
      %p84 = scmp.eq.s32.totalorder %s23, 0
      %p85 = por %p83, %p84
      %s87 = sadd.s32 %s86, 1
      %p90 = scmp.eq.s32.totalorder %s17, 1
      %p91 = scmp.ne.s32.totalorder %s86, %s88
      %p92 = scmp.eq.s32.totalorder %s17, 0
      %p93 = por %p91, %p92
      %p94 = scmp.ne.s32.totalorder %s86, %s88
      %p95 = scmp.eq.s32.totalorder %s22, 1
      %p96 = por %p94, %p95
      %p97 = scmp.ne.s32.totalorder %s88, %s89
      %p98 = scmp.eq.s32.totalorder %s22, 0
      %p99 = por %p97, %p98
      %p100 = scmp.ne.s32.totalorder %s88, %s89
      %p101 = scmp.eq.s32.totalorder %s23, 1
      %p102 = por %p100, %p101
      %p104 = scmp.ne.s32.totalorder %s89, %s103
      %p105 = scmp.eq.s32.totalorder %s23, 0
      %p106 = por %p104, %p105
      %s108 = sadd.s32 %s107, 1
      %p111 = scmp.eq.s32.totalorder %s17, 1
      %p112 = scmp.ne.s32.totalorder %s107, %s109
      %p113 = scmp.eq.s32.totalorder %s17, 0
      %p114 = por %p112, %p113
      %p115 = scmp.ne.s32.totalorder %s107, %s109
      %p116 = scmp.eq.s32.totalorder %s22, 1
      %p117 = por %p115, %p116
      %p118 = scmp.ne.s32.totalorder %s109, %s110
      %p119 = scmp.eq.s32.totalorder %s22, 0
      %p120 = por %p118, %p119
      %p121 = scmp.ne.s32.totalorder %s109, %s110
      %p122 = scmp.eq.s32.totalorder %s23, 1
      %p123 = por %p121, %p122
      %p125 = scmp.ne.s32.totalorder %s110, %s124
      %p126 = scmp.eq.s32.totalorder %s23, 0
      %p127 = por %p125, %p126
      %s128 = ssub.s32 %s24, %s36
      %s129 = ssub.s32 %s25, %s32
      %s130 = sor.u32 %s128, %s129
      %p131 = scmp.eq.s32.totalorder %s130, 0
      %s133 = sadd.s32 %s132, 1
      %s134 = scalar_select %p131, %s132, %s133
      %p137 = pneg %p131
      %p138 = scmp.eq.s32.totalorder %s17, 1
      %p139 = por %p137, %p138
      %p140 = scmp.ne.s32.totalorder %s132, %s135
      %p141 = scmp.eq.s32.totalorder %s17, 0
      %p142 = por %p140, %p141
      %p143 = scmp.ne.s32.totalorder %s132, %s135
      %p144 = scmp.eq.s32.totalorder %s22, 1
      %p145 = por %p143, %p144
      %p146 = scmp.ne.s32.totalorder %s135, %s136
      %p147 = scmp.eq.s32.totalorder %s22, 0
      %p148 = por %p146, %p147
      %p149 = scmp.ne.s32.totalorder %s135, %s136
      %p150 = scmp.eq.s32.totalorder %s23, 1
      %p151 = por %p149, %p150
      %p153 = scmp.ne.s32.totalorder %s136, %s152
      %p154 = scmp.eq.s32.totalorder %s23, 0
      %p155 = por %p153, %p154
      %p156 = scmp.le.s32.totalorder 1, %s17
      %p157 = scmp.lt.s32.totalorder %s17, 3
      %p158 = pnand %p156, %p157
      %p159 = pneg %p158
      // Predicated region
      $region9: #{tpu_custom_call.1} parent=5 // pred_check
        _
      $region10: #{tpu_custom_call.1} parent=5 // pred_check_branch
        %161 = sbr.rel (%p158) target = $region12
      $region11: #{tpu_custom_call.1} parent=5 // pred_region
        %s162 = ssub.s32 %s17, 1
        // Predicated region
        $region13: #{tpu_custom_call.1} parent=11 // pred_check
          %p163 = pneg %p78
        $region14: #{tpu_custom_call.1} parent=11 // pred_check_branch
          %165 = sbr.rel (%p163) target = $region16
        $region15: #{tpu_custom_call.1} parent=11 // pred_region
          %s167 = ssub.s32 512, 512
          %168 = vsyncadd [#allocation9], %s167
          %s169 = sshll.u32 [#allocation8], 4
          %s170 = int_to_ptr.vmem [resolvable:$true] %s169
          %175 = dma.hbm_to_vmem [thread:$0]  %s1, 512, %s170, [#allocation9], 128, 128, 8
        $region16: #{tpu_custom_call.1} parent=11 // pred_fallthru
          _
        // Predicated region
        $region17: #{tpu_custom_call.1} parent=11 // pred_check
          %p176 = pneg %p99
        $region18: #{tpu_custom_call.1} parent=11 // pred_check_branch
          %178 = sbr.rel (%p176) target = $region20
        $region19: #{tpu_custom_call.1} parent=11 // pred_region
          %s180 = ssub.s32 512, 512
          %181 = vsyncadd [#allocation9], %s180
          %s182 = sshll.u32 [#allocation10], 4
          %s183 = int_to_ptr.vmem [resolvable:$true] %s182
          %188 = dma.hbm_to_vmem [thread:$0]  %s2, 512, %s183, [#allocation9], 128, 128, 8
        $region20: #{tpu_custom_call.1} parent=11 // pred_fallthru
          _
        // Predicated region
        $region21: #{tpu_custom_call.1} parent=11 // pred_check
          %p189 = pneg %p120
        $region22: #{tpu_custom_call.1} parent=11 // pred_check_branch
          %191 = sbr.rel (%p189) target = $region24
        $region23: #{tpu_custom_call.1} parent=11 // pred_region
          _
        $region24: #{tpu_custom_call.1} parent=11 // pred_fallthru
          _
      $region12: #{tpu_custom_call.1} parent=5 // pred_fallthru
        _
      %p192 = scmp.lt.s32.totalorder %s17, 2
      // Predicated region
      $region25: #{tpu_custom_call.1} parent=5 // pred_check
        %p193 = pneg %p192
      $region26: #{tpu_custom_call.1} parent=5 // pred_check_branch
        %195 = sbr.rel (%p193) target = $region28
      $region27: #{tpu_custom_call.1} parent=5 // pred_region
        // Predicated region
        $region29: #{tpu_custom_call.1} parent=27 // pred_check
          %p196 = pneg %p51
        $region30: #{tpu_custom_call.1} parent=27 // pred_check_branch
          %198 = sbr.rel (%p196) target = $region32
        $region31: #{tpu_custom_call.1} parent=27 // pred_region
          %s199 = sand.u32 %s41, 1
          %s200 = scalar_lea.sflag [#allocation6], %s199
          %s201 = sand.u32 %s41, 1
          %s202 = smul.addr %s201, 256
          %s203 = scalar_lea.vmem [#allocation5], %s202
          %s204 = smul.u32 2, %s24
          %s205 = smul.u32 4, %s25
          %s207 = ssub.s32 4096, 4096
          %208 = vsyncadd %s200, %s207
          %s209 = smul.addr %s204, 32
          %s210 = sadd.s32 %s205, %s209
          %s211 = smul.addr %s210, 128
          %s212 = scalar_lea.hbm %s0, %s211
          %s213 = sshll.u32 %s203, 4
          %s214 = int_to_ptr.vmem [resolvable:$true] %s213
          %219 = dma.hbm_to_vmem [thread:$0]  %s212, 4096, %s214, %s200, 1024, 512, 32
        $region32: #{tpu_custom_call.1} parent=27 // pred_fallthru
          _
      $region28: #{tpu_custom_call.1} parent=5 // pred_fallthru
        _
      %p220 = scmp.le.s32.totalorder 1, %s17
      %p221 = scmp.lt.s32.totalorder %s17, 3
      %p222 = pnand %p220, %p221
      %p223 = pneg %p222
      // Predicated region
      $region33: #{tpu_custom_call.1} parent=5 // pred_check
        _
      $region34: #{tpu_custom_call.1} parent=5 // pred_check_branch
        %225 = sbr.rel (%p222) target = $region36
      $region35: #{tpu_custom_call.1} parent=5 // pred_region
        %s226 = ssub.s32 %s17, 1
        %s227 = sand.u32 %s44, 1
        %s228 = scalar_lea.sflag [#allocation6], %s227
        %s229 = sand.u32 %s44, 1
        %s230 = smul.addr %s229, 256
        %s231 = scalar_lea.vmem [#allocation5], %s230
        // Predicated region
        $region37: #{tpu_custom_call.1} parent=35 // pred_check
          %p232 = pneg %p57
        $region38: #{tpu_custom_call.1} parent=35 // pred_check_branch
          %234 = sbr.rel (%p232) target = $region40
        $region39: #{tpu_custom_call.1} parent=35 // pred_region
          %235 = dma.done %s228, 4096
        $region40: #{tpu_custom_call.1} parent=35 // pred_fallthru
          _
        // Predicated region
        $region41: #{tpu_custom_call.1} parent=35 // pred_check
          %p236 = pneg %p78
        $region42: #{tpu_custom_call.1} parent=35 // pred_check_branch
          %238 = sbr.rel (%p236) target = $region44
        $region43: #{tpu_custom_call.1} parent=35 // pred_region
          %239 = dma.done [#allocation9], 512
        $region44: #{tpu_custom_call.1} parent=35 // pred_fallthru
          _
        // Predicated region
        $region45: #{tpu_custom_call.1} parent=35 // pred_check
          %p240 = pneg %p99
        $region46: #{tpu_custom_call.1} parent=35 // pred_check_branch
          %242 = sbr.rel (%p240) target = $region48
        $region47: #{tpu_custom_call.1} parent=35 // pred_region
          %243 = dma.done [#allocation9], 512
        $region48: #{tpu_custom_call.1} parent=35 // pred_fallthru
          _
        %s244 = sand.u32 %s44, 1
        %s245 = scalar_lea.sflag [#allocation6], %s244
        %s246 = sand.u32 %s44, 1
        %s247 = smul.addr %s246, 256
        %s248 = scalar_lea.vmem [#allocation5], %s247
        %p249 = pneg %p57
        %p250 = pneg %p54
        %p251 = pneg %p78
        %p252 = pneg %p75
        %p253 = pneg %p99
        %p254 = pneg %p96
        %p255 = pneg %p120
        %p256 = pneg %p117
        %p257 = pneg %p148
        %p258 = pneg %p145
        %s259 = sand.u32 %s135, 1
        %s260 = scalar_lea.sflag [#allocation7], %s259
        %s261 = sand.u32 %s135, 1
        %s262 = smul.addr %s261, 256
        %s263 = scalar_lea.vmem [#allocation11], %s262
        %s264 = smul.u32 2, %s26
        %s265 = smul.u32 4, %s27
        %s266 = smul.u32 2, %s26
        %s267 = smul.u32 4, %s27
        %p268 = scmp.eq.s32.totalorder %s27, 0
        // Predicated region
        $region49: #{tpu_custom_call.1} parent=35 // pred_check
          %p269 = pneg %p268
        $region50: #{tpu_custom_call.1} parent=35 // pred_check_branch
          %271 = sbr.rel (%p269) target = $region52
        $region51: #{tpu_custom_call.1} parent=35 // pred_region
          %vm272 = vcmask 254976
          %273 = vst.msk [vmem:[#allocation2] sm:$0x3] %vm272, 0.0
          %274 = vst.msk [vmem:[#allocation3] sm:$0x3] %vm272, 0.0
        $region52: #{tpu_custom_call.1} parent=35 // pred_fallthru
          _
        %v275 = vld [vmem:[#allocation8] sm:$0xff]
        %v276 = vld [vmem:[#allocation8 + $0x8] sm:$0xff]
        %v277 = vld [vmem:[#allocation8 + $0x10] sm:$0xff]
        %v278 = vld [vmem:[#allocation8 + $0x18] sm:$0xff]
        %v279 = vld [vmem:[#allocation10] sm:$0xff]
        %v280 = vld [vmem:[#allocation10 + $0x8] sm:$0xff]
        %v281 = vld [vmem:[#allocation10 + $0x10] sm:$0xff]
        %v282 = vld [vmem:[#allocation10 + $0x18] sm:$0xff]
        %v283 = vld [vmem:[%s231] sm:$0xff]
        %v284 = vld [vmem:[%s231 + $0x8] sm:$0xff]
        %v285 = vld [vmem:[%s231 + $0x10] sm:$0xff]
        %v286 = vld [vmem:[%s231 + $0x18] sm:$0xff]
        %v287 = vld [vmem:[%s231 + $0x20] sm:$0xff]
        %v288 = vld [vmem:[%s231 + $0x28] sm:$0xff]
        %v289 = vld [vmem:[%s231 + $0x30] sm:$0xff]
        %v290 = vld [vmem:[%s231 + $0x38] sm:$0xff]
        %v291 = vld [vmem:[%s231 + $0x40] sm:$0xff]
        %v292 = vld [vmem:[%s231 + $0x48] sm:$0xff]
        %v293 = vld [vmem:[%s231 + $0x50] sm:$0xff]
        %v294 = vld [vmem:[%s231 + $0x58] sm:$0xff]
        %v295 = vld [vmem:[%s231 + $0x60] sm:$0xff]
        %v296 = vld [vmem:[%s231 + $0x68] sm:$0xff]
        %v297 = vld [vmem:[%s231 + $0x70] sm:$0xff]
        %v298 = vld [vmem:[%s231 + $0x78] sm:$0xff]
        %v299 = vld [vmem:[%s231 + $0x80] sm:$0xff]
        %v300 = vld [vmem:[%s231 + $0x88] sm:$0xff]
        %v301 = vld [vmem:[%s231 + $0x90] sm:$0xff]
        %v302 = vld [vmem:[%s231 + $0x98] sm:$0xff]
        %v303 = vld [vmem:[%s231 + $0xa0] sm:$0xff]
        %v304 = vld [vmem:[%s231 + $0xa8] sm:$0xff]
        %v305 = vld [vmem:[%s231 + $0xb0] sm:$0xff]
        %v306 = vld [vmem:[%s231 + $0xb8] sm:$0xff]
        %v307 = vld [vmem:[%s231 + $0xc0] sm:$0xff]
        %v308 = vld [vmem:[%s231 + $0xc8] sm:$0xff]
        %v309 = vld [vmem:[%s231 + $0xd0] sm:$0xff]
        %v310 = vld [vmem:[%s231 + $0xd8] sm:$0xff]
        %v311 = vld [vmem:[%s231 + $0xe0] sm:$0xff]
        %v312 = vld [vmem:[%s231 + $0xe8] sm:$0xff]
        %v313 = vld [vmem:[%s231 + $0xf0] sm:$0xff]
        %v314 = vld [vmem:[%s231 + $0xf8] sm:$0xff]
        %v315 = vcombine.low %v283, %v285
        %v316 = vcombine.high %v283, %v285
        %v318 = vunpack.c.l.s4 1983009808
        %v319 = vunpack.c.0.s8 %v318
        %v320 = vlaneseq
        %v321 = vshrl.u32 %v320, 7
        %v322 = vsub.s32 %v319, %v321
        %v323 = vrot.slane %v315, %v322
        %v325 = vunpack.c.l.s4 1983009808
        %v326 = vunpack.c.0.s8 %v325
        %v327 = vlaneseq
        %v328 = vshrl.u32 %v327, 7
        %v329 = vsub.s32 %v326, %v328
        %v330 = vrot.slane %v316, %v329
        %v331 = vcombine.low %v284, %v286
        %v332 = vcombine.high %v284, %v286
        %v334 = vunpack.c.l.s4 1983009808
        %v335 = vunpack.c.0.s8 %v334
        %v336 = vlaneseq
        %v337 = vshrl.u32 %v336, 7
        %v338 = vsub.s32 %v335, %v337
        %v339 = vrot.slane %v331, %v338
        %v341 = vunpack.c.l.s4 1983009808
        %v342 = vunpack.c.0.s8 %v341
        %v343 = vlaneseq
        %v344 = vshrl.u32 %v343, 7
        %v345 = vsub.s32 %v342, %v344
        %v346 = vrot.slane %v332, %v345
        %v347 = vcombine.low %v323, %v339
        %v348 = vcombine.high %v323, %v339
        %v350 = vunpack.c.l.s4 1934713408
        %v351 = vunpack.c.0.s8 %v350
        %v352 = vlaneseq
        %v353 = vshrl.u32 %v352, 7
        %v354 = vsub.s32 %v351, %v353
        %v355 = vrot.slane %v347, %v354
        %v357 = vunpack.c.l.s4 1934713408
        %v358 = vunpack.c.0.s8 %v357
        %v359 = vlaneseq
        %v360 = vshrl.u32 %v359, 7
        %v361 = vsub.s32 %v358, %v360
        %v362 = vrot.slane %v348, %v361
        %v363 = vcombine.low %v330, %v346
        %v364 = vcombine.high %v330, %v346
        %v366 = vunpack.c.l.s4 1934713408
        %v367 = vunpack.c.0.s8 %v366
        %v368 = vlaneseq
        %v369 = vshrl.u32 %v368, 7
        %v370 = vsub.s32 %v367, %v369
        %v371 = vrot.slane %v363, %v370
        %v373 = vunpack.c.l.s4 1934713408
        %v374 = vunpack.c.0.s8 %v373
        %v375 = vlaneseq
        %v376 = vshrl.u32 %v375, 7
        %v377 = vsub.s32 %v374, %v376
        %v378 = vrot.slane %v364, %v377
        %v379 = vcombine.high %v355, 0.0
        %v380 = vcombine.high %v362, 0.0
        %v381 = vcombine.high %v371, 0.0
        %v382 = vcombine.high %v378, 0.0
        %v383 = vcombine.low %v287, %v289
        %v384 = vcombine.high %v287, %v289
        %v386 = vunpack.c.l.s4 1983009808
        %v387 = vunpack.c.0.s8 %v386
        %v388 = vlaneseq
        %v389 = vshrl.u32 %v388, 7
        %v390 = vsub.s32 %v387, %v389
        %v391 = vrot.slane %v383, %v390
        %v393 = vunpack.c.l.s4 1983009808
        %v394 = vunpack.c.0.s8 %v393
        %v395 = vlaneseq
        %v396 = vshrl.u32 %v395, 7
        %v397 = vsub.s32 %v394, %v396
        %v398 = vrot.slane %v384, %v397
        %v399 = vcombine.low %v288, %v290
        %v400 = vcombine.high %v288, %v290
        %v402 = vunpack.c.l.s4 1983009808
        %v403 = vunpack.c.0.s8 %v402
        %v404 = vlaneseq
        %v405 = vshrl.u32 %v404, 7
        %v406 = vsub.s32 %v403, %v405
        %v407 = vrot.slane %v399, %v406
        %v409 = vunpack.c.l.s4 1983009808
        %v410 = vunpack.c.0.s8 %v409
        %v411 = vlaneseq
        %v412 = vshrl.u32 %v411, 7
        %v413 = vsub.s32 %v410, %v412
        %v414 = vrot.slane %v400, %v413
        %v415 = vcombine.low %v391, %v407
        %v416 = vcombine.high %v391, %v407
        %v418 = vunpack.c.l.s4 1934713408
        %v419 = vunpack.c.0.s8 %v418
        %v420 = vlaneseq
        %v421 = vshrl.u32 %v420, 7
        %v422 = vsub.s32 %v419, %v421
        %v423 = vrot.slane %v415, %v422
        %v425 = vunpack.c.l.s4 1934713408
        %v426 = vunpack.c.0.s8 %v425
        %v427 = vlaneseq
        %v428 = vshrl.u32 %v427, 7
        %v429 = vsub.s32 %v426, %v428
        %v430 = vrot.slane %v416, %v429
        %v431 = vcombine.low %v398, %v414
        %v432 = vcombine.high %v398, %v414
        %v434 = vunpack.c.l.s4 1934713408
        %v435 = vunpack.c.0.s8 %v434
        %v436 = vlaneseq
        %v437 = vshrl.u32 %v436, 7
        %v438 = vsub.s32 %v435, %v437
        %v439 = vrot.slane %v431, %v438
        %v441 = vunpack.c.l.s4 1934713408
        %v442 = vunpack.c.0.s8 %v441
        %v443 = vlaneseq
        %v444 = vshrl.u32 %v443, 7
        %v445 = vsub.s32 %v442, %v444
        %v446 = vrot.slane %v432, %v445
        %v447 = vcombine.high %v423, 0.0
        %v448 = vcombine.high %v430, 0.0
        %v449 = vcombine.high %v439, 0.0
        %v450 = vcombine.high %v446, 0.0
        %v451 = vcombine.low %v291, %v293
        %v452 = vcombine.high %v291, %v293
        %v454 = vunpack.c.l.s4 1983009808
        %v455 = vunpack.c.0.s8 %v454
        %v456 = vlaneseq
        %v457 = vshrl.u32 %v456, 7
        %v458 = vsub.s32 %v455, %v457
        %v459 = vrot.slane %v451, %v458
        %v461 = vunpack.c.l.s4 1983009808
        %v462 = vunpack.c.0.s8 %v461
        %v463 = vlaneseq
        %v464 = vshrl.u32 %v463, 7
        %v465 = vsub.s32 %v462, %v464
        %v466 = vrot.slane %v452, %v465
        %v467 = vcombine.low %v292, %v294
        %v468 = vcombine.high %v292, %v294
        %v470 = vunpack.c.l.s4 1983009808
        %v471 = vunpack.c.0.s8 %v470
        %v472 = vlaneseq
        %v473 = vshrl.u32 %v472, 7
        %v474 = vsub.s32 %v471, %v473
        %v475 = vrot.slane %v467, %v474
        %v477 = vunpack.c.l.s4 1983009808
        %v478 = vunpack.c.0.s8 %v477
        %v479 = vlaneseq
        %v480 = vshrl.u32 %v479, 7
        %v481 = vsub.s32 %v478, %v480
        %v482 = vrot.slane %v468, %v481
        %v483 = vcombine.low %v459, %v475
        %v484 = vcombine.high %v459, %v475
        %v486 = vunpack.c.l.s4 1934713408
        %v487 = vunpack.c.0.s8 %v486
        %v488 = vlaneseq
        %v489 = vshrl.u32 %v488, 7
        %v490 = vsub.s32 %v487, %v489
        %v491 = vrot.slane %v483, %v490
        %v493 = vunpack.c.l.s4 1934713408
        %v494 = vunpack.c.0.s8 %v493
        %v495 = vlaneseq
        %v496 = vshrl.u32 %v495, 7
        %v497 = vsub.s32 %v494, %v496
        %v498 = vrot.slane %v484, %v497
        %v499 = vcombine.low %v466, %v482
        %v500 = vcombine.high %v466, %v482
        %v502 = vunpack.c.l.s4 1934713408
        %v503 = vunpack.c.0.s8 %v502
        %v504 = vlaneseq
        %v505 = vshrl.u32 %v504, 7
        %v506 = vsub.s32 %v503, %v505
        %v507 = vrot.slane %v499, %v506
        %v509 = vunpack.c.l.s4 1934713408
        %v510 = vunpack.c.0.s8 %v509
        %v511 = vlaneseq
        %v512 = vshrl.u32 %v511, 7
        %v513 = vsub.s32 %v510, %v512
        %v514 = vrot.slane %v500, %v513
        %v515 = vcombine.high %v491, 0.0
        %v516 = vcombine.high %v498, 0.0
        %v517 = vcombine.high %v507, 0.0
        %v518 = vcombine.high %v514, 0.0
        %v519 = vcombine.low %v295, %v297
        %v520 = vcombine.high %v295, %v297
        %v522 = vunpack.c.l.s4 1983009808
        %v523 = vunpack.c.0.s8 %v522
        %v524 = vlaneseq
        %v525 = vshrl.u32 %v524, 7
        %v526 = vsub.s32 %v523, %v525
        %v527 = vrot.slane %v519, %v526
        %v529 = vunpack.c.l.s4 1983009808
        %v530 = vunpack.c.0.s8 %v529
        %v531 = vlaneseq
        %v532 = vshrl.u32 %v531, 7
        %v533 = vsub.s32 %v530, %v532
        %v534 = vrot.slane %v520, %v533
        %v535 = vcombine.low %v296, %v298
        %v536 = vcombine.high %v296, %v298
        %v538 = vunpack.c.l.s4 1983009808
        %v539 = vunpack.c.0.s8 %v538
        %v540 = vlaneseq
        %v541 = vshrl.u32 %v540, 7
        %v542 = vsub.s32 %v539, %v541
        %v543 = vrot.slane %v535, %v542
        %v545 = vunpack.c.l.s4 1983009808
        %v546 = vunpack.c.0.s8 %v545
        %v547 = vlaneseq
        %v548 = vshrl.u32 %v547, 7
        %v549 = vsub.s32 %v546, %v548
        %v550 = vrot.slane %v536, %v549
        %v551 = vcombine.low %v527, %v543
        %v552 = vcombine.high %v527, %v543
        %v554 = vunpack.c.l.s4 1934713408
        %v555 = vunpack.c.0.s8 %v554
        %v556 = vlaneseq
        %v557 = vshrl.u32 %v556, 7
        %v558 = vsub.s32 %v555, %v557
        %v559 = vrot.slane %v551, %v558
        %v561 = vunpack.c.l.s4 1934713408
        %v562 = vunpack.c.0.s8 %v561
        %v563 = vlaneseq
        %v564 = vshrl.u32 %v563, 7
        %v565 = vsub.s32 %v562, %v564
        %v566 = vrot.slane %v552, %v565
        %v567 = vcombine.low %v534, %v550
        %v568 = vcombine.high %v534, %v550
        %v570 = vunpack.c.l.s4 1934713408
        %v571 = vunpack.c.0.s8 %v570
        %v572 = vlaneseq
        %v573 = vshrl.u32 %v572, 7
        %v574 = vsub.s32 %v571, %v573
        %v575 = vrot.slane %v567, %v574
        %v577 = vunpack.c.l.s4 1934713408
        %v578 = vunpack.c.0.s8 %v577
        %v579 = vlaneseq
        %v580 = vshrl.u32 %v579, 7
        %v581 = vsub.s32 %v578, %v580
        %v582 = vrot.slane %v568, %v581
        %v583 = vcombine.high %v559, 0.0
        %v584 = vcombine.high %v566, 0.0
        %v585 = vcombine.high %v575, 0.0
        %v586 = vcombine.high %v582, 0.0
        %v587 = vcombine.low %v299, %v301
        %v588 = vcombine.high %v299, %v301
        %v590 = vunpack.c.l.s4 1983009808
        %v591 = vunpack.c.0.s8 %v590
        %v592 = vlaneseq
        %v593 = vshrl.u32 %v592, 7
        %v594 = vsub.s32 %v591, %v593
        %v595 = vrot.slane %v587, %v594
        %v597 = vunpack.c.l.s4 1983009808
        %v598 = vunpack.c.0.s8 %v597
        %v599 = vlaneseq
        %v600 = vshrl.u32 %v599, 7
        %v601 = vsub.s32 %v598, %v600
        %v602 = vrot.slane %v588, %v601
        %v603 = vcombine.low %v300, %v302
        %v604 = vcombine.high %v300, %v302
        %v606 = vunpack.c.l.s4 1983009808
        %v607 = vunpack.c.0.s8 %v606
        %v608 = vlaneseq
        %v609 = vshrl.u32 %v608, 7
        %v610 = vsub.s32 %v607, %v609
        %v611 = vrot.slane %v603, %v610
        %v613 = vunpack.c.l.s4 1983009808
        %v614 = vunpack.c.0.s8 %v613
        %v615 = vlaneseq
        %v616 = vshrl.u32 %v615, 7
        %v617 = vsub.s32 %v614, %v616
        %v618 = vrot.slane %v604, %v617
        %v619 = vcombine.low %v595, %v611
        %v620 = vcombine.high %v595, %v611
        %v622 = vunpack.c.l.s4 1934713408
        %v623 = vunpack.c.0.s8 %v622
        %v624 = vlaneseq
        %v625 = vshrl.u32 %v624, 7
        %v626 = vsub.s32 %v623, %v625
        %v627 = vrot.slane %v619, %v626
        %v629 = vunpack.c.l.s4 1934713408
        %v630 = vunpack.c.0.s8 %v629
        %v631 = vlaneseq
        %v632 = vshrl.u32 %v631, 7
        %v633 = vsub.s32 %v630, %v632
        %v634 = vrot.slane %v620, %v633
        %v635 = vcombine.low %v602, %v618
        %v636 = vcombine.high %v602, %v618
        %v638 = vunpack.c.l.s4 1934713408
        %v639 = vunpack.c.0.s8 %v638
        %v640 = vlaneseq
        %v641 = vshrl.u32 %v640, 7
        %v642 = vsub.s32 %v639, %v641
        %v643 = vrot.slane %v635, %v642
        %v645 = vunpack.c.l.s4 1934713408
        %v646 = vunpack.c.0.s8 %v645
        %v647 = vlaneseq
        %v648 = vshrl.u32 %v647, 7
        %v649 = vsub.s32 %v646, %v648
        %v650 = vrot.slane %v636, %v649
        %v651 = vcombine.high %v627, 0.0
        %v652 = vcombine.high %v634, 0.0
        %v653 = vcombine.high %v643, 0.0
        %v654 = vcombine.high %v650, 0.0
        %v655 = vcombine.low %v303, %v305
        %v656 = vcombine.high %v303, %v305
        %v658 = vunpack.c.l.s4 1983009808
        %v659 = vunpack.c.0.s8 %v658
        %v660 = vlaneseq
        %v661 = vshrl.u32 %v660, 7
        %v662 = vsub.s32 %v659, %v661
        %v663 = vrot.slane %v655, %v662
        %v665 = vunpack.c.l.s4 1983009808
        %v666 = vunpack.c.0.s8 %v665
        %v667 = vlaneseq
        %v668 = vshrl.u32 %v667, 7
        %v669 = vsub.s32 %v666, %v668
        %v670 = vrot.slane %v656, %v669
        %v671 = vcombine.low %v304, %v306
        %v672 = vcombine.high %v304, %v306
        %v674 = vunpack.c.l.s4 1983009808
        %v675 = vunpack.c.0.s8 %v674
        %v676 = vlaneseq
        %v677 = vshrl.u32 %v676, 7
        %v678 = vsub.s32 %v675, %v677
        %v679 = vrot.slane %v671, %v678
        %v681 = vunpack.c.l.s4 1983009808
        %v682 = vunpack.c.0.s8 %v681
        %v683 = vlaneseq
        %v684 = vshrl.u32 %v683, 7
        %v685 = vsub.s32 %v682, %v684
        %v686 = vrot.slane %v672, %v685
        %v687 = vcombine.low %v663, %v679
        %v688 = vcombine.high %v663, %v679
        %v690 = vunpack.c.l.s4 1934713408
        %v691 = vunpack.c.0.s8 %v690
        %v692 = vlaneseq
        %v693 = vshrl.u32 %v692, 7
        %v694 = vsub.s32 %v691, %v693
        %v695 = vrot.slane %v687, %v694
        %v697 = vunpack.c.l.s4 1934713408
        %v698 = vunpack.c.0.s8 %v697
        %v699 = vlaneseq
        %v700 = vshrl.u32 %v699, 7
        %v701 = vsub.s32 %v698, %v700
        %v702 = vrot.slane %v688, %v701
        %v703 = vcombine.low %v670, %v686
        %v704 = vcombine.high %v670, %v686
        %v706 = vunpack.c.l.s4 1934713408
        %v707 = vunpack.c.0.s8 %v706
        %v708 = vlaneseq
        %v709 = vshrl.u32 %v708, 7
        %v710 = vsub.s32 %v707, %v709
        %v711 = vrot.slane %v703, %v710
        %v713 = vunpack.c.l.s4 1934713408
        %v714 = vunpack.c.0.s8 %v713
        %v715 = vlaneseq
        %v716 = vshrl.u32 %v715, 7
        %v717 = vsub.s32 %v714, %v716
        %v718 = vrot.slane %v704, %v717
        %v719 = vcombine.high %v695, 0.0
        %v720 = vcombine.high %v702, 0.0
        %v721 = vcombine.high %v711, 0.0
        %v722 = vcombine.high %v718, 0.0
        %v723 = vcombine.low %v307, %v309
        %v724 = vcombine.high %v307, %v309
        %v726 = vunpack.c.l.s4 1983009808
        %v727 = vunpack.c.0.s8 %v726
        %v728 = vlaneseq
        %v729 = vshrl.u32 %v728, 7
        %v730 = vsub.s32 %v727, %v729
        %v731 = vrot.slane %v723, %v730
        %v733 = vunpack.c.l.s4 1983009808
        %v734 = vunpack.c.0.s8 %v733
        %v735 = vlaneseq
        %v736 = vshrl.u32 %v735, 7
        %v737 = vsub.s32 %v734, %v736
        %v738 = vrot.slane %v724, %v737
        %v739 = vcombine.low %v308, %v310
        %v740 = vcombine.high %v308, %v310
        %v742 = vunpack.c.l.s4 1983009808
        %v743 = vunpack.c.0.s8 %v742
        %v744 = vlaneseq
        %v745 = vshrl.u32 %v744, 7
        %v746 = vsub.s32 %v743, %v745
        %v747 = vrot.slane %v739, %v746
        %v749 = vunpack.c.l.s4 1983009808
        %v750 = vunpack.c.0.s8 %v749
        %v751 = vlaneseq
        %v752 = vshrl.u32 %v751, 7
        %v753 = vsub.s32 %v750, %v752
        %v754 = vrot.slane %v740, %v753
        %v755 = vcombine.low %v731, %v747
        %v756 = vcombine.high %v731, %v747
        %v758 = vunpack.c.l.s4 1934713408
        %v759 = vunpack.c.0.s8 %v758
        %v760 = vlaneseq
        %v761 = vshrl.u32 %v760, 7
        %v762 = vsub.s32 %v759, %v761
        %v763 = vrot.slane %v755, %v762
        %v765 = vunpack.c.l.s4 1934713408
        %v766 = vunpack.c.0.s8 %v765
        %v767 = vlaneseq
        %v768 = vshrl.u32 %v767, 7
        %v769 = vsub.s32 %v766, %v768
        %v770 = vrot.slane %v756, %v769
        %v771 = vcombine.low %v738, %v754
        %v772 = vcombine.high %v738, %v754
        %v774 = vunpack.c.l.s4 1934713408
        %v775 = vunpack.c.0.s8 %v774
        %v776 = vlaneseq
        %v777 = vshrl.u32 %v776, 7
        %v778 = vsub.s32 %v775, %v777
        %v779 = vrot.slane %v771, %v778
        %v781 = vunpack.c.l.s4 1934713408
        %v782 = vunpack.c.0.s8 %v781
        %v783 = vlaneseq
        %v784 = vshrl.u32 %v783, 7
        %v785 = vsub.s32 %v782, %v784
        %v786 = vrot.slane %v772, %v785
        %v787 = vcombine.high %v763, 0.0
        %v788 = vcombine.high %v770, 0.0
        %v789 = vcombine.high %v779, 0.0
        %v790 = vcombine.high %v786, 0.0
        %v791 = vcombine.low %v311, %v313
        %v792 = vcombine.high %v311, %v313
        %v794 = vunpack.c.l.s4 1983009808
        %v795 = vunpack.c.0.s8 %v794
        %v796 = vlaneseq
        %v797 = vshrl.u32 %v796, 7
        %v798 = vsub.s32 %v795, %v797
        %v799 = vrot.slane %v791, %v798
        %v801 = vunpack.c.l.s4 1983009808
        %v802 = vunpack.c.0.s8 %v801
        %v803 = vlaneseq
        %v804 = vshrl.u32 %v803, 7
        %v805 = vsub.s32 %v802, %v804
        %v806 = vrot.slane %v792, %v805
        %v807 = vcombine.low %v312, %v314
        %v808 = vcombine.high %v312, %v314
        %v810 = vunpack.c.l.s4 1983009808
        %v811 = vunpack.c.0.s8 %v810
        %v812 = vlaneseq
        %v813 = vshrl.u32 %v812, 7
        %v814 = vsub.s32 %v811, %v813
        %v815 = vrot.slane %v807, %v814
        %v817 = vunpack.c.l.s4 1983009808
        %v818 = vunpack.c.0.s8 %v817
        %v819 = vlaneseq
        %v820 = vshrl.u32 %v819, 7
        %v821 = vsub.s32 %v818, %v820
        %v822 = vrot.slane %v808, %v821
        %v823 = vcombine.low %v799, %v815
        %v824 = vcombine.high %v799, %v815
        %v826 = vunpack.c.l.s4 1934713408
        %v827 = vunpack.c.0.s8 %v826
        %v828 = vlaneseq
        %v829 = vshrl.u32 %v828, 7
        %v830 = vsub.s32 %v827, %v829
        %v831 = vrot.slane %v823, %v830
        %v833 = vunpack.c.l.s4 1934713408
        %v834 = vunpack.c.0.s8 %v833
        %v835 = vlaneseq
        %v836 = vshrl.u32 %v835, 7
        %v837 = vsub.s32 %v834, %v836
        %v838 = vrot.slane %v824, %v837
        %v839 = vcombine.low %v806, %v822
        %v840 = vcombine.high %v806, %v822
        %v842 = vunpack.c.l.s4 1934713408
        %v843 = vunpack.c.0.s8 %v842
        %v844 = vlaneseq
        %v845 = vshrl.u32 %v844, 7
        %v846 = vsub.s32 %v843, %v845
        %v847 = vrot.slane %v839, %v846
        %v849 = vunpack.c.l.s4 1934713408
        %v850 = vunpack.c.0.s8 %v849
        %v851 = vlaneseq
        %v852 = vshrl.u32 %v851, 7
        %v853 = vsub.s32 %v850, %v852
        %v854 = vrot.slane %v840, %v853
        %v855 = vcombine.high %v831, 0.0
        %v856 = vcombine.high %v838, 0.0
        %v857 = vcombine.high %v847, 0.0
        %v858 = vcombine.high %v854, 0.0
        %vm859 = vcmask 1043456
        %v860 = vsel %vm859, %v355, -inf
        %861 = vmax.xlane.f32.xlu0 %v860
        %v862 = vpop.xlane.xlu0 %861
        %v863 = vsel %vm859, %v379, -inf
        %864 = vmax.xlane.f32.xlu0 %v863
        %v865 = vpop.xlane.xlu0 %864
        %v866 = vsel %vm859, %v362, -inf
        %867 = vmax.xlane.f32.xlu0 %v866
        %v868 = vpop.xlane.xlu0 %867
        %v869 = vsel %vm859, %v380, -inf
        %870 = vmax.xlane.f32.xlu0 %v869
        %v871 = vpop.xlane.xlu0 %870
        %v872 = vsel %vm859, %v371, -inf
        %873 = vmax.xlane.f32.xlu0 %v872
        %v874 = vpop.xlane.xlu0 %873
        %v875 = vsel %vm859, %v381, -inf
        %876 = vmax.xlane.f32.xlu0 %v875
        %v877 = vpop.xlane.xlu0 %876
        %v878 = vsel %vm859, %v378, -inf
        %879 = vmax.xlane.f32.xlu0 %v878
        %v880 = vpop.xlane.xlu0 %879
        %v881 = vsel %vm859, %v382, -inf
        %882 = vmax.xlane.f32.xlu0 %v881
        %v883 = vpop.xlane.xlu0 %882
        %v884 = vsel %vm859, %v423, -inf
        %885 = vmax.xlane.f32.xlu0 %v884
        %v886 = vpop.xlane.xlu0 %885
        %v887 = vsel %vm859, %v447, -inf
        %888 = vmax.xlane.f32.xlu0 %v887
        %v889 = vpop.xlane.xlu0 %888
        %v890 = vsel %vm859, %v430, -inf
        %891 = vmax.xlane.f32.xlu0 %v890
        %v892 = vpop.xlane.xlu0 %891
        %v893 = vsel %vm859, %v448, -inf
        %894 = vmax.xlane.f32.xlu0 %v893
        %v895 = vpop.xlane.xlu0 %894
        %v896 = vsel %vm859, %v439, -inf
        %897 = vmax.xlane.f32.xlu0 %v896
        %v898 = vpop.xlane.xlu0 %897
        %v899 = vsel %vm859, %v449, -inf
        %900 = vmax.xlane.f32.xlu0 %v899
        %v901 = vpop.xlane.xlu0 %900
        %v902 = vsel %vm859, %v446, -inf
        %903 = vmax.xlane.f32.xlu0 %v902
        %v904 = vpop.xlane.xlu0 %903
        %v905 = vsel %vm859, %v450, -inf
        %906 = vmax.xlane.f32.xlu0 %v905
        %v907 = vpop.xlane.xlu0 %906
        %v908 = vsel %vm859, %v491, -inf
        %909 = vmax.xlane.f32.xlu0 %v908
        %v910 = vpop.xlane.xlu0 %909
        %v911 = vsel %vm859, %v515, -inf
        %912 = vmax.xlane.f32.xlu0 %v911
        %v913 = vpop.xlane.xlu0 %912
        %v914 = vsel %vm859, %v498, -inf
        %915 = vmax.xlane.f32.xlu0 %v914
        %v916 = vpop.xlane.xlu0 %915
        %v917 = vsel %vm859, %v516, -inf
        %918 = vmax.xlane.f32.xlu0 %v917
        %v919 = vpop.xlane.xlu0 %918
        %v920 = vsel %vm859, %v507, -inf
        %921 = vmax.xlane.f32.xlu0 %v920
        %v922 = vpop.xlane.xlu0 %921
        %v923 = vsel %vm859, %v517, -inf
        %924 = vmax.xlane.f32.xlu0 %v923
        %v925 = vpop.xlane.xlu0 %924
        %v926 = vsel %vm859, %v514, -inf
        %927 = vmax.xlane.f32.xlu0 %v926
        %v928 = vpop.xlane.xlu0 %927
        %v929 = vsel %vm859, %v518, -inf
        %930 = vmax.xlane.f32.xlu0 %v929
        %v931 = vpop.xlane.xlu0 %930
        %v932 = vsel %vm859, %v559, -inf
        %933 = vmax.xlane.f32.xlu0 %v932
        %v934 = vpop.xlane.xlu0 %933
        %v935 = vsel %vm859, %v583, -inf
        %936 = vmax.xlane.f32.xlu0 %v935
        %v937 = vpop.xlane.xlu0 %936
        %v938 = vsel %vm859, %v566, -inf
        %939 = vmax.xlane.f32.xlu0 %v938
        %v940 = vpop.xlane.xlu0 %939
        %v941 = vsel %vm859, %v584, -inf
        %942 = vmax.xlane.f32.xlu0 %v941
        %v943 = vpop.xlane.xlu0 %942
        %v944 = vsel %vm859, %v575, -inf
        %945 = vmax.xlane.f32.xlu0 %v944
        %v946 = vpop.xlane.xlu0 %945
        %v947 = vsel %vm859, %v585, -inf
        %948 = vmax.xlane.f32.xlu0 %v947
        %v949 = vpop.xlane.xlu0 %948
        %v950 = vsel %vm859, %v582, -inf
        %951 = vmax.xlane.f32.xlu0 %v950
        %v952 = vpop.xlane.xlu0 %951
        %v953 = vsel %vm859, %v586, -inf
        %954 = vmax.xlane.f32.xlu0 %v953
        %v955 = vpop.xlane.xlu0 %954
        %v956 = vsel %vm859, %v627, -inf
        %957 = vmax.xlane.f32.xlu0 %v956
        %v958 = vpop.xlane.xlu0 %957
        %v959 = vsel %vm859, %v651, -inf
        %960 = vmax.xlane.f32.xlu0 %v959
        %v961 = vpop.xlane.xlu0 %960
        %v962 = vsel %vm859, %v634, -inf
        %963 = vmax.xlane.f32.xlu0 %v962
        %v964 = vpop.xlane.xlu0 %963
        %v965 = vsel %vm859, %v652, -inf
        %966 = vmax.xlane.f32.xlu0 %v965
        %v967 = vpop.xlane.xlu0 %966
        %v968 = vsel %vm859, %v643, -inf
        %969 = vmax.xlane.f32.xlu0 %v968
        %v970 = vpop.xlane.xlu0 %969
        %v971 = vsel %vm859, %v653, -inf
        %972 = vmax.xlane.f32.xlu0 %v971
        %v973 = vpop.xlane.xlu0 %972
        %v974 = vsel %vm859, %v650, -inf
        %975 = vmax.xlane.f32.xlu0 %v974
        %v976 = vpop.xlane.xlu0 %975
        %v977 = vsel %vm859, %v654, -inf
        %978 = vmax.xlane.f32.xlu0 %v977
        %v979 = vpop.xlane.xlu0 %978
        %v980 = vsel %vm859, %v695, -inf
        %981 = vmax.xlane.f32.xlu0 %v980
        %v982 = vpop.xlane.xlu0 %981
        %v983 = vsel %vm859, %v719, -inf
        %984 = vmax.xlane.f32.xlu0 %v983
        %v985 = vpop.xlane.xlu0 %984
        %v986 = vsel %vm859, %v702, -inf
        %987 = vmax.xlane.f32.xlu0 %v986
        %v988 = vpop.xlane.xlu0 %987
        %v989 = vsel %vm859, %v720, -inf
        %990 = vmax.xlane.f32.xlu0 %v989
        %v991 = vpop.xlane.xlu0 %990
        %v992 = vsel %vm859, %v711, -inf
        %993 = vmax.xlane.f32.xlu0 %v992
        %v994 = vpop.xlane.xlu0 %993
        %v995 = vsel %vm859, %v721, -inf
        %996 = vmax.xlane.f32.xlu0 %v995
        %v997 = vpop.xlane.xlu0 %996
        %v998 = vsel %vm859, %v718, -inf
        %999 = vmax.xlane.f32.xlu0 %v998
        %v1000 = vpop.xlane.xlu0 %999
        %v1001 = vsel %vm859, %v722, -inf
        %1002 = vmax.xlane.f32.xlu0 %v1001
        %v1003 = vpop.xlane.xlu0 %1002
        %v1004 = vsel %vm859, %v763, -inf
        %1005 = vmax.xlane.f32.xlu0 %v1004
        %v1006 = vpop.xlane.xlu0 %1005
        %v1007 = vsel %vm859, %v787, -inf
        %1008 = vmax.xlane.f32.xlu0 %v1007
        %v1009 = vpop.xlane.xlu0 %1008
        %v1010 = vsel %vm859, %v770, -inf
        %1011 = vmax.xlane.f32.xlu0 %v1010
        %v1012 = vpop.xlane.xlu0 %1011
        %v1013 = vsel %vm859, %v788, -inf
        %1014 = vmax.xlane.f32.xlu0 %v1013
        %v1015 = vpop.xlane.xlu0 %1014
        %v1016 = vsel %vm859, %v779, -inf
        %1017 = vmax.xlane.f32.xlu0 %v1016
        %v1018 = vpop.xlane.xlu0 %1017
        %v1019 = vsel %vm859, %v789, -inf
        %1020 = vmax.xlane.f32.xlu0 %v1019
        %v1021 = vpop.xlane.xlu0 %1020
        %v1022 = vsel %vm859, %v786, -inf
        %1023 = vmax.xlane.f32.xlu0 %v1022
        %v1024 = vpop.xlane.xlu0 %1023
        %v1025 = vsel %vm859, %v790, -inf
        %1026 = vmax.xlane.f32.xlu0 %v1025
        %v1027 = vpop.xlane.xlu0 %1026
        %v1028 = vsel %vm859, %v831, -inf
        %1029 = vmax.xlane.f32.xlu0 %v1028
        %v1030 = vpop.xlane.xlu0 %1029
        %v1031 = vsel %vm859, %v855, -inf
        %1032 = vmax.xlane.f32.xlu0 %v1031
        %v1033 = vpop.xlane.xlu0 %1032
        %v1034 = vsel %vm859, %v838, -inf
        %1035 = vmax.xlane.f32.xlu0 %v1034
        %v1036 = vpop.xlane.xlu0 %1035
        %v1037 = vsel %vm859, %v856, -inf
        %1038 = vmax.xlane.f32.xlu0 %v1037
        %v1039 = vpop.xlane.xlu0 %1038
        %v1040 = vsel %vm859, %v847, -inf
        %1041 = vmax.xlane.f32.xlu0 %v1040
        %v1042 = vpop.xlane.xlu0 %1041
        %v1043 = vsel %vm859, %v857, -inf
        %1044 = vmax.xlane.f32.xlu0 %v1043
        %v1045 = vpop.xlane.xlu0 %1044
        %v1046 = vsel %vm859, %v854, -inf
        %1047 = vmax.xlane.f32.xlu0 %v1046
        %v1048 = vpop.xlane.xlu0 %1047
        %v1049 = vsel %vm859, %v858, -inf
        %1050 = vmax.xlane.f32.xlu0 %v1049
        %v1051 = vpop.xlane.xlu0 %1050
        %v1116 = vlaneseq
        %v1117 = vand.u32 %v1116, 127
        %v1118 = vlaneseq
        %v1119 = vshrl.u32 %v1118, 7
        %v1120 = vsub.s32 %v1117, %v1119
        %v1121 = vrot.slane %v862, %v1120
        %v1122 = vlaneseq
        %v1123 = vshrl.u32 %v1122, 7
        %v1124 = vsub.s32 %v1117, %v1123
        %v1125 = vrot.slane %v865, %v1124
        %v1126 = vlaneseq
        %v1127 = vshrl.u32 %v1126, 7
        %v1128 = vsub.s32 %v1117, %v1127
        %v1129 = vrot.slane %v868, %v1128
        %v1130 = vlaneseq
        %v1131 = vshrl.u32 %v1130, 7
        %v1132 = vsub.s32 %v1117, %v1131
        %v1133 = vrot.slane %v871, %v1132
        %v1134 = vlaneseq
        %v1135 = vshrl.u32 %v1134, 7
        %v1136 = vsub.s32 %v1117, %v1135
        %v1137 = vrot.slane %v874, %v1136
        %v1138 = vlaneseq
        %v1139 = vshrl.u32 %v1138, 7
        %v1140 = vsub.s32 %v1117, %v1139
        %v1141 = vrot.slane %v877, %v1140
        %v1142 = vlaneseq
        %v1143 = vshrl.u32 %v1142, 7
        %v1144 = vsub.s32 %v1117, %v1143
        %v1145 = vrot.slane %v880, %v1144
        %v1146 = vlaneseq
        %v1147 = vshrl.u32 %v1146, 7
        %v1148 = vsub.s32 %v1117, %v1147
        %v1149 = vrot.slane %v883, %v1148
        %v1150 = vlaneseq
        %v1151 = vshrl.u32 %v1150, 7
        %v1152 = vsub.s32 %v1117, %v1151
        %v1153 = vrot.slane %v886, %v1152
        %v1154 = vlaneseq
        %v1155 = vshrl.u32 %v1154, 7
        %v1156 = vsub.s32 %v1117, %v1155
        %v1157 = vrot.slane %v889, %v1156
        %v1158 = vlaneseq
        %v1159 = vshrl.u32 %v1158, 7
        %v1160 = vsub.s32 %v1117, %v1159
        %v1161 = vrot.slane %v892, %v1160
        %v1162 = vlaneseq
        %v1163 = vshrl.u32 %v1162, 7
        %v1164 = vsub.s32 %v1117, %v1163
        %v1165 = vrot.slane %v895, %v1164
        %v1166 = vlaneseq
        %v1167 = vshrl.u32 %v1166, 7
        %v1168 = vsub.s32 %v1117, %v1167
        %v1169 = vrot.slane %v898, %v1168
        %v1170 = vlaneseq
        %v1171 = vshrl.u32 %v1170, 7
        %v1172 = vsub.s32 %v1117, %v1171
        %v1173 = vrot.slane %v901, %v1172
        %v1174 = vlaneseq
        %v1175 = vshrl.u32 %v1174, 7
        %v1176 = vsub.s32 %v1117, %v1175
        %v1177 = vrot.slane %v904, %v1176
        %v1178 = vlaneseq
        %v1179 = vshrl.u32 %v1178, 7
        %v1180 = vsub.s32 %v1117, %v1179
        %v1181 = vrot.slane %v907, %v1180
        %v1182 = vlaneseq
        %v1183 = vshrl.u32 %v1182, 7
        %v1184 = vsub.s32 %v1117, %v1183
        %v1185 = vrot.slane %v910, %v1184
        %v1186 = vlaneseq
        %v1187 = vshrl.u32 %v1186, 7
        %v1188 = vsub.s32 %v1117, %v1187
        %v1189 = vrot.slane %v913, %v1188
        %v1190 = vlaneseq
        %v1191 = vshrl.u32 %v1190, 7
        %v1192 = vsub.s32 %v1117, %v1191
        %v1193 = vrot.slane %v916, %v1192
        %v1194 = vlaneseq
        %v1195 = vshrl.u32 %v1194, 7
        %v1196 = vsub.s32 %v1117, %v1195
        %v1197 = vrot.slane %v919, %v1196
        %v1198 = vlaneseq
        %v1199 = vshrl.u32 %v1198, 7
        %v1200 = vsub.s32 %v1117, %v1199
        %v1201 = vrot.slane %v922, %v1200
        %v1202 = vlaneseq
        %v1203 = vshrl.u32 %v1202, 7
        %v1204 = vsub.s32 %v1117, %v1203
        %v1205 = vrot.slane %v925, %v1204
        %v1206 = vlaneseq
        %v1207 = vshrl.u32 %v1206, 7
        %v1208 = vsub.s32 %v1117, %v1207
        %v1209 = vrot.slane %v928, %v1208
        %v1210 = vlaneseq
        %v1211 = vshrl.u32 %v1210, 7
        %v1212 = vsub.s32 %v1117, %v1211
        %v1213 = vrot.slane %v931, %v1212
        %v1214 = vlaneseq
        %v1215 = vshrl.u32 %v1214, 7
        %v1216 = vsub.s32 %v1117, %v1215
        %v1217 = vrot.slane %v934, %v1216
        %v1218 = vlaneseq
        %v1219 = vshrl.u32 %v1218, 7
        %v1220 = vsub.s32 %v1117, %v1219
        %v1221 = vrot.slane %v937, %v1220
        %v1222 = vlaneseq
        %v1223 = vshrl.u32 %v1222, 7
        %v1224 = vsub.s32 %v1117, %v1223
        %v1225 = vrot.slane %v940, %v1224
        %v1226 = vlaneseq
        %v1227 = vshrl.u32 %v1226, 7
        %v1228 = vsub.s32 %v1117, %v1227
        %v1229 = vrot.slane %v943, %v1228
        %v1230 = vlaneseq
        %v1231 = vshrl.u32 %v1230, 7
        %v1232 = vsub.s32 %v1117, %v1231
        %v1233 = vrot.slane %v946, %v1232
        %v1234 = vlaneseq
        %v1235 = vshrl.u32 %v1234, 7
        %v1236 = vsub.s32 %v1117, %v1235
        %v1237 = vrot.slane %v949, %v1236
        %v1238 = vlaneseq
        %v1239 = vshrl.u32 %v1238, 7
        %v1240 = vsub.s32 %v1117, %v1239
        %v1241 = vrot.slane %v952, %v1240
        %v1242 = vlaneseq
        %v1243 = vshrl.u32 %v1242, 7
        %v1244 = vsub.s32 %v1117, %v1243
        %v1245 = vrot.slane %v955, %v1244
        %v1246 = vlaneseq
        %v1247 = vshrl.u32 %v1246, 7
        %v1248 = vsub.s32 %v1117, %v1247
        %v1249 = vrot.slane %v958, %v1248
        %v1250 = vlaneseq
        %v1251 = vshrl.u32 %v1250, 7
        %v1252 = vsub.s32 %v1117, %v1251
        %v1253 = vrot.slane %v961, %v1252
        %v1254 = vlaneseq
        %v1255 = vshrl.u32 %v1254, 7
        %v1256 = vsub.s32 %v1117, %v1255
        %v1257 = vrot.slane %v964, %v1256
        %v1258 = vlaneseq
        %v1259 = vshrl.u32 %v1258, 7
        %v1260 = vsub.s32 %v1117, %v1259
        %v1261 = vrot.slane %v967, %v1260
        %v1262 = vlaneseq
        %v1263 = vshrl.u32 %v1262, 7
        %v1264 = vsub.s32 %v1117, %v1263
        %v1265 = vrot.slane %v970, %v1264
        %v1266 = vlaneseq
        %v1267 = vshrl.u32 %v1266, 7
        %v1268 = vsub.s32 %v1117, %v1267
        %v1269 = vrot.slane %v973, %v1268
        %v1270 = vlaneseq
        %v1271 = vshrl.u32 %v1270, 7
        %v1272 = vsub.s32 %v1117, %v1271
        %v1273 = vrot.slane %v976, %v1272
        %v1274 = vlaneseq
        %v1275 = vshrl.u32 %v1274, 7
        %v1276 = vsub.s32 %v1117, %v1275
        %v1277 = vrot.slane %v979, %v1276
        %v1278 = vlaneseq
        %v1279 = vshrl.u32 %v1278, 7
        %v1280 = vsub.s32 %v1117, %v1279
        %v1281 = vrot.slane %v982, %v1280
        %v1282 = vlaneseq
        %v1283 = vshrl.u32 %v1282, 7
        %v1284 = vsub.s32 %v1117, %v1283
        %v1285 = vrot.slane %v985, %v1284
        %v1286 = vlaneseq
        %v1287 = vshrl.u32 %v1286, 7
        %v1288 = vsub.s32 %v1117, %v1287
        %v1289 = vrot.slane %v988, %v1288
        %v1290 = vlaneseq
        %v1291 = vshrl.u32 %v1290, 7
        %v1292 = vsub.s32 %v1117, %v1291
        %v1293 = vrot.slane %v991, %v1292
        %v1294 = vlaneseq
        %v1295 = vshrl.u32 %v1294, 7
        %v1296 = vsub.s32 %v1117, %v1295
        %v1297 = vrot.slane %v994, %v1296
        %v1298 = vlaneseq
        %v1299 = vshrl.u32 %v1298, 7
        %v1300 = vsub.s32 %v1117, %v1299
        %v1301 = vrot.slane %v997, %v1300
        %v1302 = vlaneseq
        %v1303 = vshrl.u32 %v1302, 7
        %v1304 = vsub.s32 %v1117, %v1303
        %v1305 = vrot.slane %v1000, %v1304
        %v1306 = vlaneseq
        %v1307 = vshrl.u32 %v1306, 7
        %v1308 = vsub.s32 %v1117, %v1307
        %v1309 = vrot.slane %v1003, %v1308
        %v1310 = vlaneseq
        %v1311 = vshrl.u32 %v1310, 7
        %v1312 = vsub.s32 %v1117, %v1311
        %v1313 = vrot.slane %v1006, %v1312
        %v1314 = vlaneseq
        %v1315 = vshrl.u32 %v1314, 7
        %v1316 = vsub.s32 %v1117, %v1315
        %v1317 = vrot.slane %v1009, %v1316
        %v1318 = vlaneseq
        %v1319 = vshrl.u32 %v1318, 7
        %v1320 = vsub.s32 %v1117, %v1319
        %v1321 = vrot.slane %v1012, %v1320
        %v1322 = vlaneseq
        %v1323 = vshrl.u32 %v1322, 7
        %v1324 = vsub.s32 %v1117, %v1323
        %v1325 = vrot.slane %v1015, %v1324
        %v1326 = vlaneseq
        %v1327 = vshrl.u32 %v1326, 7
        %v1328 = vsub.s32 %v1117, %v1327
        %v1329 = vrot.slane %v1018, %v1328
        %v1330 = vlaneseq
        %v1331 = vshrl.u32 %v1330, 7
        %v1332 = vsub.s32 %v1117, %v1331
        %v1333 = vrot.slane %v1021, %v1332
        %v1334 = vlaneseq
        %v1335 = vshrl.u32 %v1334, 7
        %v1336 = vsub.s32 %v1117, %v1335
        %v1337 = vrot.slane %v1024, %v1336
        %v1338 = vlaneseq
        %v1339 = vshrl.u32 %v1338, 7
        %v1340 = vsub.s32 %v1117, %v1339
        %v1341 = vrot.slane %v1027, %v1340
        %v1342 = vlaneseq
        %v1343 = vshrl.u32 %v1342, 7
        %v1344 = vsub.s32 %v1117, %v1343
        %v1345 = vrot.slane %v1030, %v1344
        %v1346 = vlaneseq
        %v1347 = vshrl.u32 %v1346, 7
        %v1348 = vsub.s32 %v1117, %v1347
        %v1349 = vrot.slane %v1033, %v1348
        %v1350 = vlaneseq
        %v1351 = vshrl.u32 %v1350, 7
        %v1352 = vsub.s32 %v1117, %v1351
        %v1353 = vrot.slane %v1036, %v1352
        %v1354 = vlaneseq
        %v1355 = vshrl.u32 %v1354, 7
        %v1356 = vsub.s32 %v1117, %v1355
        %v1357 = vrot.slane %v1039, %v1356
        %v1358 = vlaneseq
        %v1359 = vshrl.u32 %v1358, 7
        %v1360 = vsub.s32 %v1117, %v1359
        %v1361 = vrot.slane %v1042, %v1360
        %v1362 = vlaneseq
        %v1363 = vshrl.u32 %v1362, 7
        %v1364 = vsub.s32 %v1117, %v1363
        %v1365 = vrot.slane %v1045, %v1364
        %v1366 = vlaneseq
        %v1367 = vshrl.u32 %v1366, 7
        %v1368 = vsub.s32 %v1117, %v1367
        %v1369 = vrot.slane %v1048, %v1368
        %v1370 = vlaneseq
        %v1371 = vshrl.u32 %v1370, 7
        %v1372 = vsub.s32 %v1117, %v1371
        %v1373 = vrot.slane %v1051, %v1372
        %vm1374 = vcmask 1041409
        %v1375 = vsel %vm1374, %v1125, %v1121
        %vm1376 = vcmask 1042434
        %v1377 = vsel %vm1376, %v1129, %v1375
        %vm1378 = vcmask 1043459
        %v1379 = vsel %vm1378, %v1133, %v1377
        %vm1380 = vcmask 1044484
        %v1381 = vsel %vm1380, %v1137, %v1379
        %vm1382 = vcmask 1045509
        %v1383 = vsel %vm1382, %v1141, %v1381
        %vm1384 = vcmask 1046534
        %v1385 = vsel %vm1384, %v1145, %v1383
        %vm1386 = vcmask 1047559
        %v1387 = vsel %vm1386, %v1149, %v1385
        %v1388 = vsel %vm1374, %v1157, %v1153
        %v1389 = vsel %vm1376, %v1161, %v1388
        %v1390 = vsel %vm1378, %v1165, %v1389
        %v1391 = vsel %vm1380, %v1169, %v1390
        %v1392 = vsel %vm1382, %v1173, %v1391
        %v1393 = vsel %vm1384, %v1177, %v1392
        %v1394 = vsel %vm1386, %v1181, %v1393
        %v1395 = vsel %vm1374, %v1189, %v1185
        %v1396 = vsel %vm1376, %v1193, %v1395
        %v1397 = vsel %vm1378, %v1197, %v1396
        %v1398 = vsel %vm1380, %v1201, %v1397
        %v1399 = vsel %vm1382, %v1205, %v1398
        %v1400 = vsel %vm1384, %v1209, %v1399
        %v1401 = vsel %vm1386, %v1213, %v1400
        %v1402 = vsel %vm1374, %v1221, %v1217
        %v1403 = vsel %vm1376, %v1225, %v1402
        %v1404 = vsel %vm1378, %v1229, %v1403
        %v1405 = vsel %vm1380, %v1233, %v1404
        %v1406 = vsel %vm1382, %v1237, %v1405
        %v1407 = vsel %vm1384, %v1241, %v1406
        %v1408 = vsel %vm1386, %v1245, %v1407
        %v1409 = vsel %vm1374, %v1253, %v1249
        %v1410 = vsel %vm1376, %v1257, %v1409
        %v1411 = vsel %vm1378, %v1261, %v1410
        %v1412 = vsel %vm1380, %v1265, %v1411
        %v1413 = vsel %vm1382, %v1269, %v1412
        %v1414 = vsel %vm1384, %v1273, %v1413
        %v1415 = vsel %vm1386, %v1277, %v1414
        %v1416 = vsel %vm1374, %v1285, %v1281
        %v1417 = vsel %vm1376, %v1289, %v1416
        %v1418 = vsel %vm1378, %v1293, %v1417
        %v1419 = vsel %vm1380, %v1297, %v1418
        %v1420 = vsel %vm1382, %v1301, %v1419
        %v1421 = vsel %vm1384, %v1305, %v1420
        %v1422 = vsel %vm1386, %v1309, %v1421
        %v1423 = vsel %vm1374, %v1317, %v1313
        %v1424 = vsel %vm1376, %v1321, %v1423
        %v1425 = vsel %vm1378, %v1325, %v1424
        %v1426 = vsel %vm1380, %v1329, %v1425
        %v1427 = vsel %vm1382, %v1333, %v1426
        %v1428 = vsel %vm1384, %v1337, %v1427
        %v1429 = vsel %vm1386, %v1341, %v1428
        %v1430 = vsel %vm1374, %v1349, %v1345
        %v1431 = vsel %vm1376, %v1353, %v1430
        %v1432 = vsel %vm1378, %v1357, %v1431
        %v1433 = vsel %vm1380, %v1361, %v1432
        %v1434 = vsel %vm1382, %v1365, %v1433
        %v1435 = vsel %vm1384, %v1369, %v1434
        %v1436 = vsel %vm1386, %v1373, %v1435
        %1445 = vxpose.xlu0.b32.start [1/16] %v1387, 128
        %1446 = vxpose.xlu0.b32.cont [2/16] %v1394, 128
        %1447 = vxpose.xlu0.b32.cont [3/16] %v1401, 128
        %1448 = vxpose.xlu0.b32.cont [4/16] %v1408, 128
        %1449 = vxpose.xlu0.b32.cont [5/16] 0.0, 128
        %1450 = vxpose.xlu0.b32.cont [6/16] 0.0, 128
        %1451 = vxpose.xlu0.b32.cont [7/16] 0.0, 128
        %1452 = vxpose.xlu0.b32.cont [8/16] 0.0, 128
        %1453 = vxpose.xlu0.b32.cont [9/16] 0.0, 128
        %1454 = vxpose.xlu0.b32.cont [10/16] 0.0, 128
        %1455 = vxpose.xlu0.b32.cont [11/16] 0.0, 128
        %1456 = vxpose.xlu0.b32.cont [12/16] 0.0, 128
        %1457 = vxpose.xlu0.b32.cont [13/16] 0.0, 128
        %1458 = vxpose.xlu0.b32.cont [14/16] 0.0, 128
        %1459 = vxpose.xlu0.b32.cont [15/16] 0.0, 128
        %1460 = vxpose.xlu0.b32.end [16/16] 0.0, 128
        %v1461 = vpop.trf.xlu0
        %v1462 = vpop.trf.xlu0
        %v1463 = vpop.trf.xlu0
        %v1464 = vpop.trf.xlu0
        %v1465 = vpop.trf.xlu0
        %v1466 = vpop.trf.xlu0
        %v1467 = vpop.trf.xlu0
        %v1468 = vpop.trf.xlu0
        %v1469 = vpop.trf.xlu0
        %v1470 = vpop.trf.xlu0
        %v1471 = vpop.trf.xlu0
        %v1472 = vpop.trf.xlu0
        %v1473 = vpop.trf.xlu0
        %v1474 = vpop.trf.xlu0
        %v1475 = vpop.trf.xlu0
        %v1476 = vpop.trf.xlu0
        %1477 = vxpose.xlu0.b32.start [1/16] %v1415, 128
        %1478 = vxpose.xlu0.b32.cont [2/16] %v1422, 128
        %1479 = vxpose.xlu0.b32.cont [3/16] %v1429, 128
        %1480 = vxpose.xlu0.b32.cont [4/16] %v1436, 128
        %1481 = vxpose.xlu0.b32.cont [5/16] 0.0, 128
        %1482 = vxpose.xlu0.b32.cont [6/16] 0.0, 128
        %1483 = vxpose.xlu0.b32.cont [7/16] 0.0, 128
        %1484 = vxpose.xlu0.b32.cont [8/16] 0.0, 128
        %1485 = vxpose.xlu0.b32.cont [9/16] 0.0, 128
        %1486 = vxpose.xlu0.b32.cont [10/16] 0.0, 128
        %1487 = vxpose.xlu0.b32.cont [11/16] 0.0, 128
        %1488 = vxpose.xlu0.b32.cont [12/16] 0.0, 128
        %1489 = vxpose.xlu0.b32.cont [13/16] 0.0, 128
        %1490 = vxpose.xlu0.b32.cont [14/16] 0.0, 128
        %1491 = vxpose.xlu0.b32.cont [15/16] 0.0, 128
        %1492 = vxpose.xlu0.b32.end [16/16] 0.0, 128
        %v1493 = vpop.trf.xlu0
        %v1494 = vpop.trf.xlu0
        %v1495 = vpop.trf.xlu0
        %v1496 = vpop.trf.xlu0
        %v1497 = vpop.trf.xlu0
        %v1498 = vpop.trf.xlu0
        %v1499 = vpop.trf.xlu0
        %v1500 = vpop.trf.xlu0
        %v1501 = vpop.trf.xlu0
        %v1502 = vpop.trf.xlu0
        %v1503 = vpop.trf.xlu0
        %v1504 = vpop.trf.xlu0
        %v1505 = vpop.trf.xlu0
        %v1506 = vpop.trf.xlu0
        %v1507 = vpop.trf.xlu0
        %v1508 = vpop.trf.xlu0
        %v1510 = vunpack.c.l.s4 1983009808
        %v1511 = vunpack.c.0.s8 %v1510
        %v1512 = vlaneseq
        %v1513 = vshrl.u32 %v1512, 7
        %v1514 = vsub.s32 %v1511, %v1513
        %v1515 = vrot.slane %v1461, %v1514
        %v1517 = vunpack.c.l.s4 1983009808
        %v1518 = vunpack.c.0.s8 %v1517
        %v1519 = vlaneseq
        %v1520 = vshrl.u32 %v1519, 7
        %v1521 = vsub.s32 %v1518, %v1520
        %v1522 = vrot.slane %v1493, %v1521
        %v1523 = vcombine.low %v1515, %v1522
        %v1524 = vcombine.high %v1515, %v1522
        %v1526 = vunpack.c.l.s4 1934713408
        %v1527 = vunpack.c.0.s8 %v1526
        %v1528 = vlaneseq
        %v1529 = vshrl.u32 %v1528, 7
        %v1530 = vsub.s32 %v1527, %v1529
        %v1531 = vrot.slane %v1523, %v1530
        %v1533 = vunpack.c.l.s4 1934713408
        %v1534 = vunpack.c.0.s8 %v1533
        %v1535 = vlaneseq
        %v1536 = vshrl.u32 %v1535, 7
        %v1537 = vsub.s32 %v1534, %v1536
        %v1538 = vrot.slane %v1524, %v1537
        %v1539 = vcombine.high %v1531, 0.0
        %v1540 = vcombine.high %v1538, 0.0
        %v1545 = vcombine.low %v1531, %v1539
        %v1546 = vcombine.low %v1538, %v1540
        %v1548 = vunpack.c.l.s4 1983009808
        %v1549 = vunpack.c.0.s8 %v1548
        %v1550 = vlaneseq
        %v1551 = vshrl.u32 %v1550, 7
        %v1552 = vsub.s32 %v1549, %v1551
        %v1553 = vrot.slane %v1545, %v1552
        %v1555 = vunpack.c.l.s4 1983009808
        %v1556 = vunpack.c.0.s8 %v1555
        %v1557 = vlaneseq
        %v1558 = vshrl.u32 %v1557, 7
        %v1559 = vsub.s32 %v1556, %v1558
        %v1560 = vrot.slane %v1546, %v1559
        %v1561 = vcombine.low %v1553, %v1560
        %vm1562 = vcmask 261120
        %v1563 = vsel %vm1562, %v1561, 0
        %1565 = vmatprep.subr.mxu0 0.0
        %1566 = vmatpush1.msra.mxu0 %v275
        %1567 = vmatprep.subr.mxu0 0.0
        %1568 = vmatpush1.msra.mxu0 %v276
        %1569 = vmatprep.subr.mxu0 0.0
        %1570 = vmatpush1.msra.mxu0 %v277
        %1571 = vmatprep.subr.mxu0 0.0
        %1572 = vmatpush1.msra.mxu0 %v278
        %1573 = vmatprep.subr.mxu0 0.0
        %1574 = vmatpush1.msra.mxu0 0.0
        %1575 = vmatprep.subr.mxu0 0.0
        %1576 = vmatpush1.msra.mxu0 0.0
        %1577 = vmatprep.subr.mxu0 0.0
        %1578 = vmatpush1.msra.mxu0 0.0
        %1579 = vmatprep.subr.mxu0 0.0
        %1580 = vmatpush1.msra.mxu0 0.0
        %1581 = vmatprep.subr.mxu0 0.0
        %1582 = vmatpush1.msra.mxu0 0.0
        %1583 = vmatprep.subr.mxu0 0.0
        %1584 = vmatpush1.msra.mxu0 0.0
        %1585 = vmatprep.subr.mxu0 0.0
        %1586 = vmatpush1.msra.mxu0 0.0
        %1587 = vmatprep.subr.mxu0 0.0
        %1588 = vmatpush1.msra.mxu0 0.0
        %1589 = vmatprep.subr.mxu0 0.0
        %1590 = vmatpush1.msra.mxu0 0.0
        %1591 = vmatprep.subr.mxu0 0.0
        %1592 = vmatpush1.msra.mxu0 0.0
        %1593 = vmatprep.subr.mxu0 0.0
        %1594 = vmatpush1.msra.mxu0 0.0
        %1595 = vmatprep.subr.mxu0 0.0
        %1596 = vmatpush1.msra.mxu0 0.0
        %1597 = vmatprep.subr.mxu0 0.0
        %1598 = vmatpush1.msra.mxu0 0.0
        %1599 = vmatprep.subr.mxu0 0.0
        %1600 = vmatpush1.msra.mxu0 0.0
        %1601 = vmatprep.subr.mxu0 0.0
        %1602 = vmatpush1.msra.mxu0 0.0
        %1603 = vmatprep.subr.mxu0 0.0
        %1604 = vmatpush1.msra.mxu0 0.0
        %1605 = vmatprep.subr.mxu0 0.0
        %1606 = vmatpush1.msra.mxu0 0.0
        %1607 = vmatprep.subr.mxu0 0.0
        %1608 = vmatpush1.msra.mxu0 0.0
        %1609 = vmatprep.subr.mxu0 0.0
        %1610 = vmatpush1.msra.mxu0 0.0
        %1611 = vmatprep.subr.mxu0 0.0
        %1612 = vmatpush1.msra.mxu0 0.0
        %1613 = vmatprep.subr.mxu0 0.0
        %1614 = vmatpush1.msra.mxu0 0.0
        %1615 = vmatprep.subr.mxu0 0.0
        %1616 = vmatpush1.msra.mxu0 0.0
        %1617 = vmatprep.subr.mxu0 0.0
        %1618 = vmatpush1.msra.mxu0 0.0
        %1619 = vmatprep.subr.mxu0 0.0
        %1620 = vmatpush1.msra.mxu0 0.0
        %1621 = vmatprep.subr.mxu0 0.0
        %1622 = vmatpush1.msra.mxu0 0.0
        %1623 = vmatprep.subr.mxu0 0.0
        %1624 = vmatpush1.msra.mxu0 0.0
        %1625 = vmatprep.subr.mxu0 0.0
        %1626 = vmatpush1.msra.mxu0 0.0
        %1627 = vmatprep.subr.mxu0 0.0
        %1628 = vmatpush1.msra.mxu0 0.0
        %1629 = vmatprep.mubr.f32.mxu0 0.0
        %1630 = vmatmul.mubr.f32.gmra.mrb[0].mxu0 %v1563
        %v1631 = vpop.f32.mrb[0].mxu0
        %v1632 = vadd.f32 0.0, %v1631
        %v1633 = vpop.f32.mrb[0].mxu0
        %1634 = vdwg.mxu0
        %v1636 = vcombine.high %v1632, %v1632
        %v1638 = vunpack.c.l.s4 1983009808
        %v1639 = vunpack.c.0.s8 %v1638
        %v1640 = vlaneseq
        %v1641 = vshrl.u32 %v1640, 7
        %v1642 = vsub.s32 %v1639, %v1641
        %v1643 = vrot.slane %v1632, %v1642
        %v1645 = vunpack.c.l.s4 1983009808
        %v1646 = vunpack.c.0.s8 %v1645
        %v1647 = vlaneseq
        %v1648 = vshrl.u32 %v1647, 7
        %v1649 = vsub.s32 %v1646, %v1648
        %v1650 = vrot.slane %v1636, %v1649
        %v1651 = vcombine.high %v1643, %v1643
        %v1652 = vcombine.high %v1650, %v1650
        %v1657 = vld [vmem:[%s3] sm:$0x1]
        %v1659 = vlaneseq
        %v1660 = vshrl.u32 %v1659, 7
        %v1661 = vsub.s32 0, %v1660
        %v1662 = vrot.slane %v1657, %v1661
        %v1664 = vadd.f32 %v1643, %v1662
        %v1665 = vadd.f32 %v1651, %v1662
        %v1666 = vadd.f32 %v1650, %v1662
        %v1667 = vadd.f32 %v1652, %v1662
        %v1668 = vld [vmem:[#allocation2] sm:$0x3]
        %v1669 = vld [vmem:[#allocation3] sm:$0x3]
        %v1671 = vsel %vm1562, %v1668, 0
        %1673 = vmatprep.subr.mxu0 0.0
        %1674 = vmatpush1.msra.mxu0 %v279
        %1675 = vmatprep.subr.mxu0 0.0
        %1676 = vmatpush1.msra.mxu0 %v280
        %1677 = vmatprep.subr.mxu0 0.0
        %1678 = vmatpush1.msra.mxu0 %v281
        %1679 = vmatprep.subr.mxu0 0.0
        %1680 = vmatpush1.msra.mxu0 %v282
        %1681 = vmatprep.subr.mxu0 0.0
        %1682 = vmatpush1.msra.mxu0 0.0
        %1683 = vmatprep.subr.mxu0 0.0
        %1684 = vmatpush1.msra.mxu0 0.0
        %1685 = vmatprep.subr.mxu0 0.0
        %1686 = vmatpush1.msra.mxu0 0.0
        %1687 = vmatprep.subr.mxu0 0.0
        %1688 = vmatpush1.msra.mxu0 0.0
        %1689 = vmatprep.subr.mxu0 0.0
        %1690 = vmatpush1.msra.mxu0 0.0
        %1691 = vmatprep.subr.mxu0 0.0
        %1692 = vmatpush1.msra.mxu0 0.0
        %1693 = vmatprep.subr.mxu0 0.0
        %1694 = vmatpush1.msra.mxu0 0.0
        %1695 = vmatprep.subr.mxu0 0.0
        %1696 = vmatpush1.msra.mxu0 0.0
        %1697 = vmatprep.subr.mxu0 0.0
        %1698 = vmatpush1.msra.mxu0 0.0
        %1699 = vmatprep.subr.mxu0 0.0
        %1700 = vmatpush1.msra.mxu0 0.0
        %1701 = vmatprep.subr.mxu0 0.0
        %1702 = vmatpush1.msra.mxu0 0.0
        %1703 = vmatprep.subr.mxu0 0.0
        %1704 = vmatpush1.msra.mxu0 0.0
        %1705 = vmatprep.subr.mxu0 0.0
        %1706 = vmatpush1.msra.mxu0 0.0
        %1707 = vmatprep.subr.mxu0 0.0
        %1708 = vmatpush1.msra.mxu0 0.0
        %1709 = vmatprep.subr.mxu0 0.0
        %1710 = vmatpush1.msra.mxu0 0.0
        %1711 = vmatprep.subr.mxu0 0.0
        %1712 = vmatpush1.msra.mxu0 0.0
        %1713 = vmatprep.subr.mxu0 0.0
        %1714 = vmatpush1.msra.mxu0 0.0
        %1715 = vmatprep.subr.mxu0 0.0
        %1716 = vmatpush1.msra.mxu0 0.0
        %1717 = vmatprep.subr.mxu0 0.0
        %1718 = vmatpush1.msra.mxu0 0.0
        %1719 = vmatprep.subr.mxu0 0.0
        %1720 = vmatpush1.msra.mxu0 0.0
        %1721 = vmatprep.subr.mxu0 0.0
        %1722 = vmatpush1.msra.mxu0 0.0
        %1723 = vmatprep.subr.mxu0 0.0
        %1724 = vmatpush1.msra.mxu0 0.0
        %1725 = vmatprep.subr.mxu0 0.0
        %1726 = vmatpush1.msra.mxu0 0.0
        %1727 = vmatprep.subr.mxu0 0.0
        %1728 = vmatpush1.msra.mxu0 0.0
        %1729 = vmatprep.subr.mxu0 0.0
        %1730 = vmatpush1.msra.mxu0 0.0
        %1731 = vmatprep.subr.mxu0 0.0
        %1732 = vmatpush1.msra.mxu0 0.0
        %1733 = vmatprep.subr.mxu0 0.0
        %1734 = vmatpush1.msra.mxu0 0.0
        %1735 = vmatprep.subr.mxu0 0.0
        %1736 = vmatpush1.msra.mxu0 0.0
        %1737 = vmatprep.mubr.f32.mxu0 0.0
        %1738 = vmatmul.mubr.f32.gmra.mrb[0].mxu0 %v1671
        %v1739 = vpop.f32.mrb[0].mxu0
        %v1740 = vadd.f32 0.0, %v1739
        %v1741 = vpop.f32.mrb[0].mxu0
        %1742 = vdwg.mxu0
        %v1743 = vadd.f32 %v1664, %v1740
        %v1744 = vxor.u32 %v1743, 2147483648
        %v1745 = vmul.f32 %v1744, 1.442695
        %v1746 = vpow.pop %v1745
        %v1747 = vadd.f32 %v1746, 1.0
        %v1748 = vrcp.pop %v1747
        %v1749 = vmul.f32 1.0, %v1748
        %v1750 = vtanh.pop %v1743
        %v1753 = vunpack.c.l.s4 1983009808
        %v1754 = vunpack.c.0.s8 %v1753
        %v1755 = vlaneseq
        %v1756 = vshrl.u32 %v1755, 7
        %v1757 = vsub.s32 %v1754, %v1756
        %v1758 = vrot.slane %v1669, %v1757
        %1759 = vrot.lane.b32.xlu0 %v1758, 32
        %v1760 = vpop.permute.xlu0 %1759
        %v1762 = vmul.f32 %v1749, %v1760
        %1764 = vrot.lane.b32.xlu0 %v1750, 32
        %v1765 = vpop.permute.xlu0 %1764
        %v1767 = vmul.f32 %v1749, %v1765
        %1769 = vrot.lane.b32.xlu0 %v1767, 32
        %v1770 = vpop.permute.xlu0 %1769
        %v1772 = vadd.f32 %v1762, %v1770
        %v1773 = vtanh.pop %v1772
        %1775 = vrot.lane.b32.xlu0 %v1773, 32
        %v1776 = vpop.permute.xlu0 %1775
        %v1778 = vmul.f32 %v1749, %v1776
        %v1781 = vunpack.c.l.s4 1983009808
        %v1782 = vunpack.c.0.s8 %v1781
        %v1783 = vlaneseq
        %v1784 = vshrl.u32 %v1783, 7
        %v1785 = vsub.s32 %v1782, %v1784
        %v1786 = vrot.slane %v1778, %v1785
        %1787 = vrot.lane.b32.xlu0 %v1786, 64
        %v1788 = vpop.permute.xlu0 %1787
        %vm1790 = vcmask 254976
        %1791 = vst.msk [vmem:[#allocation4] sm:$0x3] %vm1790, %v1788
        %v1792 = vsel %vm1562, %v1788, 0
        %1794 = vmatprep.subr.mxu0 0.0
        %1795 = vmatpush1.msra.mxu0 %v279
        %1796 = vmatprep.subr.mxu0 0.0
        %1797 = vmatpush1.msra.mxu0 %v280
        %1798 = vmatprep.subr.mxu0 0.0
        %1799 = vmatpush1.msra.mxu0 %v281
        %1800 = vmatprep.subr.mxu0 0.0
        %1801 = vmatpush1.msra.mxu0 %v282
        %1802 = vmatprep.subr.mxu0 0.0
        %1803 = vmatpush1.msra.mxu0 0.0
        %1804 = vmatprep.subr.mxu0 0.0
        %1805 = vmatpush1.msra.mxu0 0.0
        %1806 = vmatprep.subr.mxu0 0.0
        %1807 = vmatpush1.msra.mxu0 0.0
        %1808 = vmatprep.subr.mxu0 0.0
        %1809 = vmatpush1.msra.mxu0 0.0
        %1810 = vmatprep.subr.mxu0 0.0
        %1811 = vmatpush1.msra.mxu0 0.0
        %1812 = vmatprep.subr.mxu0 0.0
        %1813 = vmatpush1.msra.mxu0 0.0
        %1814 = vmatprep.subr.mxu0 0.0
        %1815 = vmatpush1.msra.mxu0 0.0
        %1816 = vmatprep.subr.mxu0 0.0
        %1817 = vmatpush1.msra.mxu0 0.0
        %1818 = vmatprep.subr.mxu0 0.0
        %1819 = vmatpush1.msra.mxu0 0.0
        %1820 = vmatprep.subr.mxu0 0.0
        %1821 = vmatpush1.msra.mxu0 0.0
        %1822 = vmatprep.subr.mxu0 0.0
        %1823 = vmatpush1.msra.mxu0 0.0
        %1824 = vmatprep.subr.mxu0 0.0
        %1825 = vmatpush1.msra.mxu0 0.0
        %1826 = vmatprep.subr.mxu0 0.0
        %1827 = vmatpush1.msra.mxu0 0.0
        %1828 = vmatprep.subr.mxu0 0.0
        %1829 = vmatpush1.msra.mxu0 0.0
        %1830 = vmatprep.subr.mxu0 0.0
        %1831 = vmatpush1.msra.mxu0 0.0
        %1832 = vmatprep.subr.mxu0 0.0
        %1833 = vmatpush1.msra.mxu0 0.0
        %1834 = vmatprep.subr.mxu0 0.0
        %1835 = vmatpush1.msra.mxu0 0.0
        %1836 = vmatprep.subr.mxu0 0.0
        %1837 = vmatpush1.msra.mxu0 0.0
        %1838 = vmatprep.subr.mxu0 0.0
        %1839 = vmatpush1.msra.mxu0 0.0
        %1840 = vmatprep.subr.mxu0 0.0
        %1841 = vmatpush1.msra.mxu0 0.0
        %1842 = vmatprep.subr.mxu0 0.0
        %1843 = vmatpush1.msra.mxu0 0.0
        %1844 = vmatprep.subr.mxu0 0.0
        %1845 = vmatpush1.msra.mxu0 0.0
        %1846 = vmatprep.subr.mxu0 0.0
        %1847 = vmatpush1.msra.mxu0 0.0
        %1848 = vmatprep.subr.mxu0 0.0
        %1849 = vmatpush1.msra.mxu0 0.0
        %1850 = vmatprep.subr.mxu0 0.0
        %1851 = vmatpush1.msra.mxu0 0.0
        %1852 = vmatprep.subr.mxu0 0.0
        %1853 = vmatpush1.msra.mxu0 0.0
        %1854 = vmatprep.subr.mxu0 0.0
        %1855 = vmatpush1.msra.mxu0 0.0
        %1856 = vmatprep.subr.mxu0 0.0
        %1857 = vmatpush1.msra.mxu0 0.0
        %1858 = vmatprep.mubr.f32.mxu0 0.0
        %1859 = vmatmul.mubr.f32.gmra.mrb[0].mxu0 %v1792
        %v1860 = vpop.f32.mrb[0].mxu0
        %v1861 = vadd.f32 0.0, %v1860
        %v1862 = vpop.f32.mrb[0].mxu0
        %1863 = vdwg.mxu0
        %v1864 = vadd.f32 %v1665, %v1861
        %v1865 = vxor.u32 %v1864, 2147483648
        %v1866 = vmul.f32 %v1865, 1.442695
        %v1867 = vpow.pop %v1866
        %v1868 = vadd.f32 %v1867, 1.0
        %v1869 = vrcp.pop %v1868
        %v1870 = vmul.f32 1.0, %v1869
        %v1871 = vtanh.pop %v1864
        %v1872 = vmul.f32 %v1870, %v1772
        %1874 = vrot.lane.b32.xlu0 %v1871, 32
        %v1875 = vpop.permute.xlu0 %1874
        %v1877 = vmul.f32 %v1870, %v1875
        %1879 = vrot.lane.b32.xlu0 %v1877, 32
        %v1880 = vpop.permute.xlu0 %1879
        %v1882 = vadd.f32 %v1872, %v1880
        %v1883 = vtanh.pop %v1882
        %1885 = vrot.lane.b32.xlu0 %v1883, 32
        %v1886 = vpop.permute.xlu0 %1885
        %v1888 = vmul.f32 %v1870, %v1886
        %v1891 = vunpack.c.l.s4 1983009808
        %v1892 = vunpack.c.0.s8 %v1891
        %v1893 = vlaneseq
        %v1894 = vshrl.u32 %v1893, 7
        %v1895 = vsub.s32 %v1892, %v1894
        %v1896 = vrot.slane %v1888, %v1895
        %1897 = vrot.lane.b32.xlu0 %v1896, 64
        %v1898 = vpop.permute.xlu0 %1897
        %s1900 = scalar_lea.vmem [#allocation4], 2
        %1901 = vst.msk [vmem:[%s1900] sm:$0x3] %vm1790, %v1898
        %v1902 = vsel %vm1562, %v1898, 0
        %1904 = vmatprep.subr.mxu0 0.0
        %1905 = vmatpush1.msra.mxu0 %v279
        %1906 = vmatprep.subr.mxu0 0.0
        %1907 = vmatpush1.msra.mxu0 %v280
        %1908 = vmatprep.subr.mxu0 0.0
        %1909 = vmatpush1.msra.mxu0 %v281
        %1910 = vmatprep.subr.mxu0 0.0
        %1911 = vmatpush1.msra.mxu0 %v282
        %1912 = vmatprep.subr.mxu0 0.0
        %1913 = vmatpush1.msra.mxu0 0.0
        %1914 = vmatprep.subr.mxu0 0.0
        %1915 = vmatpush1.msra.mxu0 0.0
        %1916 = vmatprep.subr.mxu0 0.0
        %1917 = vmatpush1.msra.mxu0 0.0
        %1918 = vmatprep.subr.mxu0 0.0
        %1919 = vmatpush1.msra.mxu0 0.0
        %1920 = vmatprep.subr.mxu0 0.0
        %1921 = vmatpush1.msra.mxu0 0.0
        %1922 = vmatprep.subr.mxu0 0.0
        %1923 = vmatpush1.msra.mxu0 0.0
        %1924 = vmatprep.subr.mxu0 0.0
        %1925 = vmatpush1.msra.mxu0 0.0
        %1926 = vmatprep.subr.mxu0 0.0
        %1927 = vmatpush1.msra.mxu0 0.0
        %1928 = vmatprep.subr.mxu0 0.0
        %1929 = vmatpush1.msra.mxu0 0.0
        %1930 = vmatprep.subr.mxu0 0.0
        %1931 = vmatpush1.msra.mxu0 0.0
        %1932 = vmatprep.subr.mxu0 0.0
        %1933 = vmatpush1.msra.mxu0 0.0
        %1934 = vmatprep.subr.mxu0 0.0
        %1935 = vmatpush1.msra.mxu0 0.0
        %1936 = vmatprep.subr.mxu0 0.0
        %1937 = vmatpush1.msra.mxu0 0.0
        %1938 = vmatprep.subr.mxu0 0.0
        %1939 = vmatpush1.msra.mxu0 0.0
        %1940 = vmatprep.subr.mxu0 0.0
        %1941 = vmatpush1.msra.mxu0 0.0
        %1942 = vmatprep.subr.mxu0 0.0
        %1943 = vmatpush1.msra.mxu0 0.0
        %1944 = vmatprep.subr.mxu0 0.0
        %1945 = vmatpush1.msra.mxu0 0.0
        %1946 = vmatprep.subr.mxu0 0.0
        %1947 = vmatpush1.msra.mxu0 0.0
        %1948 = vmatprep.subr.mxu0 0.0
        %1949 = vmatpush1.msra.mxu0 0.0
        %1950 = vmatprep.subr.mxu0 0.0
        %1951 = vmatpush1.msra.mxu0 0.0
        %1952 = vmatprep.subr.mxu0 0.0
        %1953 = vmatpush1.msra.mxu0 0.0
        %1954 = vmatprep.subr.mxu0 0.0
        %1955 = vmatpush1.msra.mxu0 0.0
        %1956 = vmatprep.subr.mxu0 0.0
        %1957 = vmatpush1.msra.mxu0 0.0
        %1958 = vmatprep.subr.mxu0 0.0
        %1959 = vmatpush1.msra.mxu0 0.0
        %1960 = vmatprep.subr.mxu0 0.0
        %1961 = vmatpush1.msra.mxu0 0.0
        %1962 = vmatprep.subr.mxu0 0.0
        %1963 = vmatpush1.msra.mxu0 0.0
        %1964 = vmatprep.subr.mxu0 0.0
        %1965 = vmatpush1.msra.mxu0 0.0
        %1966 = vmatprep.subr.mxu0 0.0
        %1967 = vmatpush1.msra.mxu0 0.0
        %1968 = vmatprep.mubr.f32.mxu0 0.0
        %1969 = vmatmul.mubr.f32.gmra.mrb[0].mxu0 %v1902
        %v1970 = vpop.f32.mrb[0].mxu0
        %v1971 = vadd.f32 0.0, %v1970
        %v1972 = vpop.f32.mrb[0].mxu0
        %1973 = vdwg.mxu0
        %v1974 = vadd.f32 %v1666, %v1971
        %v1975 = vxor.u32 %v1974, 2147483648
        %v1976 = vmul.f32 %v1975, 1.442695
        %v1977 = vpow.pop %v1976
        %v1978 = vadd.f32 %v1977, 1.0
        %v1979 = vrcp.pop %v1978
        %v1980 = vmul.f32 1.0, %v1979
        %v1981 = vtanh.pop %v1974
        %v1982 = vmul.f32 %v1980, %v1882
        %1984 = vrot.lane.b32.xlu0 %v1981, 32
        %v1985 = vpop.permute.xlu0 %1984
        %v1987 = vmul.f32 %v1980, %v1985
        %1989 = vrot.lane.b32.xlu0 %v1987, 32
        %v1990 = vpop.permute.xlu0 %1989
        %v1992 = vadd.f32 %v1982, %v1990
        %v1993 = vtanh.pop %v1992
        %1995 = vrot.lane.b32.xlu0 %v1993, 32
        %v1996 = vpop.permute.xlu0 %1995
        %v1998 = vmul.f32 %v1980, %v1996
        %v2001 = vunpack.c.l.s4 1983009808
        %v2002 = vunpack.c.0.s8 %v2001
        %v2003 = vlaneseq
        %v2004 = vshrl.u32 %v2003, 7
        %v2005 = vsub.s32 %v2002, %v2004
        %v2006 = vrot.slane %v1998, %v2005
        %2007 = vrot.lane.b32.xlu0 %v2006, 64
        %v2008 = vpop.permute.xlu0 %2007
        %s2010 = scalar_lea.vmem [#allocation4], 4
        %2011 = vst.msk [vmem:[%s2010] sm:$0x3] %vm1790, %v2008
        %v2012 = vsel %vm1562, %v2008, 0
        %2014 = vmatprep.subr.mxu0 0.0
        %2015 = vmatpush1.msra.mxu0 %v279
        %2016 = vmatprep.subr.mxu0 0.0
        %2017 = vmatpush1.msra.mxu0 %v280
        %2018 = vmatprep.subr.mxu0 0.0
        %2019 = vmatpush1.msra.mxu0 %v281
        %2020 = vmatprep.subr.mxu0 0.0
        %2021 = vmatpush1.msra.mxu0 %v282
        %2022 = vmatprep.subr.mxu0 0.0
        %2023 = vmatpush1.msra.mxu0 0.0
        %2024 = vmatprep.subr.mxu0 0.0
        %2025 = vmatpush1.msra.mxu0 0.0
        %2026 = vmatprep.subr.mxu0 0.0
        %2027 = vmatpush1.msra.mxu0 0.0
        %2028 = vmatprep.subr.mxu0 0.0
        %2029 = vmatpush1.msra.mxu0 0.0
        %2030 = vmatprep.subr.mxu0 0.0
        %2031 = vmatpush1.msra.mxu0 0.0
        %2032 = vmatprep.subr.mxu0 0.0
        %2033 = vmatpush1.msra.mxu0 0.0
        %2034 = vmatprep.subr.mxu0 0.0
        %2035 = vmatpush1.msra.mxu0 0.0
        %2036 = vmatprep.subr.mxu0 0.0
        %2037 = vmatpush1.msra.mxu0 0.0
        %2038 = vmatprep.subr.mxu0 0.0
        %2039 = vmatpush1.msra.mxu0 0.0
        %2040 = vmatprep.subr.mxu0 0.0
        %2041 = vmatpush1.msra.mxu0 0.0
        %2042 = vmatprep.subr.mxu0 0.0
        %2043 = vmatpush1.msra.mxu0 0.0
        %2044 = vmatprep.subr.mxu0 0.0
        %2045 = vmatpush1.msra.mxu0 0.0
        %2046 = vmatprep.subr.mxu0 0.0
        %2047 = vmatpush1.msra.mxu0 0.0
        %2048 = vmatprep.subr.mxu0 0.0
        %2049 = vmatpush1.msra.mxu0 0.0
        %2050 = vmatprep.subr.mxu0 0.0
        %2051 = vmatpush1.msra.mxu0 0.0
        %2052 = vmatprep.subr.mxu0 0.0
        %2053 = vmatpush1.msra.mxu0 0.0
        %2054 = vmatprep.subr.mxu0 0.0
        %2055 = vmatpush1.msra.mxu0 0.0
        %2056 = vmatprep.subr.mxu0 0.0
        %2057 = vmatpush1.msra.mxu0 0.0
        %2058 = vmatprep.subr.mxu0 0.0
        %2059 = vmatpush1.msra.mxu0 0.0
        %2060 = vmatprep.subr.mxu0 0.0
        %2061 = vmatpush1.msra.mxu0 0.0
        %2062 = vmatprep.subr.mxu0 0.0
        %2063 = vmatpush1.msra.mxu0 0.0
        %2064 = vmatprep.subr.mxu0 0.0
        %2065 = vmatpush1.msra.mxu0 0.0
        %2066 = vmatprep.subr.mxu0 0.0
        %2067 = vmatpush1.msra.mxu0 0.0
        %2068 = vmatprep.subr.mxu0 0.0
        %2069 = vmatpush1.msra.mxu0 0.0
        %2070 = vmatprep.subr.mxu0 0.0
        %2071 = vmatpush1.msra.mxu0 0.0
        %2072 = vmatprep.subr.mxu0 0.0
        %2073 = vmatpush1.msra.mxu0 0.0
        %2074 = vmatprep.subr.mxu0 0.0
        %2075 = vmatpush1.msra.mxu0 0.0
        %2076 = vmatprep.subr.mxu0 0.0
        %2077 = vmatpush1.msra.mxu0 0.0
        %2078 = vmatprep.mubr.f32.mxu0 0.0
        %2079 = vmatmul.mubr.f32.gmra.mrb[0].mxu0 %v2012
        %v2080 = vpop.f32.mrb[0].mxu0
        %v2081 = vadd.f32 0.0, %v2080
        %v2082 = vpop.f32.mrb[0].mxu0
        %2083 = vdwg.mxu0
        %v2084 = vadd.f32 %v1667, %v2081
        %v2085 = vxor.u32 %v2084, 2147483648
        %v2086 = vmul.f32 %v2085, 1.442695
        %v2087 = vpow.pop %v2086
        %v2088 = vadd.f32 %v2087, 1.0
        %v2089 = vrcp.pop %v2088
        %v2090 = vmul.f32 1.0, %v2089
        %v2091 = vtanh.pop %v2084
        %v2092 = vmul.f32 %v2090, %v1992
        %2094 = vrot.lane.b32.xlu0 %v2091, 32
        %v2095 = vpop.permute.xlu0 %2094
        %v2097 = vmul.f32 %v2090, %v2095
        %2099 = vrot.lane.b32.xlu0 %v2097, 32
        %v2100 = vpop.permute.xlu0 %2099
        %v2102 = vadd.f32 %v2092, %v2100
        %v2103 = vtanh.pop %v2102
        %2105 = vrot.lane.b32.xlu0 %v2103, 32
        %v2106 = vpop.permute.xlu0 %2105
        %v2108 = vmul.f32 %v2090, %v2106
        %v2111 = vunpack.c.l.s4 1983009808
        %v2112 = vunpack.c.0.s8 %v2111
        %v2113 = vlaneseq
        %v2114 = vshrl.u32 %v2113, 7
        %v2115 = vsub.s32 %v2112, %v2114
        %v2116 = vrot.slane %v2108, %v2115
        %2117 = vrot.lane.b32.xlu0 %v2116, 64
        %v2118 = vpop.permute.xlu0 %2117
        %s2120 = scalar_lea.vmem [#allocation4], 6
        %2121 = vst.msk [vmem:[%s2120] sm:$0x3] %vm1790, %v2118
        %2122 = vst.msk [vmem:[#allocation2] sm:$0x3] %vm1790, %v2118
        %v2125 = vunpack.c.l.s4 1983009808
        %v2126 = vunpack.c.0.s8 %v2125
        %v2127 = vlaneseq
        %v2128 = vshrl.u32 %v2127, 7
        %v2129 = vsub.s32 %v2126, %v2128
        %v2130 = vrot.slane %v2102, %v2129
        %2131 = vrot.lane.b32.xlu0 %v2130, 96
        %v2132 = vpop.permute.xlu0 %2131
        %2134 = vst.msk [vmem:[#allocation3] sm:$0x3] %vm1790, %v2132
        %v2135 = vld [vmem:[#allocation4] sm:$0x3]
        %v2136 = vld [vmem:[#allocation4 + $0x2] sm:$0x3]
        %v2137 = vld [vmem:[#allocation4 + $0x4] sm:$0x3]
        %v2138 = vld [vmem:[#allocation4 + $0x6] sm:$0x3]
        %2139 = vxpose.xlu0.b32.start [1/16] %v2135, 128
        %2140 = vxpose.xlu0.b32.cont [2/16] 0.0, 128
        %2141 = vxpose.xlu0.b32.cont [3/16] 0.0, 128
        %2142 = vxpose.xlu0.b32.cont [4/16] 0.0, 128
        %2143 = vxpose.xlu0.b32.cont [5/16] 0.0, 128
        %2144 = vxpose.xlu0.b32.cont [6/16] 0.0, 128
        %2145 = vxpose.xlu0.b32.cont [7/16] 0.0, 128
        %2146 = vxpose.xlu0.b32.cont [8/16] 0.0, 128
        %2147 = vxpose.xlu0.b32.cont [9/16] 0.0, 128
        %2148 = vxpose.xlu0.b32.cont [10/16] 0.0, 128
        %2149 = vxpose.xlu0.b32.cont [11/16] 0.0, 128
        %2150 = vxpose.xlu0.b32.cont [12/16] 0.0, 128
        %2151 = vxpose.xlu0.b32.cont [13/16] 0.0, 128
        %2152 = vxpose.xlu0.b32.cont [14/16] 0.0, 128
        %2153 = vxpose.xlu0.b32.cont [15/16] 0.0, 128
        %2154 = vxpose.xlu0.b32.end [16/16] 0.0, 128
        %v2155 = vpop.trf.xlu0
        %v2156 = vpop.trf.xlu0
        %v2157 = vpop.trf.xlu0
        %v2158 = vpop.trf.xlu0
        %v2159 = vpop.trf.xlu0
        %v2160 = vpop.trf.xlu0
        %v2161 = vpop.trf.xlu0
        %v2162 = vpop.trf.xlu0
        %v2163 = vpop.trf.xlu0
        %v2164 = vpop.trf.xlu0
        %v2165 = vpop.trf.xlu0
        %v2166 = vpop.trf.xlu0
        %v2167 = vpop.trf.xlu0
        %v2168 = vpop.trf.xlu0
        %v2169 = vpop.trf.xlu0
        %v2170 = vpop.trf.xlu0
        %2171 = vxpose.xlu0.b32.start [1/16] %v2136, 128
        %2172 = vxpose.xlu0.b32.cont [2/16] 0.0, 128
        %2173 = vxpose.xlu0.b32.cont [3/16] 0.0, 128
        %2174 = vxpose.xlu0.b32.cont [4/16] 0.0, 128
        %2175 = vxpose.xlu0.b32.cont [5/16] 0.0, 128
        %2176 = vxpose.xlu0.b32.cont [6/16] 0.0, 128
        %2177 = vxpose.xlu0.b32.cont [7/16] 0.0, 128
        %2178 = vxpose.xlu0.b32.cont [8/16] 0.0, 128
        %2179 = vxpose.xlu0.b32.cont [9/16] 0.0, 128
        %2180 = vxpose.xlu0.b32.cont [10/16] 0.0, 128
        %2181 = vxpose.xlu0.b32.cont [11/16] 0.0, 128
        %2182 = vxpose.xlu0.b32.cont [12/16] 0.0, 128
        %2183 = vxpose.xlu0.b32.cont [13/16] 0.0, 128
        %2184 = vxpose.xlu0.b32.cont [14/16] 0.0, 128
        %2185 = vxpose.xlu0.b32.cont [15/16] 0.0, 128
        %2186 = vxpose.xlu0.b32.end [16/16] 0.0, 128
        %v2187 = vpop.trf.xlu0
        %v2188 = vpop.trf.xlu0
        %v2189 = vpop.trf.xlu0
        %v2190 = vpop.trf.xlu0
        %v2191 = vpop.trf.xlu0
        %v2192 = vpop.trf.xlu0
        %v2193 = vpop.trf.xlu0
        %v2194 = vpop.trf.xlu0
        %v2195 = vpop.trf.xlu0
        %v2196 = vpop.trf.xlu0
        %v2197 = vpop.trf.xlu0
        %v2198 = vpop.trf.xlu0
        %v2199 = vpop.trf.xlu0
        %v2200 = vpop.trf.xlu0
        %v2201 = vpop.trf.xlu0
        %v2202 = vpop.trf.xlu0
        %2203 = vxpose.xlu0.b32.start [1/16] %v2137, 128
        %2204 = vxpose.xlu0.b32.cont [2/16] 0.0, 128
        %2205 = vxpose.xlu0.b32.cont [3/16] 0.0, 128
        %2206 = vxpose.xlu0.b32.cont [4/16] 0.0, 128
        %2207 = vxpose.xlu0.b32.cont [5/16] 0.0, 128
        %2208 = vxpose.xlu0.b32.cont [6/16] 0.0, 128
        %2209 = vxpose.xlu0.b32.cont [7/16] 0.0, 128
        %2210 = vxpose.xlu0.b32.cont [8/16] 0.0, 128
        %2211 = vxpose.xlu0.b32.cont [9/16] 0.0, 128
        %2212 = vxpose.xlu0.b32.cont [10/16] 0.0, 128
        %2213 = vxpose.xlu0.b32.cont [11/16] 0.0, 128
        %2214 = vxpose.xlu0.b32.cont [12/16] 0.0, 128
        %2215 = vxpose.xlu0.b32.cont [13/16] 0.0, 128
        %2216 = vxpose.xlu0.b32.cont [14/16] 0.0, 128
        %2217 = vxpose.xlu0.b32.cont [15/16] 0.0, 128
        %2218 = vxpose.xlu0.b32.end [16/16] 0.0, 128
        %v2219 = vpop.trf.xlu0
        %v2220 = vpop.trf.xlu0
        %v2221 = vpop.trf.xlu0
        %v2222 = vpop.trf.xlu0
        %v2223 = vpop.trf.xlu0
        %v2224 = vpop.trf.xlu0
        %v2225 = vpop.trf.xlu0
        %v2226 = vpop.trf.xlu0
        %v2227 = vpop.trf.xlu0
        %v2228 = vpop.trf.xlu0
        %v2229 = vpop.trf.xlu0
        %v2230 = vpop.trf.xlu0
        %v2231 = vpop.trf.xlu0
        %v2232 = vpop.trf.xlu0
        %v2233 = vpop.trf.xlu0
        %v2234 = vpop.trf.xlu0
        %2235 = vxpose.xlu0.b32.start [1/16] %v2138, 128
        %2236 = vxpose.xlu0.b32.cont [2/16] 0.0, 128
        %2237 = vxpose.xlu0.b32.cont [3/16] 0.0, 128
        %2238 = vxpose.xlu0.b32.cont [4/16] 0.0, 128
        %2239 = vxpose.xlu0.b32.cont [5/16] 0.0, 128
        %2240 = vxpose.xlu0.b32.cont [6/16] 0.0, 128
        %2241 = vxpose.xlu0.b32.cont [7/16] 0.0, 128
        %2242 = vxpose.xlu0.b32.cont [8/16] 0.0, 128
        %2243 = vxpose.xlu0.b32.cont [9/16] 0.0, 128
        %2244 = vxpose.xlu0.b32.cont [10/16] 0.0, 128
        %2245 = vxpose.xlu0.b32.cont [11/16] 0.0, 128
        %2246 = vxpose.xlu0.b32.cont [12/16] 0.0, 128
        %2247 = vxpose.xlu0.b32.cont [13/16] 0.0, 128
        %2248 = vxpose.xlu0.b32.cont [14/16] 0.0, 128
        %2249 = vxpose.xlu0.b32.cont [15/16] 0.0, 128
        %2250 = vxpose.xlu0.b32.end [16/16] 0.0, 128
        %v2251 = vpop.trf.xlu0
        %v2252 = vpop.trf.xlu0
        %v2253 = vpop.trf.xlu0
        %v2254 = vpop.trf.xlu0
        %v2255 = vpop.trf.xlu0
        %v2256 = vpop.trf.xlu0
        %v2257 = vpop.trf.xlu0
        %v2258 = vpop.trf.xlu0
        %v2259 = vpop.trf.xlu0
        %v2260 = vpop.trf.xlu0
        %v2261 = vpop.trf.xlu0
        %v2262 = vpop.trf.xlu0
        %v2263 = vpop.trf.xlu0
        %v2264 = vpop.trf.xlu0
        %v2265 = vpop.trf.xlu0
        %v2266 = vpop.trf.xlu0
        %v2267 = vcombine.low %v2155, %v2219
        %v2268 = vcombine.high %v2155, %v2219
        %v2270 = vunpack.c.l.s4 1983009808
        %v2271 = vunpack.c.0.s8 %v2270
        %v2272 = vlaneseq
        %v2273 = vshrl.u32 %v2272, 7
        %v2274 = vsub.s32 %v2271, %v2273
        %v2275 = vrot.slane %v2267, %v2274
        %v2277 = vunpack.c.l.s4 1983009808
        %v2278 = vunpack.c.0.s8 %v2277
        %v2279 = vlaneseq
        %v2280 = vshrl.u32 %v2279, 7
        %v2281 = vsub.s32 %v2278, %v2280
        %v2282 = vrot.slane %v2268, %v2281
        %v2283 = vcombine.low %v2187, %v2251
        %v2284 = vcombine.high %v2187, %v2251
        %v2286 = vunpack.c.l.s4 1983009808
        %v2287 = vunpack.c.0.s8 %v2286
        %v2288 = vlaneseq
        %v2289 = vshrl.u32 %v2288, 7
        %v2290 = vsub.s32 %v2287, %v2289
        %v2291 = vrot.slane %v2283, %v2290
        %v2293 = vunpack.c.l.s4 1983009808
        %v2294 = vunpack.c.0.s8 %v2293
        %v2295 = vlaneseq
        %v2296 = vshrl.u32 %v2295, 7
        %v2297 = vsub.s32 %v2294, %v2296
        %v2298 = vrot.slane %v2284, %v2297
        %v2299 = vcombine.low %v2275, %v2291
        %v2300 = vcombine.high %v2275, %v2291
        %v2302 = vunpack.c.l.s4 1934713408
        %v2303 = vunpack.c.0.s8 %v2302
        %v2304 = vlaneseq
        %v2305 = vshrl.u32 %v2304, 7
        %v2306 = vsub.s32 %v2303, %v2305
        %v2307 = vrot.slane %v2299, %v2306
        %v2309 = vunpack.c.l.s4 1934713408
        %v2310 = vunpack.c.0.s8 %v2309
        %v2311 = vlaneseq
        %v2312 = vshrl.u32 %v2311, 7
        %v2313 = vsub.s32 %v2310, %v2312
        %v2314 = vrot.slane %v2300, %v2313
        %v2315 = vcombine.low %v2282, %v2298
        %v2316 = vcombine.high %v2282, %v2298
        %v2318 = vunpack.c.l.s4 1934713408
        %v2319 = vunpack.c.0.s8 %v2318
        %v2320 = vlaneseq
        %v2321 = vshrl.u32 %v2320, 7
        %v2322 = vsub.s32 %v2319, %v2321
        %v2323 = vrot.slane %v2315, %v2322
        %v2325 = vunpack.c.l.s4 1934713408
        %v2326 = vunpack.c.0.s8 %v2325
        %v2327 = vlaneseq
        %v2328 = vshrl.u32 %v2327, 7
        %v2329 = vsub.s32 %v2326, %v2328
        %v2330 = vrot.slane %v2316, %v2329
        %v2331 = vcombine.high %v2307, 0.0
        %v2332 = vcombine.high %v2314, 0.0
        %v2333 = vcombine.high %v2323, 0.0
        %v2334 = vcombine.high %v2330, 0.0
        %v2335 = vcombine.low %v2156, %v2220
        %v2336 = vcombine.high %v2156, %v2220
        %v2338 = vunpack.c.l.s4 1983009808
        %v2339 = vunpack.c.0.s8 %v2338
        %v2340 = vlaneseq
        %v2341 = vshrl.u32 %v2340, 7
        %v2342 = vsub.s32 %v2339, %v2341
        %v2343 = vrot.slane %v2335, %v2342
        %v2345 = vunpack.c.l.s4 1983009808
        %v2346 = vunpack.c.0.s8 %v2345
        %v2347 = vlaneseq
        %v2348 = vshrl.u32 %v2347, 7
        %v2349 = vsub.s32 %v2346, %v2348
        %v2350 = vrot.slane %v2336, %v2349
        %v2351 = vcombine.low %v2188, %v2252
        %v2352 = vcombine.high %v2188, %v2252
        %v2354 = vunpack.c.l.s4 1983009808
        %v2355 = vunpack.c.0.s8 %v2354
        %v2356 = vlaneseq
        %v2357 = vshrl.u32 %v2356, 7
        %v2358 = vsub.s32 %v2355, %v2357
        %v2359 = vrot.slane %v2351, %v2358
        %v2361 = vunpack.c.l.s4 1983009808
        %v2362 = vunpack.c.0.s8 %v2361
        %v2363 = vlaneseq
        %v2364 = vshrl.u32 %v2363, 7
        %v2365 = vsub.s32 %v2362, %v2364
        %v2366 = vrot.slane %v2352, %v2365
        %v2367 = vcombine.low %v2343, %v2359
        %v2368 = vcombine.high %v2343, %v2359
        %v2370 = vunpack.c.l.s4 1934713408
        %v2371 = vunpack.c.0.s8 %v2370
        %v2372 = vlaneseq
        %v2373 = vshrl.u32 %v2372, 7
        %v2374 = vsub.s32 %v2371, %v2373
        %v2375 = vrot.slane %v2367, %v2374
        %v2377 = vunpack.c.l.s4 1934713408
        %v2378 = vunpack.c.0.s8 %v2377
        %v2379 = vlaneseq
        %v2380 = vshrl.u32 %v2379, 7
        %v2381 = vsub.s32 %v2378, %v2380
        %v2382 = vrot.slane %v2368, %v2381
        %v2383 = vcombine.low %v2350, %v2366
        %v2384 = vcombine.high %v2350, %v2366
        %v2386 = vunpack.c.l.s4 1934713408
        %v2387 = vunpack.c.0.s8 %v2386
        %v2388 = vlaneseq
        %v2389 = vshrl.u32 %v2388, 7
        %v2390 = vsub.s32 %v2387, %v2389
        %v2391 = vrot.slane %v2383, %v2390
        %v2393 = vunpack.c.l.s4 1934713408
        %v2394 = vunpack.c.0.s8 %v2393
        %v2395 = vlaneseq
        %v2396 = vshrl.u32 %v2395, 7
        %v2397 = vsub.s32 %v2394, %v2396
        %v2398 = vrot.slane %v2384, %v2397
        %v2399 = vcombine.high %v2375, 0.0
        %v2400 = vcombine.high %v2382, 0.0
        %v2401 = vcombine.high %v2391, 0.0
        %v2402 = vcombine.high %v2398, 0.0
        %v2403 = vcombine.low %v2157, %v2221
        %v2404 = vcombine.high %v2157, %v2221
        %v2406 = vunpack.c.l.s4 1983009808
        %v2407 = vunpack.c.0.s8 %v2406
        %v2408 = vlaneseq
        %v2409 = vshrl.u32 %v2408, 7
        %v2410 = vsub.s32 %v2407, %v2409
        %v2411 = vrot.slane %v2403, %v2410
        %v2413 = vunpack.c.l.s4 1983009808
        %v2414 = vunpack.c.0.s8 %v2413
        %v2415 = vlaneseq
        %v2416 = vshrl.u32 %v2415, 7
        %v2417 = vsub.s32 %v2414, %v2416
        %v2418 = vrot.slane %v2404, %v2417
        %v2419 = vcombine.low %v2189, %v2253
        %v2420 = vcombine.high %v2189, %v2253
        %v2422 = vunpack.c.l.s4 1983009808
        %v2423 = vunpack.c.0.s8 %v2422
        %v2424 = vlaneseq
        %v2425 = vshrl.u32 %v2424, 7
        %v2426 = vsub.s32 %v2423, %v2425
        %v2427 = vrot.slane %v2419, %v2426
        %v2429 = vunpack.c.l.s4 1983009808
        %v2430 = vunpack.c.0.s8 %v2429
        %v2431 = vlaneseq
        %v2432 = vshrl.u32 %v2431, 7
        %v2433 = vsub.s32 %v2430, %v2432
        %v2434 = vrot.slane %v2420, %v2433
        %v2435 = vcombine.low %v2411, %v2427
        %v2436 = vcombine.high %v2411, %v2427
        %v2438 = vunpack.c.l.s4 1934713408
        %v2439 = vunpack.c.0.s8 %v2438
        %v2440 = vlaneseq
        %v2441 = vshrl.u32 %v2440, 7
        %v2442 = vsub.s32 %v2439, %v2441
        %v2443 = vrot.slane %v2435, %v2442
        %v2445 = vunpack.c.l.s4 1934713408
        %v2446 = vunpack.c.0.s8 %v2445
        %v2447 = vlaneseq
        %v2448 = vshrl.u32 %v2447, 7
        %v2449 = vsub.s32 %v2446, %v2448
        %v2450 = vrot.slane %v2436, %v2449
        %v2451 = vcombine.low %v2418, %v2434
        %v2452 = vcombine.high %v2418, %v2434
        %v2454 = vunpack.c.l.s4 1934713408
        %v2455 = vunpack.c.0.s8 %v2454
        %v2456 = vlaneseq
        %v2457 = vshrl.u32 %v2456, 7
        %v2458 = vsub.s32 %v2455, %v2457
        %v2459 = vrot.slane %v2451, %v2458
        %v2461 = vunpack.c.l.s4 1934713408
        %v2462 = vunpack.c.0.s8 %v2461
        %v2463 = vlaneseq
        %v2464 = vshrl.u32 %v2463, 7
        %v2465 = vsub.s32 %v2462, %v2464
        %v2466 = vrot.slane %v2452, %v2465
        %v2467 = vcombine.high %v2443, 0.0
        %v2468 = vcombine.high %v2450, 0.0
        %v2469 = vcombine.high %v2459, 0.0
        %v2470 = vcombine.high %v2466, 0.0
        %v2471 = vcombine.low %v2158, %v2222
        %v2472 = vcombine.high %v2158, %v2222
        %v2474 = vunpack.c.l.s4 1983009808
        %v2475 = vunpack.c.0.s8 %v2474
        %v2476 = vlaneseq
        %v2477 = vshrl.u32 %v2476, 7
        %v2478 = vsub.s32 %v2475, %v2477
        %v2479 = vrot.slane %v2471, %v2478
        %v2481 = vunpack.c.l.s4 1983009808
        %v2482 = vunpack.c.0.s8 %v2481
        %v2483 = vlaneseq
        %v2484 = vshrl.u32 %v2483, 7
        %v2485 = vsub.s32 %v2482, %v2484
        %v2486 = vrot.slane %v2472, %v2485
        %v2487 = vcombine.low %v2190, %v2254
        %v2488 = vcombine.high %v2190, %v2254
        %v2490 = vunpack.c.l.s4 1983009808
        %v2491 = vunpack.c.0.s8 %v2490
        %v2492 = vlaneseq
        %v2493 = vshrl.u32 %v2492, 7
        %v2494 = vsub.s32 %v2491, %v2493
        %v2495 = vrot.slane %v2487, %v2494
        %v2497 = vunpack.c.l.s4 1983009808
        %v2498 = vunpack.c.0.s8 %v2497
        %v2499 = vlaneseq
        %v2500 = vshrl.u32 %v2499, 7
        %v2501 = vsub.s32 %v2498, %v2500
        %v2502 = vrot.slane %v2488, %v2501
        %v2503 = vcombine.low %v2479, %v2495
        %v2504 = vcombine.high %v2479, %v2495
        %v2506 = vunpack.c.l.s4 1934713408
        %v2507 = vunpack.c.0.s8 %v2506
        %v2508 = vlaneseq
        %v2509 = vshrl.u32 %v2508, 7
        %v2510 = vsub.s32 %v2507, %v2509
        %v2511 = vrot.slane %v2503, %v2510
        %v2513 = vunpack.c.l.s4 1934713408
        %v2514 = vunpack.c.0.s8 %v2513
        %v2515 = vlaneseq
        %v2516 = vshrl.u32 %v2515, 7
        %v2517 = vsub.s32 %v2514, %v2516
        %v2518 = vrot.slane %v2504, %v2517
        %v2519 = vcombine.low %v2486, %v2502
        %v2520 = vcombine.high %v2486, %v2502
        %v2522 = vunpack.c.l.s4 1934713408
        %v2523 = vunpack.c.0.s8 %v2522
        %v2524 = vlaneseq
        %v2525 = vshrl.u32 %v2524, 7
        %v2526 = vsub.s32 %v2523, %v2525
        %v2527 = vrot.slane %v2519, %v2526
        %v2529 = vunpack.c.l.s4 1934713408
        %v2530 = vunpack.c.0.s8 %v2529
        %v2531 = vlaneseq
        %v2532 = vshrl.u32 %v2531, 7
        %v2533 = vsub.s32 %v2530, %v2532
        %v2534 = vrot.slane %v2520, %v2533
        %v2535 = vcombine.high %v2511, 0.0
        %v2536 = vcombine.high %v2518, 0.0
        %v2537 = vcombine.high %v2527, 0.0
        %v2538 = vcombine.high %v2534, 0.0
        %2539 = vxpose.xlu0.b32.start [1/16] %v2307, 128
        %2540 = vxpose.xlu0.b32.cont [2/16] 0.0, 128
        %2541 = vxpose.xlu0.b32.cont [3/16] 0.0, 128
        %2542 = vxpose.xlu0.b32.cont [4/16] 0.0, 128
        %2543 = vxpose.xlu0.b32.cont [5/16] 0.0, 128
        %2544 = vxpose.xlu0.b32.cont [6/16] 0.0, 128
        %2545 = vxpose.xlu0.b32.cont [7/16] 0.0, 128
        %2546 = vxpose.xlu0.b32.cont [8/16] 0.0, 128
        %2547 = vxpose.xlu0.b32.cont [9/16] 0.0, 128
        %2548 = vxpose.xlu0.b32.cont [10/16] 0.0, 128
        %2549 = vxpose.xlu0.b32.cont [11/16] 0.0, 128
        %2550 = vxpose.xlu0.b32.cont [12/16] 0.0, 128
        %2551 = vxpose.xlu0.b32.cont [13/16] 0.0, 128
        %2552 = vxpose.xlu0.b32.cont [14/16] 0.0, 128
        %2553 = vxpose.xlu0.b32.cont [15/16] 0.0, 128
        %2554 = vxpose.xlu0.b32.end [16/16] 0.0, 128
        %v2555 = vpop.trf.xlu0
        %v2556 = vpop.trf.xlu0
        %v2557 = vpop.trf.xlu0
        %v2558 = vpop.trf.xlu0
        %v2559 = vpop.trf.xlu0
        %v2560 = vpop.trf.xlu0
        %v2561 = vpop.trf.xlu0
        %v2562 = vpop.trf.xlu0
        %v2563 = vpop.trf.xlu0
        %v2564 = vpop.trf.xlu0
        %v2565 = vpop.trf.xlu0
        %v2566 = vpop.trf.xlu0
        %v2567 = vpop.trf.xlu0
        %v2568 = vpop.trf.xlu0
        %v2569 = vpop.trf.xlu0
        %v2570 = vpop.trf.xlu0
        %2571 = vxpose.xlu0.b32.start [1/16] %v2331, 128
        %2572 = vxpose.xlu0.b32.cont [2/16] 0.0, 128
        %2573 = vxpose.xlu0.b32.cont [3/16] 0.0, 128
        %2574 = vxpose.xlu0.b32.cont [4/16] 0.0, 128
        %2575 = vxpose.xlu0.b32.cont [5/16] 0.0, 128
        %2576 = vxpose.xlu0.b32.cont [6/16] 0.0, 128
        %2577 = vxpose.xlu0.b32.cont [7/16] 0.0, 128
        %2578 = vxpose.xlu0.b32.cont [8/16] 0.0, 128
        %2579 = vxpose.xlu0.b32.cont [9/16] 0.0, 128
        %2580 = vxpose.xlu0.b32.cont [10/16] 0.0, 128
        %2581 = vxpose.xlu0.b32.cont [11/16] 0.0, 128
        %2582 = vxpose.xlu0.b32.cont [12/16] 0.0, 128
        %2583 = vxpose.xlu0.b32.cont [13/16] 0.0, 128
        %2584 = vxpose.xlu0.b32.cont [14/16] 0.0, 128
        %2585 = vxpose.xlu0.b32.cont [15/16] 0.0, 128
        %2586 = vxpose.xlu0.b32.end [16/16] 0.0, 128
        %v2587 = vpop.trf.xlu0
        %v2588 = vpop.trf.xlu0
        %v2589 = vpop.trf.xlu0
        %v2590 = vpop.trf.xlu0
        %v2591 = vpop.trf.xlu0
        %v2592 = vpop.trf.xlu0
        %v2593 = vpop.trf.xlu0
        %v2594 = vpop.trf.xlu0
        %v2595 = vpop.trf.xlu0
        %v2596 = vpop.trf.xlu0
        %v2597 = vpop.trf.xlu0
        %v2598 = vpop.trf.xlu0
        %v2599 = vpop.trf.xlu0
        %v2600 = vpop.trf.xlu0
        %v2601 = vpop.trf.xlu0
        %v2602 = vpop.trf.xlu0
        %2603 = vxpose.xlu0.b32.start [1/16] %v2314, 128
        %2604 = vxpose.xlu0.b32.cont [2/16] 0.0, 128
        %2605 = vxpose.xlu0.b32.cont [3/16] 0.0, 128
        %2606 = vxpose.xlu0.b32.cont [4/16] 0.0, 128
        %2607 = vxpose.xlu0.b32.cont [5/16] 0.0, 128
        %2608 = vxpose.xlu0.b32.cont [6/16] 0.0, 128
        %2609 = vxpose.xlu0.b32.cont [7/16] 0.0, 128
        %2610 = vxpose.xlu0.b32.cont [8/16] 0.0, 128
        %2611 = vxpose.xlu0.b32.cont [9/16] 0.0, 128
        %2612 = vxpose.xlu0.b32.cont [10/16] 0.0, 128
        %2613 = vxpose.xlu0.b32.cont [11/16] 0.0, 128
        %2614 = vxpose.xlu0.b32.cont [12/16] 0.0, 128
        %2615 = vxpose.xlu0.b32.cont [13/16] 0.0, 128
        %2616 = vxpose.xlu0.b32.cont [14/16] 0.0, 128
        %2617 = vxpose.xlu0.b32.cont [15/16] 0.0, 128
        %2618 = vxpose.xlu0.b32.end [16/16] 0.0, 128
        %v2619 = vpop.trf.xlu0
        %v2620 = vpop.trf.xlu0
        %v2621 = vpop.trf.xlu0
        %v2622 = vpop.trf.xlu0
        %v2623 = vpop.trf.xlu0
        %v2624 = vpop.trf.xlu0
        %v2625 = vpop.trf.xlu0
        %v2626 = vpop.trf.xlu0
        %v2627 = vpop.trf.xlu0
        %v2628 = vpop.trf.xlu0
        %v2629 = vpop.trf.xlu0
        %v2630 = vpop.trf.xlu0
        %v2631 = vpop.trf.xlu0
        %v2632 = vpop.trf.xlu0
        %v2633 = vpop.trf.xlu0
        %v2634 = vpop.trf.xlu0
        %2635 = vxpose.xlu0.b32.start [1/16] %v2332, 128
        %2636 = vxpose.xlu0.b32.cont [2/16] 0.0, 128
        %2637 = vxpose.xlu0.b32.cont [3/16] 0.0, 128
        %2638 = vxpose.xlu0.b32.cont [4/16] 0.0, 128
        %2639 = vxpose.xlu0.b32.cont [5/16] 0.0, 128
        %2640 = vxpose.xlu0.b32.cont [6/16] 0.0, 128
        %2641 = vxpose.xlu0.b32.cont [7/16] 0.0, 128
        %2642 = vxpose.xlu0.b32.cont [8/16] 0.0, 128
        %2643 = vxpose.xlu0.b32.cont [9/16] 0.0, 128
        %2644 = vxpose.xlu0.b32.cont [10/16] 0.0, 128
        %2645 = vxpose.xlu0.b32.cont [11/16] 0.0, 128
        %2646 = vxpose.xlu0.b32.cont [12/16] 0.0, 128
        %2647 = vxpose.xlu0.b32.cont [13/16] 0.0, 128
        %2648 = vxpose.xlu0.b32.cont [14/16] 0.0, 128
        %2649 = vxpose.xlu0.b32.cont [15/16] 0.0, 128
        %2650 = vxpose.xlu0.b32.end [16/16] 0.0, 128
        %v2651 = vpop.trf.xlu0
        %v2652 = vpop.trf.xlu0
        %v2653 = vpop.trf.xlu0
        %v2654 = vpop.trf.xlu0
        %v2655 = vpop.trf.xlu0
        %v2656 = vpop.trf.xlu0
        %v2657 = vpop.trf.xlu0
        %v2658 = vpop.trf.xlu0
        %v2659 = vpop.trf.xlu0
        %v2660 = vpop.trf.xlu0
        %v2661 = vpop.trf.xlu0
        %v2662 = vpop.trf.xlu0
        %v2663 = vpop.trf.xlu0
        %v2664 = vpop.trf.xlu0
        %v2665 = vpop.trf.xlu0
        %v2666 = vpop.trf.xlu0
        %2667 = vxpose.xlu0.b32.start [1/16] %v2323, 128
        %2668 = vxpose.xlu0.b32.cont [2/16] 0.0, 128
        %2669 = vxpose.xlu0.b32.cont [3/16] 0.0, 128
        %2670 = vxpose.xlu0.b32.cont [4/16] 0.0, 128
        %2671 = vxpose.xlu0.b32.cont [5/16] 0.0, 128
        %2672 = vxpose.xlu0.b32.cont [6/16] 0.0, 128
        %2673 = vxpose.xlu0.b32.cont [7/16] 0.0, 128
        %2674 = vxpose.xlu0.b32.cont [8/16] 0.0, 128
        %2675 = vxpose.xlu0.b32.cont [9/16] 0.0, 128
        %2676 = vxpose.xlu0.b32.cont [10/16] 0.0, 128
        %2677 = vxpose.xlu0.b32.cont [11/16] 0.0, 128
        %2678 = vxpose.xlu0.b32.cont [12/16] 0.0, 128
        %2679 = vxpose.xlu0.b32.cont [13/16] 0.0, 128
        %2680 = vxpose.xlu0.b32.cont [14/16] 0.0, 128
        %2681 = vxpose.xlu0.b32.cont [15/16] 0.0, 128
        %2682 = vxpose.xlu0.b32.end [16/16] 0.0, 128
        %v2683 = vpop.trf.xlu0
        %v2684 = vpop.trf.xlu0
        %v2685 = vpop.trf.xlu0
        %v2686 = vpop.trf.xlu0
        %v2687 = vpop.trf.xlu0
        %v2688 = vpop.trf.xlu0
        %v2689 = vpop.trf.xlu0
        %v2690 = vpop.trf.xlu0
        %v2691 = vpop.trf.xlu0
        %v2692 = vpop.trf.xlu0
        %v2693 = vpop.trf.xlu0
        %v2694 = vpop.trf.xlu0
        %v2695 = vpop.trf.xlu0
        %v2696 = vpop.trf.xlu0
        %v2697 = vpop.trf.xlu0
        %v2698 = vpop.trf.xlu0
        %2699 = vxpose.xlu0.b32.start [1/16] %v2333, 128
        %2700 = vxpose.xlu0.b32.cont [2/16] 0.0, 128
        %2701 = vxpose.xlu0.b32.cont [3/16] 0.0, 128
        %2702 = vxpose.xlu0.b32.cont [4/16] 0.0, 128
        %2703 = vxpose.xlu0.b32.cont [5/16] 0.0, 128
        %2704 = vxpose.xlu0.b32.cont [6/16] 0.0, 128
        %2705 = vxpose.xlu0.b32.cont [7/16] 0.0, 128
        %2706 = vxpose.xlu0.b32.cont [8/16] 0.0, 128
        %2707 = vxpose.xlu0.b32.cont [9/16] 0.0, 128
        %2708 = vxpose.xlu0.b32.cont [10/16] 0.0, 128
        %2709 = vxpose.xlu0.b32.cont [11/16] 0.0, 128
        %2710 = vxpose.xlu0.b32.cont [12/16] 0.0, 128
        %2711 = vxpose.xlu0.b32.cont [13/16] 0.0, 128
        %2712 = vxpose.xlu0.b32.cont [14/16] 0.0, 128
        %2713 = vxpose.xlu0.b32.cont [15/16] 0.0, 128
        %2714 = vxpose.xlu0.b32.end [16/16] 0.0, 128
        %v2715 = vpop.trf.xlu0
        %v2716 = vpop.trf.xlu0
        %v2717 = vpop.trf.xlu0
        %v2718 = vpop.trf.xlu0
        %v2719 = vpop.trf.xlu0
        %v2720 = vpop.trf.xlu0
        %v2721 = vpop.trf.xlu0
        %v2722 = vpop.trf.xlu0
        %v2723 = vpop.trf.xlu0
        %v2724 = vpop.trf.xlu0
        %v2725 = vpop.trf.xlu0
        %v2726 = vpop.trf.xlu0
        %v2727 = vpop.trf.xlu0
        %v2728 = vpop.trf.xlu0
        %v2729 = vpop.trf.xlu0
        %v2730 = vpop.trf.xlu0
        %2731 = vxpose.xlu0.b32.start [1/16] %v2330, 128
        %2732 = vxpose.xlu0.b32.cont [2/16] 0.0, 128
        %2733 = vxpose.xlu0.b32.cont [3/16] 0.0, 128
        %2734 = vxpose.xlu0.b32.cont [4/16] 0.0, 128
        %2735 = vxpose.xlu0.b32.cont [5/16] 0.0, 128
        %2736 = vxpose.xlu0.b32.cont [6/16] 0.0, 128
        %2737 = vxpose.xlu0.b32.cont [7/16] 0.0, 128
        %2738 = vxpose.xlu0.b32.cont [8/16] 0.0, 128
        %2739 = vxpose.xlu0.b32.cont [9/16] 0.0, 128
        %2740 = vxpose.xlu0.b32.cont [10/16] 0.0, 128
        %2741 = vxpose.xlu0.b32.cont [11/16] 0.0, 128
        %2742 = vxpose.xlu0.b32.cont [12/16] 0.0, 128
        %2743 = vxpose.xlu0.b32.cont [13/16] 0.0, 128
        %2744 = vxpose.xlu0.b32.cont [14/16] 0.0, 128
        %2745 = vxpose.xlu0.b32.cont [15/16] 0.0, 128
        %2746 = vxpose.xlu0.b32.end [16/16] 0.0, 128
        %v2747 = vpop.trf.xlu0
        %v2748 = vpop.trf.xlu0
        %v2749 = vpop.trf.xlu0
        %v2750 = vpop.trf.xlu0
        %v2751 = vpop.trf.xlu0
        %v2752 = vpop.trf.xlu0
        %v2753 = vpop.trf.xlu0
        %v2754 = vpop.trf.xlu0
        %v2755 = vpop.trf.xlu0
        %v2756 = vpop.trf.xlu0
        %v2757 = vpop.trf.xlu0
        %v2758 = vpop.trf.xlu0
        %v2759 = vpop.trf.xlu0
        %v2760 = vpop.trf.xlu0
        %v2761 = vpop.trf.xlu0
        %v2762 = vpop.trf.xlu0
        %2763 = vxpose.xlu0.b32.start [1/16] %v2334, 128
        %2764 = vxpose.xlu0.b32.cont [2/16] 0.0, 128
        %2765 = vxpose.xlu0.b32.cont [3/16] 0.0, 128
        %2766 = vxpose.xlu0.b32.cont [4/16] 0.0, 128
        %2767 = vxpose.xlu0.b32.cont [5/16] 0.0, 128
        %2768 = vxpose.xlu0.b32.cont [6/16] 0.0, 128
        %2769 = vxpose.xlu0.b32.cont [7/16] 0.0, 128
        %2770 = vxpose.xlu0.b32.cont [8/16] 0.0, 128
        %2771 = vxpose.xlu0.b32.cont [9/16] 0.0, 128
        %2772 = vxpose.xlu0.b32.cont [10/16] 0.0, 128
        %2773 = vxpose.xlu0.b32.cont [11/16] 0.0, 128
        %2774 = vxpose.xlu0.b32.cont [12/16] 0.0, 128
        %2775 = vxpose.xlu0.b32.cont [13/16] 0.0, 128
        %2776 = vxpose.xlu0.b32.cont [14/16] 0.0, 128
        %2777 = vxpose.xlu0.b32.cont [15/16] 0.0, 128
        %2778 = vxpose.xlu0.b32.end [16/16] 0.0, 128
        %v2779 = vpop.trf.xlu0
        %v2780 = vpop.trf.xlu0
        %v2781 = vpop.trf.xlu0
        %v2782 = vpop.trf.xlu0
        %v2783 = vpop.trf.xlu0
        %v2784 = vpop.trf.xlu0
        %v2785 = vpop.trf.xlu0
        %v2786 = vpop.trf.xlu0
        %v2787 = vpop.trf.xlu0
        %v2788 = vpop.trf.xlu0
        %v2789 = vpop.trf.xlu0
        %v2790 = vpop.trf.xlu0
        %v2791 = vpop.trf.xlu0
        %v2792 = vpop.trf.xlu0
        %v2793 = vpop.trf.xlu0
        %v2794 = vpop.trf.xlu0
        %2795 = vxpose.xlu0.b32.start [1/16] %v2375, 128
        %2796 = vxpose.xlu0.b32.cont [2/16] 0.0, 128
        %2797 = vxpose.xlu0.b32.cont [3/16] 0.0, 128
        %2798 = vxpose.xlu0.b32.cont [4/16] 0.0, 128
        %2799 = vxpose.xlu0.b32.cont [5/16] 0.0, 128
        %2800 = vxpose.xlu0.b32.cont [6/16] 0.0, 128
        %2801 = vxpose.xlu0.b32.cont [7/16] 0.0, 128
        %2802 = vxpose.xlu0.b32.cont [8/16] 0.0, 128
        %2803 = vxpose.xlu0.b32.cont [9/16] 0.0, 128
        %2804 = vxpose.xlu0.b32.cont [10/16] 0.0, 128
        %2805 = vxpose.xlu0.b32.cont [11/16] 0.0, 128
        %2806 = vxpose.xlu0.b32.cont [12/16] 0.0, 128
        %2807 = vxpose.xlu0.b32.cont [13/16] 0.0, 128
        %2808 = vxpose.xlu0.b32.cont [14/16] 0.0, 128
        %2809 = vxpose.xlu0.b32.cont [15/16] 0.0, 128
        %2810 = vxpose.xlu0.b32.end [16/16] 0.0, 128
        %v2811 = vpop.trf.xlu0
        %v2812 = vpop.trf.xlu0
        %v2813 = vpop.trf.xlu0
        %v2814 = vpop.trf.xlu0
        %v2815 = vpop.trf.xlu0
        %v2816 = vpop.trf.xlu0
        %v2817 = vpop.trf.xlu0
        %v2818 = vpop.trf.xlu0
        %v2819 = vpop.trf.xlu0
        %v2820 = vpop.trf.xlu0
        %v2821 = vpop.trf.xlu0
        %v2822 = vpop.trf.xlu0
        %v2823 = vpop.trf.xlu0
        %v2824 = vpop.trf.xlu0
        %v2825 = vpop.trf.xlu0
        %v2826 = vpop.trf.xlu0
        %2827 = vxpose.xlu0.b32.start [1/16] %v2399, 128
        %2828 = vxpose.xlu0.b32.cont [2/16] 0.0, 128
        %2829 = vxpose.xlu0.b32.cont [3/16] 0.0, 128
        %2830 = vxpose.xlu0.b32.cont [4/16] 0.0, 128
        %2831 = vxpose.xlu0.b32.cont [5/16] 0.0, 128
        %2832 = vxpose.xlu0.b32.cont [6/16] 0.0, 128
        %2833 = vxpose.xlu0.b32.cont [7/16] 0.0, 128
        %2834 = vxpose.xlu0.b32.cont [8/16] 0.0, 128
        %2835 = vxpose.xlu0.b32.cont [9/16] 0.0, 128
        %2836 = vxpose.xlu0.b32.cont [10/16] 0.0, 128
        %2837 = vxpose.xlu0.b32.cont [11/16] 0.0, 128
        %2838 = vxpose.xlu0.b32.cont [12/16] 0.0, 128
        %2839 = vxpose.xlu0.b32.cont [13/16] 0.0, 128
        %2840 = vxpose.xlu0.b32.cont [14/16] 0.0, 128
        %2841 = vxpose.xlu0.b32.cont [15/16] 0.0, 128
        %2842 = vxpose.xlu0.b32.end [16/16] 0.0, 128
        %v2843 = vpop.trf.xlu0
        %v2844 = vpop.trf.xlu0
        %v2845 = vpop.trf.xlu0
        %v2846 = vpop.trf.xlu0
        %v2847 = vpop.trf.xlu0
        %v2848 = vpop.trf.xlu0
        %v2849 = vpop.trf.xlu0
        %v2850 = vpop.trf.xlu0
        %v2851 = vpop.trf.xlu0
        %v2852 = vpop.trf.xlu0
        %v2853 = vpop.trf.xlu0
        %v2854 = vpop.trf.xlu0
        %v2855 = vpop.trf.xlu0
        %v2856 = vpop.trf.xlu0
        %v2857 = vpop.trf.xlu0
        %v2858 = vpop.trf.xlu0
        %2859 = vxpose.xlu0.b32.start [1/16] %v2382, 128
        %2860 = vxpose.xlu0.b32.cont [2/16] 0.0, 128
        %2861 = vxpose.xlu0.b32.cont [3/16] 0.0, 128
        %2862 = vxpose.xlu0.b32.cont [4/16] 0.0, 128
        %2863 = vxpose.xlu0.b32.cont [5/16] 0.0, 128
        %2864 = vxpose.xlu0.b32.cont [6/16] 0.0, 128
        %2865 = vxpose.xlu0.b32.cont [7/16] 0.0, 128
        %2866 = vxpose.xlu0.b32.cont [8/16] 0.0, 128
        %2867 = vxpose.xlu0.b32.cont [9/16] 0.0, 128
        %2868 = vxpose.xlu0.b32.cont [10/16] 0.0, 128
        %2869 = vxpose.xlu0.b32.cont [11/16] 0.0, 128
        %2870 = vxpose.xlu0.b32.cont [12/16] 0.0, 128
        %2871 = vxpose.xlu0.b32.cont [13/16] 0.0, 128
        %2872 = vxpose.xlu0.b32.cont [14/16] 0.0, 128
        %2873 = vxpose.xlu0.b32.cont [15/16] 0.0, 128
        %2874 = vxpose.xlu0.b32.end [16/16] 0.0, 128
        %v2875 = vpop.trf.xlu0
        %v2876 = vpop.trf.xlu0
        %v2877 = vpop.trf.xlu0
        %v2878 = vpop.trf.xlu0
        %v2879 = vpop.trf.xlu0
        %v2880 = vpop.trf.xlu0
        %v2881 = vpop.trf.xlu0
        %v2882 = vpop.trf.xlu0
        %v2883 = vpop.trf.xlu0
        %v2884 = vpop.trf.xlu0
        %v2885 = vpop.trf.xlu0
        %v2886 = vpop.trf.xlu0
        %v2887 = vpop.trf.xlu0
        %v2888 = vpop.trf.xlu0
        %v2889 = vpop.trf.xlu0
        %v2890 = vpop.trf.xlu0
        %2891 = vxpose.xlu0.b32.start [1/16] %v2400, 128
        %2892 = vxpose.xlu0.b32.cont [2/16] 0.0, 128
        %2893 = vxpose.xlu0.b32.cont [3/16] 0.0, 128
        %2894 = vxpose.xlu0.b32.cont [4/16] 0.0, 128
        %2895 = vxpose.xlu0.b32.cont [5/16] 0.0, 128
        %2896 = vxpose.xlu0.b32.cont [6/16] 0.0, 128
        %2897 = vxpose.xlu0.b32.cont [7/16] 0.0, 128
        %2898 = vxpose.xlu0.b32.cont [8/16] 0.0, 128
        %2899 = vxpose.xlu0.b32.cont [9/16] 0.0, 128
        %2900 = vxpose.xlu0.b32.cont [10/16] 0.0, 128
        %2901 = vxpose.xlu0.b32.cont [11/16] 0.0, 128
        %2902 = vxpose.xlu0.b32.cont [12/16] 0.0, 128
        %2903 = vxpose.xlu0.b32.cont [13/16] 0.0, 128
        %2904 = vxpose.xlu0.b32.cont [14/16] 0.0, 128
        %2905 = vxpose.xlu0.b32.cont [15/16] 0.0, 128
        %2906 = vxpose.xlu0.b32.end [16/16] 0.0, 128
        %v2907 = vpop.trf.xlu0
        %v2908 = vpop.trf.xlu0
        %v2909 = vpop.trf.xlu0
        %v2910 = vpop.trf.xlu0
        %v2911 = vpop.trf.xlu0
        %v2912 = vpop.trf.xlu0
        %v2913 = vpop.trf.xlu0
        %v2914 = vpop.trf.xlu0
        %v2915 = vpop.trf.xlu0
        %v2916 = vpop.trf.xlu0
        %v2917 = vpop.trf.xlu0
        %v2918 = vpop.trf.xlu0
        %v2919 = vpop.trf.xlu0
        %v2920 = vpop.trf.xlu0
        %v2921 = vpop.trf.xlu0
        %v2922 = vpop.trf.xlu0
        %2923 = vxpose.xlu0.b32.start [1/16] %v2391, 128
        %2924 = vxpose.xlu0.b32.cont [2/16] 0.0, 128
        %2925 = vxpose.xlu0.b32.cont [3/16] 0.0, 128
        %2926 = vxpose.xlu0.b32.cont [4/16] 0.0, 128
        %2927 = vxpose.xlu0.b32.cont [5/16] 0.0, 128
        %2928 = vxpose.xlu0.b32.cont [6/16] 0.0, 128
        %2929 = vxpose.xlu0.b32.cont [7/16] 0.0, 128
        %2930 = vxpose.xlu0.b32.cont [8/16] 0.0, 128
        %2931 = vxpose.xlu0.b32.cont [9/16] 0.0, 128
        %2932 = vxpose.xlu0.b32.cont [10/16] 0.0, 128
        %2933 = vxpose.xlu0.b32.cont [11/16] 0.0, 128
        %2934 = vxpose.xlu0.b32.cont [12/16] 0.0, 128
        %2935 = vxpose.xlu0.b32.cont [13/16] 0.0, 128
        %2936 = vxpose.xlu0.b32.cont [14/16] 0.0, 128
        %2937 = vxpose.xlu0.b32.cont [15/16] 0.0, 128
        %2938 = vxpose.xlu0.b32.end [16/16] 0.0, 128
        %v2939 = vpop.trf.xlu0
        %v2940 = vpop.trf.xlu0
        %v2941 = vpop.trf.xlu0
        %v2942 = vpop.trf.xlu0
        %v2943 = vpop.trf.xlu0
        %v2944 = vpop.trf.xlu0
        %v2945 = vpop.trf.xlu0
        %v2946 = vpop.trf.xlu0
        %v2947 = vpop.trf.xlu0
        %v2948 = vpop.trf.xlu0
        %v2949 = vpop.trf.xlu0
        %v2950 = vpop.trf.xlu0
        %v2951 = vpop.trf.xlu0
        %v2952 = vpop.trf.xlu0
        %v2953 = vpop.trf.xlu0
        %v2954 = vpop.trf.xlu0
        %2955 = vxpose.xlu0.b32.start [1/16] %v2401, 128
        %2956 = vxpose.xlu0.b32.cont [2/16] 0.0, 128
        %2957 = vxpose.xlu0.b32.cont [3/16] 0.0, 128
        %2958 = vxpose.xlu0.b32.cont [4/16] 0.0, 128
        %2959 = vxpose.xlu0.b32.cont [5/16] 0.0, 128
        %2960 = vxpose.xlu0.b32.cont [6/16] 0.0, 128
        %2961 = vxpose.xlu0.b32.cont [7/16] 0.0, 128
        %2962 = vxpose.xlu0.b32.cont [8/16] 0.0, 128
        %2963 = vxpose.xlu0.b32.cont [9/16] 0.0, 128
        %2964 = vxpose.xlu0.b32.cont [10/16] 0.0, 128
        %2965 = vxpose.xlu0.b32.cont [11/16] 0.0, 128
        %2966 = vxpose.xlu0.b32.cont [12/16] 0.0, 128
        %2967 = vxpose.xlu0.b32.cont [13/16] 0.0, 128
        %2968 = vxpose.xlu0.b32.cont [14/16] 0.0, 128
        %2969 = vxpose.xlu0.b32.cont [15/16] 0.0, 128
        %2970 = vxpose.xlu0.b32.end [16/16] 0.0, 128
        %v2971 = vpop.trf.xlu0
        %v2972 = vpop.trf.xlu0
        %v2973 = vpop.trf.xlu0
        %v2974 = vpop.trf.xlu0
        %v2975 = vpop.trf.xlu0
        %v2976 = vpop.trf.xlu0
        %v2977 = vpop.trf.xlu0
        %v2978 = vpop.trf.xlu0
        %v2979 = vpop.trf.xlu0
        %v2980 = vpop.trf.xlu0
        %v2981 = vpop.trf.xlu0
        %v2982 = vpop.trf.xlu0
        %v2983 = vpop.trf.xlu0
        %v2984 = vpop.trf.xlu0
        %v2985 = vpop.trf.xlu0
        %v2986 = vpop.trf.xlu0
        %2987 = vxpose.xlu0.b32.start [1/16] %v2398, 128
        %2988 = vxpose.xlu0.b32.cont [2/16] 0.0, 128
        %2989 = vxpose.xlu0.b32.cont [3/16] 0.0, 128
        %2990 = vxpose.xlu0.b32.cont [4/16] 0.0, 128
        %2991 = vxpose.xlu0.b32.cont [5/16] 0.0, 128
        %2992 = vxpose.xlu0.b32.cont [6/16] 0.0, 128
        %2993 = vxpose.xlu0.b32.cont [7/16] 0.0, 128
        %2994 = vxpose.xlu0.b32.cont [8/16] 0.0, 128
        %2995 = vxpose.xlu0.b32.cont [9/16] 0.0, 128
        %2996 = vxpose.xlu0.b32.cont [10/16] 0.0, 128
        %2997 = vxpose.xlu0.b32.cont [11/16] 0.0, 128
        %2998 = vxpose.xlu0.b32.cont [12/16] 0.0, 128
        %2999 = vxpose.xlu0.b32.cont [13/16] 0.0, 128
        %3000 = vxpose.xlu0.b32.cont [14/16] 0.0, 128
        %3001 = vxpose.xlu0.b32.cont [15/16] 0.0, 128
        %3002 = vxpose.xlu0.b32.end [16/16] 0.0, 128
        %v3003 = vpop.trf.xlu0
        %v3004 = vpop.trf.xlu0
        %v3005 = vpop.trf.xlu0
        %v3006 = vpop.trf.xlu0
        %v3007 = vpop.trf.xlu0
        %v3008 = vpop.trf.xlu0
        %v3009 = vpop.trf.xlu0
        %v3010 = vpop.trf.xlu0
        %v3011 = vpop.trf.xlu0
        %v3012 = vpop.trf.xlu0
        %v3013 = vpop.trf.xlu0
        %v3014 = vpop.trf.xlu0
        %v3015 = vpop.trf.xlu0
        %v3016 = vpop.trf.xlu0
        %v3017 = vpop.trf.xlu0
        %v3018 = vpop.trf.xlu0
        %3019 = vxpose.xlu0.b32.start [1/16] %v2402, 128
        %3020 = vxpose.xlu0.b32.cont [2/16] 0.0, 128
        %3021 = vxpose.xlu0.b32.cont [3/16] 0.0, 128
        %3022 = vxpose.xlu0.b32.cont [4/16] 0.0, 128
        %3023 = vxpose.xlu0.b32.cont [5/16] 0.0, 128
        %3024 = vxpose.xlu0.b32.cont [6/16] 0.0, 128
        %3025 = vxpose.xlu0.b32.cont [7/16] 0.0, 128
        %3026 = vxpose.xlu0.b32.cont [8/16] 0.0, 128
        %3027 = vxpose.xlu0.b32.cont [9/16] 0.0, 128
        %3028 = vxpose.xlu0.b32.cont [10/16] 0.0, 128
        %3029 = vxpose.xlu0.b32.cont [11/16] 0.0, 128
        %3030 = vxpose.xlu0.b32.cont [12/16] 0.0, 128
        %3031 = vxpose.xlu0.b32.cont [13/16] 0.0, 128
        %3032 = vxpose.xlu0.b32.cont [14/16] 0.0, 128
        %3033 = vxpose.xlu0.b32.cont [15/16] 0.0, 128
        %3034 = vxpose.xlu0.b32.end [16/16] 0.0, 128
        %v3035 = vpop.trf.xlu0
        %v3036 = vpop.trf.xlu0
        %v3037 = vpop.trf.xlu0
        %v3038 = vpop.trf.xlu0
        %v3039 = vpop.trf.xlu0
        %v3040 = vpop.trf.xlu0
        %v3041 = vpop.trf.xlu0
        %v3042 = vpop.trf.xlu0
        %v3043 = vpop.trf.xlu0
        %v3044 = vpop.trf.xlu0
        %v3045 = vpop.trf.xlu0
        %v3046 = vpop.trf.xlu0
        %v3047 = vpop.trf.xlu0
        %v3048 = vpop.trf.xlu0
        %v3049 = vpop.trf.xlu0
        %v3050 = vpop.trf.xlu0
        %3051 = vxpose.xlu0.b32.start [1/16] %v2443, 128
        %3052 = vxpose.xlu0.b32.cont [2/16] 0.0, 128
        %3053 = vxpose.xlu0.b32.cont [3/16] 0.0, 128
        %3054 = vxpose.xlu0.b32.cont [4/16] 0.0, 128
        %3055 = vxpose.xlu0.b32.cont [5/16] 0.0, 128
        %3056 = vxpose.xlu0.b32.cont [6/16] 0.0, 128
        %3057 = vxpose.xlu0.b32.cont [7/16] 0.0, 128
        %3058 = vxpose.xlu0.b32.cont [8/16] 0.0, 128
        %3059 = vxpose.xlu0.b32.cont [9/16] 0.0, 128
        %3060 = vxpose.xlu0.b32.cont [10/16] 0.0, 128
        %3061 = vxpose.xlu0.b32.cont [11/16] 0.0, 128
        %3062 = vxpose.xlu0.b32.cont [12/16] 0.0, 128
        %3063 = vxpose.xlu0.b32.cont [13/16] 0.0, 128
        %3064 = vxpose.xlu0.b32.cont [14/16] 0.0, 128
        %3065 = vxpose.xlu0.b32.cont [15/16] 0.0, 128
        %3066 = vxpose.xlu0.b32.end [16/16] 0.0, 128
        %v3067 = vpop.trf.xlu0
        %v3068 = vpop.trf.xlu0
        %v3069 = vpop.trf.xlu0
        %v3070 = vpop.trf.xlu0
        %v3071 = vpop.trf.xlu0
        %v3072 = vpop.trf.xlu0
        %v3073 = vpop.trf.xlu0
        %v3074 = vpop.trf.xlu0
        %v3075 = vpop.trf.xlu0
        %v3076 = vpop.trf.xlu0
        %v3077 = vpop.trf.xlu0
        %v3078 = vpop.trf.xlu0
        %v3079 = vpop.trf.xlu0
        %v3080 = vpop.trf.xlu0
        %v3081 = vpop.trf.xlu0
        %v3082 = vpop.trf.xlu0
        %3083 = vxpose.xlu0.b32.start [1/16] %v2467, 128
        %3084 = vxpose.xlu0.b32.cont [2/16] 0.0, 128
        %3085 = vxpose.xlu0.b32.cont [3/16] 0.0, 128
        %3086 = vxpose.xlu0.b32.cont [4/16] 0.0, 128
        %3087 = vxpose.xlu0.b32.cont [5/16] 0.0, 128
        %3088 = vxpose.xlu0.b32.cont [6/16] 0.0, 128
        %3089 = vxpose.xlu0.b32.cont [7/16] 0.0, 128
        %3090 = vxpose.xlu0.b32.cont [8/16] 0.0, 128
        %3091 = vxpose.xlu0.b32.cont [9/16] 0.0, 128
        %3092 = vxpose.xlu0.b32.cont [10/16] 0.0, 128
        %3093 = vxpose.xlu0.b32.cont [11/16] 0.0, 128
        %3094 = vxpose.xlu0.b32.cont [12/16] 0.0, 128
        %3095 = vxpose.xlu0.b32.cont [13/16] 0.0, 128
        %3096 = vxpose.xlu0.b32.cont [14/16] 0.0, 128
        %3097 = vxpose.xlu0.b32.cont [15/16] 0.0, 128
        %3098 = vxpose.xlu0.b32.end [16/16] 0.0, 128
        %v3099 = vpop.trf.xlu0
        %v3100 = vpop.trf.xlu0
        %v3101 = vpop.trf.xlu0
        %v3102 = vpop.trf.xlu0
        %v3103 = vpop.trf.xlu0
        %v3104 = vpop.trf.xlu0
        %v3105 = vpop.trf.xlu0
        %v3106 = vpop.trf.xlu0
        %v3107 = vpop.trf.xlu0
        %v3108 = vpop.trf.xlu0
        %v3109 = vpop.trf.xlu0
        %v3110 = vpop.trf.xlu0
        %v3111 = vpop.trf.xlu0
        %v3112 = vpop.trf.xlu0
        %v3113 = vpop.trf.xlu0
        %v3114 = vpop.trf.xlu0
        %3115 = vxpose.xlu0.b32.start [1/16] %v2450, 128
        %3116 = vxpose.xlu0.b32.cont [2/16] 0.0, 128
        %3117 = vxpose.xlu0.b32.cont [3/16] 0.0, 128
        %3118 = vxpose.xlu0.b32.cont [4/16] 0.0, 128
        %3119 = vxpose.xlu0.b32.cont [5/16] 0.0, 128
        %3120 = vxpose.xlu0.b32.cont [6/16] 0.0, 128
        %3121 = vxpose.xlu0.b32.cont [7/16] 0.0, 128
        %3122 = vxpose.xlu0.b32.cont [8/16] 0.0, 128
        %3123 = vxpose.xlu0.b32.cont [9/16] 0.0, 128
        %3124 = vxpose.xlu0.b32.cont [10/16] 0.0, 128
        %3125 = vxpose.xlu0.b32.cont [11/16] 0.0, 128
        %3126 = vxpose.xlu0.b32.cont [12/16] 0.0, 128
        %3127 = vxpose.xlu0.b32.cont [13/16] 0.0, 128
        %3128 = vxpose.xlu0.b32.cont [14/16] 0.0, 128
        %3129 = vxpose.xlu0.b32.cont [15/16] 0.0, 128
        %3130 = vxpose.xlu0.b32.end [16/16] 0.0, 128
        %v3131 = vpop.trf.xlu0
        %v3132 = vpop.trf.xlu0
        %v3133 = vpop.trf.xlu0
        %v3134 = vpop.trf.xlu0
        %v3135 = vpop.trf.xlu0
        %v3136 = vpop.trf.xlu0
        %v3137 = vpop.trf.xlu0
        %v3138 = vpop.trf.xlu0
        %v3139 = vpop.trf.xlu0
        %v3140 = vpop.trf.xlu0
        %v3141 = vpop.trf.xlu0
        %v3142 = vpop.trf.xlu0
        %v3143 = vpop.trf.xlu0
        %v3144 = vpop.trf.xlu0
        %v3145 = vpop.trf.xlu0
        %v3146 = vpop.trf.xlu0
        %3147 = vxpose.xlu0.b32.start [1/16] %v2468, 128
        %3148 = vxpose.xlu0.b32.cont [2/16] 0.0, 128
        %3149 = vxpose.xlu0.b32.cont [3/16] 0.0, 128
        %3150 = vxpose.xlu0.b32.cont [4/16] 0.0, 128
        %3151 = vxpose.xlu0.b32.cont [5/16] 0.0, 128
        %3152 = vxpose.xlu0.b32.cont [6/16] 0.0, 128
        %3153 = vxpose.xlu0.b32.cont [7/16] 0.0, 128
        %3154 = vxpose.xlu0.b32.cont [8/16] 0.0, 128
        %3155 = vxpose.xlu0.b32.cont [9/16] 0.0, 128
        %3156 = vxpose.xlu0.b32.cont [10/16] 0.0, 128
        %3157 = vxpose.xlu0.b32.cont [11/16] 0.0, 128
        %3158 = vxpose.xlu0.b32.cont [12/16] 0.0, 128
        %3159 = vxpose.xlu0.b32.cont [13/16] 0.0, 128
        %3160 = vxpose.xlu0.b32.cont [14/16] 0.0, 128
        %3161 = vxpose.xlu0.b32.cont [15/16] 0.0, 128
        %3162 = vxpose.xlu0.b32.end [16/16] 0.0, 128
        %v3163 = vpop.trf.xlu0
        %v3164 = vpop.trf.xlu0
        %v3165 = vpop.trf.xlu0
        %v3166 = vpop.trf.xlu0
        %v3167 = vpop.trf.xlu0
        %v3168 = vpop.trf.xlu0
        %v3169 = vpop.trf.xlu0
        %v3170 = vpop.trf.xlu0
        %v3171 = vpop.trf.xlu0
        %v3172 = vpop.trf.xlu0
        %v3173 = vpop.trf.xlu0
        %v3174 = vpop.trf.xlu0
        %v3175 = vpop.trf.xlu0
        %v3176 = vpop.trf.xlu0
        %v3177 = vpop.trf.xlu0
        %v3178 = vpop.trf.xlu0
        %3179 = vxpose.xlu0.b32.start [1/16] %v2459, 128
        %3180 = vxpose.xlu0.b32.cont [2/16] 0.0, 128
        %3181 = vxpose.xlu0.b32.cont [3/16] 0.0, 128
        %3182 = vxpose.xlu0.b32.cont [4/16] 0.0, 128
        %3183 = vxpose.xlu0.b32.cont [5/16] 0.0, 128
        %3184 = vxpose.xlu0.b32.cont [6/16] 0.0, 128
        %3185 = vxpose.xlu0.b32.cont [7/16] 0.0, 128
        %3186 = vxpose.xlu0.b32.cont [8/16] 0.0, 128
        %3187 = vxpose.xlu0.b32.cont [9/16] 0.0, 128
        %3188 = vxpose.xlu0.b32.cont [10/16] 0.0, 128
        %3189 = vxpose.xlu0.b32.cont [11/16] 0.0, 128
        %3190 = vxpose.xlu0.b32.cont [12/16] 0.0, 128
        %3191 = vxpose.xlu0.b32.cont [13/16] 0.0, 128
        %3192 = vxpose.xlu0.b32.cont [14/16] 0.0, 128
        %3193 = vxpose.xlu0.b32.cont [15/16] 0.0, 128
        %3194 = vxpose.xlu0.b32.end [16/16] 0.0, 128
        %v3195 = vpop.trf.xlu0
        %v3196 = vpop.trf.xlu0
        %v3197 = vpop.trf.xlu0
        %v3198 = vpop.trf.xlu0
        %v3199 = vpop.trf.xlu0
        %v3200 = vpop.trf.xlu0
        %v3201 = vpop.trf.xlu0
        %v3202 = vpop.trf.xlu0
        %v3203 = vpop.trf.xlu0
        %v3204 = vpop.trf.xlu0
        %v3205 = vpop.trf.xlu0
        %v3206 = vpop.trf.xlu0
        %v3207 = vpop.trf.xlu0
        %v3208 = vpop.trf.xlu0
        %v3209 = vpop.trf.xlu0
        %v3210 = vpop.trf.xlu0
        %3211 = vxpose.xlu0.b32.start [1/16] %v2469, 128
        %3212 = vxpose.xlu0.b32.cont [2/16] 0.0, 128
        %3213 = vxpose.xlu0.b32.cont [3/16] 0.0, 128
        %3214 = vxpose.xlu0.b32.cont [4/16] 0.0, 128
        %3215 = vxpose.xlu0.b32.cont [5/16] 0.0, 128
        %3216 = vxpose.xlu0.b32.cont [6/16] 0.0, 128
        %3217 = vxpose.xlu0.b32.cont [7/16] 0.0, 128
        %3218 = vxpose.xlu0.b32.cont [8/16] 0.0, 128
        %3219 = vxpose.xlu0.b32.cont [9/16] 0.0, 128
        %3220 = vxpose.xlu0.b32.cont [10/16] 0.0, 128
        %3221 = vxpose.xlu0.b32.cont [11/16] 0.0, 128
        %3222 = vxpose.xlu0.b32.cont [12/16] 0.0, 128
        %3223 = vxpose.xlu0.b32.cont [13/16] 0.0, 128
        %3224 = vxpose.xlu0.b32.cont [14/16] 0.0, 128
        %3225 = vxpose.xlu0.b32.cont [15/16] 0.0, 128
        %3226 = vxpose.xlu0.b32.end [16/16] 0.0, 128
        %v3227 = vpop.trf.xlu0
        %v3228 = vpop.trf.xlu0
        %v3229 = vpop.trf.xlu0
        %v3230 = vpop.trf.xlu0
        %v3231 = vpop.trf.xlu0
        %v3232 = vpop.trf.xlu0
        %v3233 = vpop.trf.xlu0
        %v3234 = vpop.trf.xlu0
        %v3235 = vpop.trf.xlu0
        %v3236 = vpop.trf.xlu0
        %v3237 = vpop.trf.xlu0
        %v3238 = vpop.trf.xlu0
        %v3239 = vpop.trf.xlu0
        %v3240 = vpop.trf.xlu0
        %v3241 = vpop.trf.xlu0
        %v3242 = vpop.trf.xlu0
        %3243 = vxpose.xlu0.b32.start [1/16] %v2466, 128
        %3244 = vxpose.xlu0.b32.cont [2/16] 0.0, 128
        %3245 = vxpose.xlu0.b32.cont [3/16] 0.0, 128
        %3246 = vxpose.xlu0.b32.cont [4/16] 0.0, 128
        %3247 = vxpose.xlu0.b32.cont [5/16] 0.0, 128
        %3248 = vxpose.xlu0.b32.cont [6/16] 0.0, 128
        %3249 = vxpose.xlu0.b32.cont [7/16] 0.0, 128
        %3250 = vxpose.xlu0.b32.cont [8/16] 0.0, 128
        %3251 = vxpose.xlu0.b32.cont [9/16] 0.0, 128
        %3252 = vxpose.xlu0.b32.cont [10/16] 0.0, 128
        %3253 = vxpose.xlu0.b32.cont [11/16] 0.0, 128
        %3254 = vxpose.xlu0.b32.cont [12/16] 0.0, 128
        %3255 = vxpose.xlu0.b32.cont [13/16] 0.0, 128
        %3256 = vxpose.xlu0.b32.cont [14/16] 0.0, 128
        %3257 = vxpose.xlu0.b32.cont [15/16] 0.0, 128
        %3258 = vxpose.xlu0.b32.end [16/16] 0.0, 128
        %v3259 = vpop.trf.xlu0
        %v3260 = vpop.trf.xlu0
        %v3261 = vpop.trf.xlu0
        %v3262 = vpop.trf.xlu0
        %v3263 = vpop.trf.xlu0
        %v3264 = vpop.trf.xlu0
        %v3265 = vpop.trf.xlu0
        %v3266 = vpop.trf.xlu0
        %v3267 = vpop.trf.xlu0
        %v3268 = vpop.trf.xlu0
        %v3269 = vpop.trf.xlu0
        %v3270 = vpop.trf.xlu0
        %v3271 = vpop.trf.xlu0
        %v3272 = vpop.trf.xlu0
        %v3273 = vpop.trf.xlu0
        %v3274 = vpop.trf.xlu0
        %3275 = vxpose.xlu0.b32.start [1/16] %v2470, 128
        %3276 = vxpose.xlu0.b32.cont [2/16] 0.0, 128
        %3277 = vxpose.xlu0.b32.cont [3/16] 0.0, 128
        %3278 = vxpose.xlu0.b32.cont [4/16] 0.0, 128
        %3279 = vxpose.xlu0.b32.cont [5/16] 0.0, 128
        %3280 = vxpose.xlu0.b32.cont [6/16] 0.0, 128
        %3281 = vxpose.xlu0.b32.cont [7/16] 0.0, 128
        %3282 = vxpose.xlu0.b32.cont [8/16] 0.0, 128
        %3283 = vxpose.xlu0.b32.cont [9/16] 0.0, 128
        %3284 = vxpose.xlu0.b32.cont [10/16] 0.0, 128
        %3285 = vxpose.xlu0.b32.cont [11/16] 0.0, 128
        %3286 = vxpose.xlu0.b32.cont [12/16] 0.0, 128
        %3287 = vxpose.xlu0.b32.cont [13/16] 0.0, 128
        %3288 = vxpose.xlu0.b32.cont [14/16] 0.0, 128
        %3289 = vxpose.xlu0.b32.cont [15/16] 0.0, 128
        %3290 = vxpose.xlu0.b32.end [16/16] 0.0, 128
        %v3291 = vpop.trf.xlu0
        %v3292 = vpop.trf.xlu0
        %v3293 = vpop.trf.xlu0
        %v3294 = vpop.trf.xlu0
        %v3295 = vpop.trf.xlu0
        %v3296 = vpop.trf.xlu0
        %v3297 = vpop.trf.xlu0
        %v3298 = vpop.trf.xlu0
        %v3299 = vpop.trf.xlu0
        %v3300 = vpop.trf.xlu0
        %v3301 = vpop.trf.xlu0
        %v3302 = vpop.trf.xlu0
        %v3303 = vpop.trf.xlu0
        %v3304 = vpop.trf.xlu0
        %v3305 = vpop.trf.xlu0
        %v3306 = vpop.trf.xlu0
        %3307 = vxpose.xlu0.b32.start [1/16] %v2511, 128
        %3308 = vxpose.xlu0.b32.cont [2/16] 0.0, 128
        %3309 = vxpose.xlu0.b32.cont [3/16] 0.0, 128
        %3310 = vxpose.xlu0.b32.cont [4/16] 0.0, 128
        %3311 = vxpose.xlu0.b32.cont [5/16] 0.0, 128
        %3312 = vxpose.xlu0.b32.cont [6/16] 0.0, 128
        %3313 = vxpose.xlu0.b32.cont [7/16] 0.0, 128
        %3314 = vxpose.xlu0.b32.cont [8/16] 0.0, 128
        %3315 = vxpose.xlu0.b32.cont [9/16] 0.0, 128
        %3316 = vxpose.xlu0.b32.cont [10/16] 0.0, 128
        %3317 = vxpose.xlu0.b32.cont [11/16] 0.0, 128
        %3318 = vxpose.xlu0.b32.cont [12/16] 0.0, 128
        %3319 = vxpose.xlu0.b32.cont [13/16] 0.0, 128
        %3320 = vxpose.xlu0.b32.cont [14/16] 0.0, 128
        %3321 = vxpose.xlu0.b32.cont [15/16] 0.0, 128
        %3322 = vxpose.xlu0.b32.end [16/16] 0.0, 128
        %v3323 = vpop.trf.xlu0
        %v3324 = vpop.trf.xlu0
        %v3325 = vpop.trf.xlu0
        %v3326 = vpop.trf.xlu0
        %v3327 = vpop.trf.xlu0
        %v3328 = vpop.trf.xlu0
        %v3329 = vpop.trf.xlu0
        %v3330 = vpop.trf.xlu0
        %v3331 = vpop.trf.xlu0
        %v3332 = vpop.trf.xlu0
        %v3333 = vpop.trf.xlu0
        %v3334 = vpop.trf.xlu0
        %v3335 = vpop.trf.xlu0
        %v3336 = vpop.trf.xlu0
        %v3337 = vpop.trf.xlu0
        %v3338 = vpop.trf.xlu0
        %3339 = vxpose.xlu0.b32.start [1/16] %v2535, 128
        %3340 = vxpose.xlu0.b32.cont [2/16] 0.0, 128
        %3341 = vxpose.xlu0.b32.cont [3/16] 0.0, 128
        %3342 = vxpose.xlu0.b32.cont [4/16] 0.0, 128
        %3343 = vxpose.xlu0.b32.cont [5/16] 0.0, 128
        %3344 = vxpose.xlu0.b32.cont [6/16] 0.0, 128
        %3345 = vxpose.xlu0.b32.cont [7/16] 0.0, 128
        %3346 = vxpose.xlu0.b32.cont [8/16] 0.0, 128
        %3347 = vxpose.xlu0.b32.cont [9/16] 0.0, 128
        %3348 = vxpose.xlu0.b32.cont [10/16] 0.0, 128
        %3349 = vxpose.xlu0.b32.cont [11/16] 0.0, 128
        %3350 = vxpose.xlu0.b32.cont [12/16] 0.0, 128
        %3351 = vxpose.xlu0.b32.cont [13/16] 0.0, 128
        %3352 = vxpose.xlu0.b32.cont [14/16] 0.0, 128
        %3353 = vxpose.xlu0.b32.cont [15/16] 0.0, 128
        %3354 = vxpose.xlu0.b32.end [16/16] 0.0, 128
        %v3355 = vpop.trf.xlu0
        %v3356 = vpop.trf.xlu0
        %v3357 = vpop.trf.xlu0
        %v3358 = vpop.trf.xlu0
        %v3359 = vpop.trf.xlu0
        %v3360 = vpop.trf.xlu0
        %v3361 = vpop.trf.xlu0
        %v3362 = vpop.trf.xlu0
        %v3363 = vpop.trf.xlu0
        %v3364 = vpop.trf.xlu0
        %v3365 = vpop.trf.xlu0
        %v3366 = vpop.trf.xlu0
        %v3367 = vpop.trf.xlu0
        %v3368 = vpop.trf.xlu0
        %v3369 = vpop.trf.xlu0
        %v3370 = vpop.trf.xlu0
        %3371 = vxpose.xlu0.b32.start [1/16] %v2518, 128
        %3372 = vxpose.xlu0.b32.cont [2/16] 0.0, 128
        %3373 = vxpose.xlu0.b32.cont [3/16] 0.0, 128
        %3374 = vxpose.xlu0.b32.cont [4/16] 0.0, 128
        %3375 = vxpose.xlu0.b32.cont [5/16] 0.0, 128
        %3376 = vxpose.xlu0.b32.cont [6/16] 0.0, 128
        %3377 = vxpose.xlu0.b32.cont [7/16] 0.0, 128
        %3378 = vxpose.xlu0.b32.cont [8/16] 0.0, 128
        %3379 = vxpose.xlu0.b32.cont [9/16] 0.0, 128
        %3380 = vxpose.xlu0.b32.cont [10/16] 0.0, 128
        %3381 = vxpose.xlu0.b32.cont [11/16] 0.0, 128
        %3382 = vxpose.xlu0.b32.cont [12/16] 0.0, 128
        %3383 = vxpose.xlu0.b32.cont [13/16] 0.0, 128
        %3384 = vxpose.xlu0.b32.cont [14/16] 0.0, 128
        %3385 = vxpose.xlu0.b32.cont [15/16] 0.0, 128
        %3386 = vxpose.xlu0.b32.end [16/16] 0.0, 128
        %v3387 = vpop.trf.xlu0
        %v3388 = vpop.trf.xlu0
        %v3389 = vpop.trf.xlu0
        %v3390 = vpop.trf.xlu0
        %v3391 = vpop.trf.xlu0
        %v3392 = vpop.trf.xlu0
        %v3393 = vpop.trf.xlu0
        %v3394 = vpop.trf.xlu0
        %v3395 = vpop.trf.xlu0
        %v3396 = vpop.trf.xlu0
        %v3397 = vpop.trf.xlu0
        %v3398 = vpop.trf.xlu0
        %v3399 = vpop.trf.xlu0
        %v3400 = vpop.trf.xlu0
        %v3401 = vpop.trf.xlu0
        %v3402 = vpop.trf.xlu0
        %3403 = vxpose.xlu0.b32.start [1/16] %v2536, 128
        %3404 = vxpose.xlu0.b32.cont [2/16] 0.0, 128
        %3405 = vxpose.xlu0.b32.cont [3/16] 0.0, 128
        %3406 = vxpose.xlu0.b32.cont [4/16] 0.0, 128
        %3407 = vxpose.xlu0.b32.cont [5/16] 0.0, 128
        %3408 = vxpose.xlu0.b32.cont [6/16] 0.0, 128
        %3409 = vxpose.xlu0.b32.cont [7/16] 0.0, 128
        %3410 = vxpose.xlu0.b32.cont [8/16] 0.0, 128
        %3411 = vxpose.xlu0.b32.cont [9/16] 0.0, 128
        %3412 = vxpose.xlu0.b32.cont [10/16] 0.0, 128
        %3413 = vxpose.xlu0.b32.cont [11/16] 0.0, 128
        %3414 = vxpose.xlu0.b32.cont [12/16] 0.0, 128
        %3415 = vxpose.xlu0.b32.cont [13/16] 0.0, 128
        %3416 = vxpose.xlu0.b32.cont [14/16] 0.0, 128
        %3417 = vxpose.xlu0.b32.cont [15/16] 0.0, 128
        %3418 = vxpose.xlu0.b32.end [16/16] 0.0, 128
        %v3419 = vpop.trf.xlu0
        %v3420 = vpop.trf.xlu0
        %v3421 = vpop.trf.xlu0
        %v3422 = vpop.trf.xlu0
        %v3423 = vpop.trf.xlu0
        %v3424 = vpop.trf.xlu0
        %v3425 = vpop.trf.xlu0
        %v3426 = vpop.trf.xlu0
        %v3427 = vpop.trf.xlu0
        %v3428 = vpop.trf.xlu0
        %v3429 = vpop.trf.xlu0
        %v3430 = vpop.trf.xlu0
        %v3431 = vpop.trf.xlu0
        %v3432 = vpop.trf.xlu0
        %v3433 = vpop.trf.xlu0
        %v3434 = vpop.trf.xlu0
        %3435 = vxpose.xlu0.b32.start [1/16] %v2527, 128
        %3436 = vxpose.xlu0.b32.cont [2/16] 0.0, 128
        %3437 = vxpose.xlu0.b32.cont [3/16] 0.0, 128
        %3438 = vxpose.xlu0.b32.cont [4/16] 0.0, 128
        %3439 = vxpose.xlu0.b32.cont [5/16] 0.0, 128
        %3440 = vxpose.xlu0.b32.cont [6/16] 0.0, 128
        %3441 = vxpose.xlu0.b32.cont [7/16] 0.0, 128
        %3442 = vxpose.xlu0.b32.cont [8/16] 0.0, 128
        %3443 = vxpose.xlu0.b32.cont [9/16] 0.0, 128
        %3444 = vxpose.xlu0.b32.cont [10/16] 0.0, 128
        %3445 = vxpose.xlu0.b32.cont [11/16] 0.0, 128
        %3446 = vxpose.xlu0.b32.cont [12/16] 0.0, 128
        %3447 = vxpose.xlu0.b32.cont [13/16] 0.0, 128
        %3448 = vxpose.xlu0.b32.cont [14/16] 0.0, 128
        %3449 = vxpose.xlu0.b32.cont [15/16] 0.0, 128
        %3450 = vxpose.xlu0.b32.end [16/16] 0.0, 128
        %v3451 = vpop.trf.xlu0
        %v3452 = vpop.trf.xlu0
        %v3453 = vpop.trf.xlu0
        %v3454 = vpop.trf.xlu0
        %v3455 = vpop.trf.xlu0
        %v3456 = vpop.trf.xlu0
        %v3457 = vpop.trf.xlu0
        %v3458 = vpop.trf.xlu0
        %v3459 = vpop.trf.xlu0
        %v3460 = vpop.trf.xlu0
        %v3461 = vpop.trf.xlu0
        %v3462 = vpop.trf.xlu0
        %v3463 = vpop.trf.xlu0
        %v3464 = vpop.trf.xlu0
        %v3465 = vpop.trf.xlu0
        %v3466 = vpop.trf.xlu0
        %3467 = vxpose.xlu0.b32.start [1/16] %v2537, 128
        %3468 = vxpose.xlu0.b32.cont [2/16] 0.0, 128
        %3469 = vxpose.xlu0.b32.cont [3/16] 0.0, 128
        %3470 = vxpose.xlu0.b32.cont [4/16] 0.0, 128
        %3471 = vxpose.xlu0.b32.cont [5/16] 0.0, 128
        %3472 = vxpose.xlu0.b32.cont [6/16] 0.0, 128
        %3473 = vxpose.xlu0.b32.cont [7/16] 0.0, 128
        %3474 = vxpose.xlu0.b32.cont [8/16] 0.0, 128
        %3475 = vxpose.xlu0.b32.cont [9/16] 0.0, 128
        %3476 = vxpose.xlu0.b32.cont [10/16] 0.0, 128
        %3477 = vxpose.xlu0.b32.cont [11/16] 0.0, 128
        %3478 = vxpose.xlu0.b32.cont [12/16] 0.0, 128
        %3479 = vxpose.xlu0.b32.cont [13/16] 0.0, 128
        %3480 = vxpose.xlu0.b32.cont [14/16] 0.0, 128
        %3481 = vxpose.xlu0.b32.cont [15/16] 0.0, 128
        %3482 = vxpose.xlu0.b32.end [16/16] 0.0, 128
        %v3483 = vpop.trf.xlu0
        %v3484 = vpop.trf.xlu0
        %v3485 = vpop.trf.xlu0
        %v3486 = vpop.trf.xlu0
        %v3487 = vpop.trf.xlu0
        %v3488 = vpop.trf.xlu0
        %v3489 = vpop.trf.xlu0
        %v3490 = vpop.trf.xlu0
        %v3491 = vpop.trf.xlu0
        %v3492 = vpop.trf.xlu0
        %v3493 = vpop.trf.xlu0
        %v3494 = vpop.trf.xlu0
        %v3495 = vpop.trf.xlu0
        %v3496 = vpop.trf.xlu0
        %v3497 = vpop.trf.xlu0
        %v3498 = vpop.trf.xlu0
        %3499 = vxpose.xlu0.b32.start [1/16] %v2534, 128
        %3500 = vxpose.xlu0.b32.cont [2/16] 0.0, 128
        %3501 = vxpose.xlu0.b32.cont [3/16] 0.0, 128
        %3502 = vxpose.xlu0.b32.cont [4/16] 0.0, 128
        %3503 = vxpose.xlu0.b32.cont [5/16] 0.0, 128
        %3504 = vxpose.xlu0.b32.cont [6/16] 0.0, 128
        %3505 = vxpose.xlu0.b32.cont [7/16] 0.0, 128
        %3506 = vxpose.xlu0.b32.cont [8/16] 0.0, 128
        %3507 = vxpose.xlu0.b32.cont [9/16] 0.0, 128
        %3508 = vxpose.xlu0.b32.cont [10/16] 0.0, 128
        %3509 = vxpose.xlu0.b32.cont [11/16] 0.0, 128
        %3510 = vxpose.xlu0.b32.cont [12/16] 0.0, 128
        %3511 = vxpose.xlu0.b32.cont [13/16] 0.0, 128
        %3512 = vxpose.xlu0.b32.cont [14/16] 0.0, 128
        %3513 = vxpose.xlu0.b32.cont [15/16] 0.0, 128
        %3514 = vxpose.xlu0.b32.end [16/16] 0.0, 128
        %v3515 = vpop.trf.xlu0
        %v3516 = vpop.trf.xlu0
        %v3517 = vpop.trf.xlu0
        %v3518 = vpop.trf.xlu0
        %v3519 = vpop.trf.xlu0
        %v3520 = vpop.trf.xlu0
        %v3521 = vpop.trf.xlu0
        %v3522 = vpop.trf.xlu0
        %v3523 = vpop.trf.xlu0
        %v3524 = vpop.trf.xlu0
        %v3525 = vpop.trf.xlu0
        %v3526 = vpop.trf.xlu0
        %v3527 = vpop.trf.xlu0
        %v3528 = vpop.trf.xlu0
        %v3529 = vpop.trf.xlu0
        %v3530 = vpop.trf.xlu0
        %3531 = vxpose.xlu0.b32.start [1/16] %v2538, 128
        %3532 = vxpose.xlu0.b32.cont [2/16] 0.0, 128
        %3533 = vxpose.xlu0.b32.cont [3/16] 0.0, 128
        %3534 = vxpose.xlu0.b32.cont [4/16] 0.0, 128
        %3535 = vxpose.xlu0.b32.cont [5/16] 0.0, 128
        %3536 = vxpose.xlu0.b32.cont [6/16] 0.0, 128
        %3537 = vxpose.xlu0.b32.cont [7/16] 0.0, 128
        %3538 = vxpose.xlu0.b32.cont [8/16] 0.0, 128
        %3539 = vxpose.xlu0.b32.cont [9/16] 0.0, 128
        %3540 = vxpose.xlu0.b32.cont [10/16] 0.0, 128
        %3541 = vxpose.xlu0.b32.cont [11/16] 0.0, 128
        %3542 = vxpose.xlu0.b32.cont [12/16] 0.0, 128
        %3543 = vxpose.xlu0.b32.cont [13/16] 0.0, 128
        %3544 = vxpose.xlu0.b32.cont [14/16] 0.0, 128
        %3545 = vxpose.xlu0.b32.cont [15/16] 0.0, 128
        %3546 = vxpose.xlu0.b32.end [16/16] 0.0, 128
        %v3547 = vpop.trf.xlu0
        %v3548 = vpop.trf.xlu0
        %v3549 = vpop.trf.xlu0
        %v3550 = vpop.trf.xlu0
        %v3551 = vpop.trf.xlu0
        %v3552 = vpop.trf.xlu0
        %v3553 = vpop.trf.xlu0
        %v3554 = vpop.trf.xlu0
        %v3555 = vpop.trf.xlu0
        %v3556 = vpop.trf.xlu0
        %v3557 = vpop.trf.xlu0
        %v3558 = vpop.trf.xlu0
        %v3559 = vpop.trf.xlu0
        %v3560 = vpop.trf.xlu0
        %v3561 = vpop.trf.xlu0
        %v3562 = vpop.trf.xlu0
        %v3563 = vcombine.low %v2555, %v2619
        %v3565 = vunpack.c.l.s4 1983009808
        %v3566 = vunpack.c.0.s8 %v3565
        %v3567 = vlaneseq
        %v3568 = vshrl.u32 %v3567, 7
        %v3569 = vsub.s32 %v3566, %v3568
        %v3570 = vrot.slane %v3563, %v3569
        %v3571 = vcombine.low %v2587, %v2651
        %v3573 = vunpack.c.l.s4 1983009808
        %v3574 = vunpack.c.0.s8 %v3573
        %v3575 = vlaneseq
        %v3576 = vshrl.u32 %v3575, 7
        %v3577 = vsub.s32 %v3574, %v3576
        %v3578 = vrot.slane %v3571, %v3577
        %v3579 = vcombine.low %v2683, %v2747
        %v3581 = vunpack.c.l.s4 1983009808
        %v3582 = vunpack.c.0.s8 %v3581
        %v3583 = vlaneseq
        %v3584 = vshrl.u32 %v3583, 7
        %v3585 = vsub.s32 %v3582, %v3584
        %v3586 = vrot.slane %v3579, %v3585
        %v3587 = vcombine.low %v2715, %v2779
        %v3589 = vunpack.c.l.s4 1983009808
        %v3590 = vunpack.c.0.s8 %v3589
        %v3591 = vlaneseq
        %v3592 = vshrl.u32 %v3591, 7
        %v3593 = vsub.s32 %v3590, %v3592
        %v3594 = vrot.slane %v3587, %v3593
        %v3595 = vcombine.low %v3570, %v3578
        %v3597 = vunpack.c.l.s4 1934713408
        %v3598 = vunpack.c.0.s8 %v3597
        %v3599 = vlaneseq
        %v3600 = vshrl.u32 %v3599, 7
        %v3601 = vsub.s32 %v3598, %v3600
        %v3602 = vrot.slane %v3595, %v3601
        %v3603 = vcombine.low %v3586, %v3594
        %v3605 = vunpack.c.l.s4 1934713408
        %v3606 = vunpack.c.0.s8 %v3605
        %v3607 = vlaneseq
        %v3608 = vshrl.u32 %v3607, 7
        %v3609 = vsub.s32 %v3606, %v3608
        %v3610 = vrot.slane %v3603, %v3609
        %v3611 = vcombine.low %v3602, %v3610
        %v3612 = vcombine.high %v3602, %v3610
        %v3613 = vcombine.low %v2811, %v2875
        %v3615 = vunpack.c.l.s4 1983009808
        %v3616 = vunpack.c.0.s8 %v3615
        %v3617 = vlaneseq
        %v3618 = vshrl.u32 %v3617, 7
        %v3619 = vsub.s32 %v3616, %v3618
        %v3620 = vrot.slane %v3613, %v3619
        %v3621 = vcombine.low %v2843, %v2907
        %v3623 = vunpack.c.l.s4 1983009808
        %v3624 = vunpack.c.0.s8 %v3623
        %v3625 = vlaneseq
        %v3626 = vshrl.u32 %v3625, 7
        %v3627 = vsub.s32 %v3624, %v3626
        %v3628 = vrot.slane %v3621, %v3627
        %v3629 = vcombine.low %v2939, %v3003
        %v3631 = vunpack.c.l.s4 1983009808
        %v3632 = vunpack.c.0.s8 %v3631
        %v3633 = vlaneseq
        %v3634 = vshrl.u32 %v3633, 7
        %v3635 = vsub.s32 %v3632, %v3634
        %v3636 = vrot.slane %v3629, %v3635
        %v3637 = vcombine.low %v2971, %v3035
        %v3639 = vunpack.c.l.s4 1983009808
        %v3640 = vunpack.c.0.s8 %v3639
        %v3641 = vlaneseq
        %v3642 = vshrl.u32 %v3641, 7
        %v3643 = vsub.s32 %v3640, %v3642
        %v3644 = vrot.slane %v3637, %v3643
        %v3645 = vcombine.low %v3620, %v3628
        %v3647 = vunpack.c.l.s4 1934713408
        %v3648 = vunpack.c.0.s8 %v3647
        %v3649 = vlaneseq
        %v3650 = vshrl.u32 %v3649, 7
        %v3651 = vsub.s32 %v3648, %v3650
        %v3652 = vrot.slane %v3645, %v3651
        %v3653 = vcombine.low %v3636, %v3644
        %v3655 = vunpack.c.l.s4 1934713408
        %v3656 = vunpack.c.0.s8 %v3655
        %v3657 = vlaneseq
        %v3658 = vshrl.u32 %v3657, 7
        %v3659 = vsub.s32 %v3656, %v3658
        %v3660 = vrot.slane %v3653, %v3659
        %v3661 = vcombine.low %v3652, %v3660
        %v3662 = vcombine.high %v3652, %v3660
        %v3663 = vcombine.low %v3067, %v3131
        %v3665 = vunpack.c.l.s4 1983009808
        %v3666 = vunpack.c.0.s8 %v3665
        %v3667 = vlaneseq
        %v3668 = vshrl.u32 %v3667, 7
        %v3669 = vsub.s32 %v3666, %v3668
        %v3670 = vrot.slane %v3663, %v3669
        %v3671 = vcombine.low %v3099, %v3163
        %v3673 = vunpack.c.l.s4 1983009808
        %v3674 = vunpack.c.0.s8 %v3673
        %v3675 = vlaneseq
        %v3676 = vshrl.u32 %v3675, 7
        %v3677 = vsub.s32 %v3674, %v3676
        %v3678 = vrot.slane %v3671, %v3677
        %v3679 = vcombine.low %v3195, %v3259
        %v3681 = vunpack.c.l.s4 1983009808
        %v3682 = vunpack.c.0.s8 %v3681
        %v3683 = vlaneseq
        %v3684 = vshrl.u32 %v3683, 7
        %v3685 = vsub.s32 %v3682, %v3684
        %v3686 = vrot.slane %v3679, %v3685
        %v3687 = vcombine.low %v3227, %v3291
        %v3689 = vunpack.c.l.s4 1983009808
        %v3690 = vunpack.c.0.s8 %v3689
        %v3691 = vlaneseq
        %v3692 = vshrl.u32 %v3691, 7
        %v3693 = vsub.s32 %v3690, %v3692
        %v3694 = vrot.slane %v3687, %v3693
        %v3695 = vcombine.low %v3670, %v3678
        %v3697 = vunpack.c.l.s4 1934713408
        %v3698 = vunpack.c.0.s8 %v3697
        %v3699 = vlaneseq
        %v3700 = vshrl.u32 %v3699, 7
        %v3701 = vsub.s32 %v3698, %v3700
        %v3702 = vrot.slane %v3695, %v3701
        %v3703 = vcombine.low %v3686, %v3694
        %v3705 = vunpack.c.l.s4 1934713408
        %v3706 = vunpack.c.0.s8 %v3705
        %v3707 = vlaneseq
        %v3708 = vshrl.u32 %v3707, 7
        %v3709 = vsub.s32 %v3706, %v3708
        %v3710 = vrot.slane %v3703, %v3709
        %v3711 = vcombine.low %v3702, %v3710
        %v3712 = vcombine.high %v3702, %v3710
        %v3713 = vcombine.low %v3323, %v3387
        %v3715 = vunpack.c.l.s4 1983009808
        %v3716 = vunpack.c.0.s8 %v3715
        %v3717 = vlaneseq
        %v3718 = vshrl.u32 %v3717, 7
        %v3719 = vsub.s32 %v3716, %v3718
        %v3720 = vrot.slane %v3713, %v3719
        %v3721 = vcombine.low %v3355, %v3419
        %v3723 = vunpack.c.l.s4 1983009808
        %v3724 = vunpack.c.0.s8 %v3723
        %v3725 = vlaneseq
        %v3726 = vshrl.u32 %v3725, 7
        %v3727 = vsub.s32 %v3724, %v3726
        %v3728 = vrot.slane %v3721, %v3727
        %v3729 = vcombine.low %v3451, %v3515
        %v3731 = vunpack.c.l.s4 1983009808
        %v3732 = vunpack.c.0.s8 %v3731
        %v3733 = vlaneseq
        %v3734 = vshrl.u32 %v3733, 7
        %v3735 = vsub.s32 %v3732, %v3734
        %v3736 = vrot.slane %v3729, %v3735
        %v3737 = vcombine.low %v3483, %v3547
        %v3739 = vunpack.c.l.s4 1983009808
        %v3740 = vunpack.c.0.s8 %v3739
        %v3741 = vlaneseq
        %v3742 = vshrl.u32 %v3741, 7
        %v3743 = vsub.s32 %v3740, %v3742
        %v3744 = vrot.slane %v3737, %v3743
        %v3745 = vcombine.low %v3720, %v3728
        %v3747 = vunpack.c.l.s4 1934713408
        %v3748 = vunpack.c.0.s8 %v3747
        %v3749 = vlaneseq
        %v3750 = vshrl.u32 %v3749, 7
        %v3751 = vsub.s32 %v3748, %v3750
        %v3752 = vrot.slane %v3745, %v3751
        %v3753 = vcombine.low %v3736, %v3744
        %v3755 = vunpack.c.l.s4 1934713408
        %v3756 = vunpack.c.0.s8 %v3755
        %v3757 = vlaneseq
        %v3758 = vshrl.u32 %v3757, 7
        %v3759 = vsub.s32 %v3756, %v3758
        %v3760 = vrot.slane %v3753, %v3759
        %v3761 = vcombine.low %v3752, %v3760
        %v3762 = vcombine.high %v3752, %v3760
        %v3763 = vlaneseq
        %v3764 = vshrl.u32 %v3763, 7
        %v3765 = vsub.s32 0, %v3764
        %v3766 = vrot.slane %v3611, %v3765
        %3768 = vbcast.lane.b32.xlu0 %v3766, 256
        %v3769 = vpop.permute.xlu0 %3768
        %v3770 = vlaneseq
        %v3771 = vshrl.u32 %v3770, 7
        %v3772 = vsub.s32 1, %v3771
        %v3773 = vrot.slane %v3611, %v3772
        %3775 = vbcast.lane.b32.xlu0 %v3773, 256
        %v3776 = vpop.permute.xlu0 %3775
        %v3777 = vlaneseq
        %v3778 = vshrl.u32 %v3777, 7
        %v3779 = vsub.s32 2, %v3778
        %v3780 = vrot.slane %v3611, %v3779
        %3782 = vbcast.lane.b32.xlu0 %v3780, 256
        %v3783 = vpop.permute.xlu0 %3782
        %v3784 = vlaneseq
        %v3785 = vshrl.u32 %v3784, 7
        %v3786 = vsub.s32 3, %v3785
        %v3787 = vrot.slane %v3611, %v3786
        %3789 = vbcast.lane.b32.xlu0 %v3787, 256
        %v3790 = vpop.permute.xlu0 %3789
        %v3791 = vlaneseq
        %v3792 = vshrl.u32 %v3791, 7
        %v3793 = vsub.s32 4, %v3792
        %v3794 = vrot.slane %v3611, %v3793
        %3796 = vbcast.lane.b32.xlu0 %v3794, 256
        %v3797 = vpop.permute.xlu0 %3796
        %v3798 = vlaneseq
        %v3799 = vshrl.u32 %v3798, 7
        %v3800 = vsub.s32 5, %v3799
        %v3801 = vrot.slane %v3611, %v3800
        %3803 = vbcast.lane.b32.xlu0 %v3801, 256
        %v3804 = vpop.permute.xlu0 %3803
        %v3805 = vlaneseq
        %v3806 = vshrl.u32 %v3805, 7
        %v3807 = vsub.s32 6, %v3806
        %v3808 = vrot.slane %v3611, %v3807
        %3810 = vbcast.lane.b32.xlu0 %v3808, 256
        %v3811 = vpop.permute.xlu0 %3810
        %v3812 = vlaneseq
        %v3813 = vshrl.u32 %v3812, 7
        %v3814 = vsub.s32 7, %v3813
        %v3815 = vrot.slane %v3611, %v3814
        %3817 = vbcast.lane.b32.xlu0 %v3815, 256
        %v3818 = vpop.permute.xlu0 %3817
        %v3819 = vlaneseq
        %v3820 = vshrl.u32 %v3819, 7
        %v3821 = vsub.s32 0, %v3820
        %v3822 = vrot.slane %v3661, %v3821
        %3824 = vbcast.lane.b32.xlu0 %v3822, 256
        %v3825 = vpop.permute.xlu0 %3824
        %v3826 = vlaneseq
        %v3827 = vshrl.u32 %v3826, 7
        %v3828 = vsub.s32 1, %v3827
        %v3829 = vrot.slane %v3661, %v3828
        %3831 = vbcast.lane.b32.xlu0 %v3829, 256
        %v3832 = vpop.permute.xlu0 %3831
        %v3833 = vlaneseq
        %v3834 = vshrl.u32 %v3833, 7
        %v3835 = vsub.s32 2, %v3834
        %v3836 = vrot.slane %v3661, %v3835
        %3838 = vbcast.lane.b32.xlu0 %v3836, 256
        %v3839 = vpop.permute.xlu0 %3838
        %v3840 = vlaneseq
        %v3841 = vshrl.u32 %v3840, 7
        %v3842 = vsub.s32 3, %v3841
        %v3843 = vrot.slane %v3661, %v3842
        %3845 = vbcast.lane.b32.xlu0 %v3843, 256
        %v3846 = vpop.permute.xlu0 %3845
        %v3847 = vlaneseq
        %v3848 = vshrl.u32 %v3847, 7
        %v3849 = vsub.s32 4, %v3848
        %v3850 = vrot.slane %v3661, %v3849
        %3852 = vbcast.lane.b32.xlu0 %v3850, 256
        %v3853 = vpop.permute.xlu0 %3852
        %v3854 = vlaneseq
        %v3855 = vshrl.u32 %v3854, 7
        %v3856 = vsub.s32 5, %v3855
        %v3857 = vrot.slane %v3661, %v3856
        %3859 = vbcast.lane.b32.xlu0 %v3857, 256
        %v3860 = vpop.permute.xlu0 %3859
        %v3861 = vlaneseq
        %v3862 = vshrl.u32 %v3861, 7
        %v3863 = vsub.s32 6, %v3862
        %v3864 = vrot.slane %v3661, %v3863
        %3866 = vbcast.lane.b32.xlu0 %v3864, 256
        %v3867 = vpop.permute.xlu0 %3866
        %v3868 = vlaneseq
        %v3869 = vshrl.u32 %v3868, 7
        %v3870 = vsub.s32 7, %v3869
        %v3871 = vrot.slane %v3661, %v3870
        %3873 = vbcast.lane.b32.xlu0 %v3871, 256
        %v3874 = vpop.permute.xlu0 %3873
        %v3875 = vlaneseq
        %v3876 = vshrl.u32 %v3875, 7
        %v3877 = vsub.s32 0, %v3876
        %v3878 = vrot.slane %v3711, %v3877
        %3880 = vbcast.lane.b32.xlu0 %v3878, 256
        %v3881 = vpop.permute.xlu0 %3880
        %v3882 = vlaneseq
        %v3883 = vshrl.u32 %v3882, 7
        %v3884 = vsub.s32 1, %v3883
        %v3885 = vrot.slane %v3711, %v3884
        %3887 = vbcast.lane.b32.xlu0 %v3885, 256
        %v3888 = vpop.permute.xlu0 %3887
        %v3889 = vlaneseq
        %v3890 = vshrl.u32 %v3889, 7
        %v3891 = vsub.s32 2, %v3890
        %v3892 = vrot.slane %v3711, %v3891
        %3894 = vbcast.lane.b32.xlu0 %v3892, 256
        %v3895 = vpop.permute.xlu0 %3894
        %v3896 = vlaneseq
        %v3897 = vshrl.u32 %v3896, 7
        %v3898 = vsub.s32 3, %v3897
        %v3899 = vrot.slane %v3711, %v3898
        %3901 = vbcast.lane.b32.xlu0 %v3899, 256
        %v3902 = vpop.permute.xlu0 %3901
        %v3903 = vlaneseq
        %v3904 = vshrl.u32 %v3903, 7
        %v3905 = vsub.s32 4, %v3904
        %v3906 = vrot.slane %v3711, %v3905
        %3908 = vbcast.lane.b32.xlu0 %v3906, 256
        %v3909 = vpop.permute.xlu0 %3908
        %v3910 = vlaneseq
        %v3911 = vshrl.u32 %v3910, 7
        %v3912 = vsub.s32 5, %v3911
        %v3913 = vrot.slane %v3711, %v3912
        %3915 = vbcast.lane.b32.xlu0 %v3913, 256
        %v3916 = vpop.permute.xlu0 %3915
        %v3917 = vlaneseq
        %v3918 = vshrl.u32 %v3917, 7
        %v3919 = vsub.s32 6, %v3918
        %v3920 = vrot.slane %v3711, %v3919
        %3922 = vbcast.lane.b32.xlu0 %v3920, 256
        %v3923 = vpop.permute.xlu0 %3922
        %v3924 = vlaneseq
        %v3925 = vshrl.u32 %v3924, 7
        %v3926 = vsub.s32 7, %v3925
        %v3927 = vrot.slane %v3711, %v3926
        %3929 = vbcast.lane.b32.xlu0 %v3927, 256
        %v3930 = vpop.permute.xlu0 %3929
        %v3931 = vlaneseq
        %v3932 = vshrl.u32 %v3931, 7
        %v3933 = vsub.s32 0, %v3932
        %v3934 = vrot.slane %v3761, %v3933
        %3936 = vbcast.lane.b32.xlu0 %v3934, 256
        %v3937 = vpop.permute.xlu0 %3936
        %v3938 = vlaneseq
        %v3939 = vshrl.u32 %v3938, 7
        %v3940 = vsub.s32 1, %v3939
        %v3941 = vrot.slane %v3761, %v3940
        %3943 = vbcast.lane.b32.xlu0 %v3941, 256
        %v3944 = vpop.permute.xlu0 %3943
        %v3945 = vlaneseq
        %v3946 = vshrl.u32 %v3945, 7
        %v3947 = vsub.s32 2, %v3946
        %v3948 = vrot.slane %v3761, %v3947
        %3950 = vbcast.lane.b32.xlu0 %v3948, 256
        %v3951 = vpop.permute.xlu0 %3950
        %v3952 = vlaneseq
        %v3953 = vshrl.u32 %v3952, 7
        %v3954 = vsub.s32 3, %v3953
        %v3955 = vrot.slane %v3761, %v3954
        %3957 = vbcast.lane.b32.xlu0 %v3955, 256
        %v3958 = vpop.permute.xlu0 %3957
        %v3959 = vlaneseq
        %v3960 = vshrl.u32 %v3959, 7
        %v3961 = vsub.s32 4, %v3960
        %v3962 = vrot.slane %v3761, %v3961
        %3964 = vbcast.lane.b32.xlu0 %v3962, 256
        %v3965 = vpop.permute.xlu0 %3964
        %v3966 = vlaneseq
        %v3967 = vshrl.u32 %v3966, 7
        %v3968 = vsub.s32 5, %v3967
        %v3969 = vrot.slane %v3761, %v3968
        %3971 = vbcast.lane.b32.xlu0 %v3969, 256
        %v3972 = vpop.permute.xlu0 %3971
        %v3973 = vlaneseq
        %v3974 = vshrl.u32 %v3973, 7
        %v3975 = vsub.s32 6, %v3974
        %v3976 = vrot.slane %v3761, %v3975
        %3978 = vbcast.lane.b32.xlu0 %v3976, 256
        %v3979 = vpop.permute.xlu0 %3978
        %v3980 = vlaneseq
        %v3981 = vshrl.u32 %v3980, 7
        %v3982 = vsub.s32 7, %v3981
        %v3983 = vrot.slane %v3761, %v3982
        %3985 = vbcast.lane.b32.xlu0 %v3983, 256
        %v3986 = vpop.permute.xlu0 %3985
        %v3987 = vlaneseq
        %v3988 = vshrl.u32 %v3987, 7
        %v3989 = vsub.s32 0, %v3988
        %v3990 = vrot.slane %v3612, %v3989
        %3992 = vbcast.lane.b32.xlu0 %v3990, 256
        %v3993 = vpop.permute.xlu0 %3992
        %v3994 = vlaneseq
        %v3995 = vshrl.u32 %v3994, 7
        %v3996 = vsub.s32 1, %v3995
        %v3997 = vrot.slane %v3612, %v3996
        %3999 = vbcast.lane.b32.xlu0 %v3997, 256
        %v4000 = vpop.permute.xlu0 %3999
        %v4001 = vlaneseq
        %v4002 = vshrl.u32 %v4001, 7
        %v4003 = vsub.s32 2, %v4002
        %v4004 = vrot.slane %v3612, %v4003
        %4006 = vbcast.lane.b32.xlu0 %v4004, 256
        %v4007 = vpop.permute.xlu0 %4006
        %v4008 = vlaneseq
        %v4009 = vshrl.u32 %v4008, 7
        %v4010 = vsub.s32 3, %v4009
        %v4011 = vrot.slane %v3612, %v4010
        %4013 = vbcast.lane.b32.xlu0 %v4011, 256
        %v4014 = vpop.permute.xlu0 %4013
        %v4015 = vlaneseq
        %v4016 = vshrl.u32 %v4015, 7
        %v4017 = vsub.s32 4, %v4016
        %v4018 = vrot.slane %v3612, %v4017
        %4020 = vbcast.lane.b32.xlu0 %v4018, 256
        %v4021 = vpop.permute.xlu0 %4020
        %v4022 = vlaneseq
        %v4023 = vshrl.u32 %v4022, 7
        %v4024 = vsub.s32 5, %v4023
        %v4025 = vrot.slane %v3612, %v4024
        %4027 = vbcast.lane.b32.xlu0 %v4025, 256
        %v4028 = vpop.permute.xlu0 %4027
        %v4029 = vlaneseq
        %v4030 = vshrl.u32 %v4029, 7
        %v4031 = vsub.s32 6, %v4030
        %v4032 = vrot.slane %v3612, %v4031
        %4034 = vbcast.lane.b32.xlu0 %v4032, 256
        %v4035 = vpop.permute.xlu0 %4034
        %v4036 = vlaneseq
        %v4037 = vshrl.u32 %v4036, 7
        %v4038 = vsub.s32 7, %v4037
        %v4039 = vrot.slane %v3612, %v4038
        %4041 = vbcast.lane.b32.xlu0 %v4039, 256
        %v4042 = vpop.permute.xlu0 %4041
        %v4043 = vlaneseq
        %v4044 = vshrl.u32 %v4043, 7
        %v4045 = vsub.s32 0, %v4044
        %v4046 = vrot.slane %v3662, %v4045
        %4048 = vbcast.lane.b32.xlu0 %v4046, 256
        %v4049 = vpop.permute.xlu0 %4048
        %v4050 = vlaneseq
        %v4051 = vshrl.u32 %v4050, 7
        %v4052 = vsub.s32 1, %v4051
        %v4053 = vrot.slane %v3662, %v4052
        %4055 = vbcast.lane.b32.xlu0 %v4053, 256
        %v4056 = vpop.permute.xlu0 %4055
        %v4057 = vlaneseq
        %v4058 = vshrl.u32 %v4057, 7
        %v4059 = vsub.s32 2, %v4058
        %v4060 = vrot.slane %v3662, %v4059
        %4062 = vbcast.lane.b32.xlu0 %v4060, 256
        %v4063 = vpop.permute.xlu0 %4062
        %v4064 = vlaneseq
        %v4065 = vshrl.u32 %v4064, 7
        %v4066 = vsub.s32 3, %v4065
        %v4067 = vrot.slane %v3662, %v4066
        %4069 = vbcast.lane.b32.xlu0 %v4067, 256
        %v4070 = vpop.permute.xlu0 %4069
        %v4071 = vlaneseq
        %v4072 = vshrl.u32 %v4071, 7
        %v4073 = vsub.s32 4, %v4072
        %v4074 = vrot.slane %v3662, %v4073
        %4076 = vbcast.lane.b32.xlu0 %v4074, 256
        %v4077 = vpop.permute.xlu0 %4076
        %v4078 = vlaneseq
        %v4079 = vshrl.u32 %v4078, 7
        %v4080 = vsub.s32 5, %v4079
        %v4081 = vrot.slane %v3662, %v4080
        %4083 = vbcast.lane.b32.xlu0 %v4081, 256
        %v4084 = vpop.permute.xlu0 %4083
        %v4085 = vlaneseq
        %v4086 = vshrl.u32 %v4085, 7
        %v4087 = vsub.s32 6, %v4086
        %v4088 = vrot.slane %v3662, %v4087
        %4090 = vbcast.lane.b32.xlu0 %v4088, 256
        %v4091 = vpop.permute.xlu0 %4090
        %v4092 = vlaneseq
        %v4093 = vshrl.u32 %v4092, 7
        %v4094 = vsub.s32 7, %v4093
        %v4095 = vrot.slane %v3662, %v4094
        %4097 = vbcast.lane.b32.xlu0 %v4095, 256
        %v4098 = vpop.permute.xlu0 %4097
        %v4099 = vlaneseq
        %v4100 = vshrl.u32 %v4099, 7
        %v4101 = vsub.s32 0, %v4100
        %v4102 = vrot.slane %v3712, %v4101
        %4104 = vbcast.lane.b32.xlu0 %v4102, 256
        %v4105 = vpop.permute.xlu0 %4104
        %v4106 = vlaneseq
        %v4107 = vshrl.u32 %v4106, 7
        %v4108 = vsub.s32 1, %v4107
        %v4109 = vrot.slane %v3712, %v4108
        %4111 = vbcast.lane.b32.xlu0 %v4109, 256
        %v4112 = vpop.permute.xlu0 %4111
        %v4113 = vlaneseq
        %v4114 = vshrl.u32 %v4113, 7
        %v4115 = vsub.s32 2, %v4114
        %v4116 = vrot.slane %v3712, %v4115
        %4118 = vbcast.lane.b32.xlu0 %v4116, 256
        %v4119 = vpop.permute.xlu0 %4118
        %v4120 = vlaneseq
        %v4121 = vshrl.u32 %v4120, 7
        %v4122 = vsub.s32 3, %v4121
        %v4123 = vrot.slane %v3712, %v4122
        %4125 = vbcast.lane.b32.xlu0 %v4123, 256
        %v4126 = vpop.permute.xlu0 %4125
        %v4127 = vlaneseq
        %v4128 = vshrl.u32 %v4127, 7
        %v4129 = vsub.s32 4, %v4128
        %v4130 = vrot.slane %v3712, %v4129
        %4132 = vbcast.lane.b32.xlu0 %v4130, 256
        %v4133 = vpop.permute.xlu0 %4132
        %v4134 = vlaneseq
        %v4135 = vshrl.u32 %v4134, 7
        %v4136 = vsub.s32 5, %v4135
        %v4137 = vrot.slane %v3712, %v4136
        %4139 = vbcast.lane.b32.xlu0 %v4137, 256
        %v4140 = vpop.permute.xlu0 %4139
        %v4141 = vlaneseq
        %v4142 = vshrl.u32 %v4141, 7
        %v4143 = vsub.s32 6, %v4142
        %v4144 = vrot.slane %v3712, %v4143
        %4146 = vbcast.lane.b32.xlu0 %v4144, 256
        %v4147 = vpop.permute.xlu0 %4146
        %v4148 = vlaneseq
        %v4149 = vshrl.u32 %v4148, 7
        %v4150 = vsub.s32 7, %v4149
        %v4151 = vrot.slane %v3712, %v4150
        %4153 = vbcast.lane.b32.xlu0 %v4151, 256
        %v4154 = vpop.permute.xlu0 %4153
        %v4155 = vlaneseq
        %v4156 = vshrl.u32 %v4155, 7
        %v4157 = vsub.s32 0, %v4156
        %v4158 = vrot.slane %v3762, %v4157
        %4160 = vbcast.lane.b32.xlu0 %v4158, 256
        %v4161 = vpop.permute.xlu0 %4160
        %v4162 = vlaneseq
        %v4163 = vshrl.u32 %v4162, 7
        %v4164 = vsub.s32 1, %v4163
        %v4165 = vrot.slane %v3762, %v4164
        %4167 = vbcast.lane.b32.xlu0 %v4165, 256
        %v4168 = vpop.permute.xlu0 %4167
        %v4169 = vlaneseq
        %v4170 = vshrl.u32 %v4169, 7
        %v4171 = vsub.s32 2, %v4170
        %v4172 = vrot.slane %v3762, %v4171
        %4174 = vbcast.lane.b32.xlu0 %v4172, 256
        %v4175 = vpop.permute.xlu0 %4174
        %v4176 = vlaneseq
        %v4177 = vshrl.u32 %v4176, 7
        %v4178 = vsub.s32 3, %v4177
        %v4179 = vrot.slane %v3762, %v4178
        %4181 = vbcast.lane.b32.xlu0 %v4179, 256
        %v4182 = vpop.permute.xlu0 %4181
        %v4183 = vlaneseq
        %v4184 = vshrl.u32 %v4183, 7
        %v4185 = vsub.s32 4, %v4184
        %v4186 = vrot.slane %v3762, %v4185
        %4188 = vbcast.lane.b32.xlu0 %v4186, 256
        %v4189 = vpop.permute.xlu0 %4188
        %v4190 = vlaneseq
        %v4191 = vshrl.u32 %v4190, 7
        %v4192 = vsub.s32 5, %v4191
        %v4193 = vrot.slane %v3762, %v4192
        %4195 = vbcast.lane.b32.xlu0 %v4193, 256
        %v4196 = vpop.permute.xlu0 %4195
        %v4197 = vlaneseq
        %v4198 = vshrl.u32 %v4197, 7
        %v4199 = vsub.s32 6, %v4198
        %v4200 = vrot.slane %v3762, %v4199
        %4202 = vbcast.lane.b32.xlu0 %v4200, 256
        %v4203 = vpop.permute.xlu0 %4202
        %v4204 = vlaneseq
        %v4205 = vshrl.u32 %v4204, 7
        %v4206 = vsub.s32 7, %v4205
        %v4207 = vrot.slane %v3762, %v4206
        %4209 = vbcast.lane.b32.xlu0 %v4207, 256
        %v4210 = vpop.permute.xlu0 %4209
        %v4211 = vmul.f32 %v355, %v3769
        %v4212 = vmul.f32 %v379, %v3776
        %v4213 = vmul.f32 %v362, %v3783
        %v4214 = vmul.f32 %v380, %v3790
        %v4215 = vmul.f32 %v371, %v3797
        %v4216 = vmul.f32 %v381, %v3804
        %v4217 = vmul.f32 %v378, %v3811
        %v4218 = vmul.f32 %v382, %v3818
        %v4219 = vmul.f32 %v423, %v3825
        %v4220 = vmul.f32 %v447, %v3832
        %v4221 = vmul.f32 %v430, %v3839
        %v4222 = vmul.f32 %v448, %v3846
        %v4223 = vmul.f32 %v439, %v3853
        %v4224 = vmul.f32 %v449, %v3860
        %v4225 = vmul.f32 %v446, %v3867
        %v4226 = vmul.f32 %v450, %v3874
        %v4227 = vmul.f32 %v491, %v3881
        %v4228 = vmul.f32 %v515, %v3888
        %v4229 = vmul.f32 %v498, %v3895
        %v4230 = vmul.f32 %v516, %v3902
        %v4231 = vmul.f32 %v507, %v3909
        %v4232 = vmul.f32 %v517, %v3916
        %v4233 = vmul.f32 %v514, %v3923
        %v4234 = vmul.f32 %v518, %v3930
        %v4235 = vmul.f32 %v559, %v3937
        %v4236 = vmul.f32 %v583, %v3944
        %v4237 = vmul.f32 %v566, %v3951
        %v4238 = vmul.f32 %v584, %v3958
        %v4239 = vmul.f32 %v575, %v3965
        %v4240 = vmul.f32 %v585, %v3972
        %v4241 = vmul.f32 %v582, %v3979
        %v4242 = vmul.f32 %v586, %v3986
        %v4243 = vmul.f32 %v627, %v3993
        %v4244 = vmul.f32 %v651, %v4000
        %v4245 = vmul.f32 %v634, %v4007
        %v4246 = vmul.f32 %v652, %v4014
        %v4247 = vmul.f32 %v643, %v4021
        %v4248 = vmul.f32 %v653, %v4028
        %v4249 = vmul.f32 %v650, %v4035
        %v4250 = vmul.f32 %v654, %v4042
        %v4251 = vmul.f32 %v695, %v4049
        %v4252 = vmul.f32 %v719, %v4056
        %v4253 = vmul.f32 %v702, %v4063
        %v4254 = vmul.f32 %v720, %v4070
        %v4255 = vmul.f32 %v711, %v4077
        %v4256 = vmul.f32 %v721, %v4084
        %v4257 = vmul.f32 %v718, %v4091
        %v4258 = vmul.f32 %v722, %v4098
        %v4259 = vmul.f32 %v763, %v4105
        %v4260 = vmul.f32 %v787, %v4112
        %v4261 = vmul.f32 %v770, %v4119
        %v4262 = vmul.f32 %v788, %v4126
        %v4263 = vmul.f32 %v779, %v4133
        %v4264 = vmul.f32 %v789, %v4140
        %v4265 = vmul.f32 %v786, %v4147
        %v4266 = vmul.f32 %v790, %v4154
        %v4267 = vmul.f32 %v831, %v4161
        %v4268 = vmul.f32 %v855, %v4168
        %v4269 = vmul.f32 %v838, %v4175
        %v4270 = vmul.f32 %v856, %v4182
        %v4271 = vmul.f32 %v847, %v4189
        %v4272 = vmul.f32 %v857, %v4196
        %v4273 = vmul.f32 %v854, %v4203
        %v4274 = vmul.f32 %v858, %v4210
        %v4275 = vcombine.low %v4211, %v4213
        %v4277 = vunpack.c.l.s4 1983009808
        %v4278 = vunpack.c.0.s8 %v4277
        %v4279 = vlaneseq
        %v4280 = vshrl.u32 %v4279, 7
        %v4281 = vsub.s32 %v4278, %v4280
        %v4282 = vrot.slane %v4275, %v4281
        %v4283 = vcombine.low %v4212, %v4214
        %v4285 = vunpack.c.l.s4 1983009808
        %v4286 = vunpack.c.0.s8 %v4285
        %v4287 = vlaneseq
        %v4288 = vshrl.u32 %v4287, 7
        %v4289 = vsub.s32 %v4286, %v4288
        %v4290 = vrot.slane %v4283, %v4289
        %v4291 = vcombine.low %v4215, %v4217
        %v4293 = vunpack.c.l.s4 1983009808
        %v4294 = vunpack.c.0.s8 %v4293
        %v4295 = vlaneseq
        %v4296 = vshrl.u32 %v4295, 7
        %v4297 = vsub.s32 %v4294, %v4296
        %v4298 = vrot.slane %v4291, %v4297
        %v4299 = vcombine.low %v4216, %v4218
        %v4301 = vunpack.c.l.s4 1983009808
        %v4302 = vunpack.c.0.s8 %v4301
        %v4303 = vlaneseq
        %v4304 = vshrl.u32 %v4303, 7
        %v4305 = vsub.s32 %v4302, %v4304
        %v4306 = vrot.slane %v4299, %v4305
        %v4307 = vcombine.low %v4282, %v4290
        %v4308 = vcombine.high %v4282, %v4290
        %v4310 = vunpack.c.l.s4 1934713408
        %v4311 = vunpack.c.0.s8 %v4310
        %v4312 = vlaneseq
        %v4313 = vshrl.u32 %v4312, 7
        %v4314 = vsub.s32 %v4311, %v4313
        %v4315 = vrot.slane %v4307, %v4314
        %v4317 = vunpack.c.l.s4 1934713408
        %v4318 = vunpack.c.0.s8 %v4317
        %v4319 = vlaneseq
        %v4320 = vshrl.u32 %v4319, 7
        %v4321 = vsub.s32 %v4318, %v4320
        %v4322 = vrot.slane %v4308, %v4321
        %v4323 = vcombine.low %v4298, %v4306
        %v4324 = vcombine.high %v4298, %v4306
        %v4326 = vunpack.c.l.s4 1934713408
        %v4327 = vunpack.c.0.s8 %v4326
        %v4328 = vlaneseq
        %v4329 = vshrl.u32 %v4328, 7
        %v4330 = vsub.s32 %v4327, %v4329
        %v4331 = vrot.slane %v4323, %v4330
        %v4333 = vunpack.c.l.s4 1934713408
        %v4334 = vunpack.c.0.s8 %v4333
        %v4335 = vlaneseq
        %v4336 = vshrl.u32 %v4335, 7
        %v4337 = vsub.s32 %v4334, %v4336
        %v4338 = vrot.slane %v4324, %v4337
        %v4339 = vcombine.low %v4315, %v4331
        %v4340 = vcombine.high %v4315, %v4331
        %v4341 = vcombine.low %v4322, %v4338
        %v4342 = vcombine.high %v4322, %v4338
        %v4343 = vcombine.low %v4219, %v4221
        %v4345 = vunpack.c.l.s4 1983009808
        %v4346 = vunpack.c.0.s8 %v4345
        %v4347 = vlaneseq
        %v4348 = vshrl.u32 %v4347, 7
        %v4349 = vsub.s32 %v4346, %v4348
        %v4350 = vrot.slane %v4343, %v4349
        %v4351 = vcombine.low %v4220, %v4222
        %v4353 = vunpack.c.l.s4 1983009808
        %v4354 = vunpack.c.0.s8 %v4353
        %v4355 = vlaneseq
        %v4356 = vshrl.u32 %v4355, 7
        %v4357 = vsub.s32 %v4354, %v4356
        %v4358 = vrot.slane %v4351, %v4357
        %v4359 = vcombine.low %v4223, %v4225
        %v4361 = vunpack.c.l.s4 1983009808
        %v4362 = vunpack.c.0.s8 %v4361
        %v4363 = vlaneseq
        %v4364 = vshrl.u32 %v4363, 7
        %v4365 = vsub.s32 %v4362, %v4364
        %v4366 = vrot.slane %v4359, %v4365
        %v4367 = vcombine.low %v4224, %v4226
        %v4369 = vunpack.c.l.s4 1983009808
        %v4370 = vunpack.c.0.s8 %v4369
        %v4371 = vlaneseq
        %v4372 = vshrl.u32 %v4371, 7
        %v4373 = vsub.s32 %v4370, %v4372
        %v4374 = vrot.slane %v4367, %v4373
        %v4375 = vcombine.low %v4350, %v4358
        %v4376 = vcombine.high %v4350, %v4358
        %v4378 = vunpack.c.l.s4 1934713408
        %v4379 = vunpack.c.0.s8 %v4378
        %v4380 = vlaneseq
        %v4381 = vshrl.u32 %v4380, 7
        %v4382 = vsub.s32 %v4379, %v4381
        %v4383 = vrot.slane %v4375, %v4382
        %v4385 = vunpack.c.l.s4 1934713408
        %v4386 = vunpack.c.0.s8 %v4385
        %v4387 = vlaneseq
        %v4388 = vshrl.u32 %v4387, 7
        %v4389 = vsub.s32 %v4386, %v4388
        %v4390 = vrot.slane %v4376, %v4389
        %v4391 = vcombine.low %v4366, %v4374
        %v4392 = vcombine.high %v4366, %v4374
        %v4394 = vunpack.c.l.s4 1934713408
        %v4395 = vunpack.c.0.s8 %v4394
        %v4396 = vlaneseq
        %v4397 = vshrl.u32 %v4396, 7
        %v4398 = vsub.s32 %v4395, %v4397
        %v4399 = vrot.slane %v4391, %v4398
        %v4401 = vunpack.c.l.s4 1934713408
        %v4402 = vunpack.c.0.s8 %v4401
        %v4403 = vlaneseq
        %v4404 = vshrl.u32 %v4403, 7
        %v4405 = vsub.s32 %v4402, %v4404
        %v4406 = vrot.slane %v4392, %v4405
        %v4407 = vcombine.low %v4383, %v4399
        %v4408 = vcombine.high %v4383, %v4399
        %v4409 = vcombine.low %v4390, %v4406
        %v4410 = vcombine.high %v4390, %v4406
        %v4411 = vcombine.low %v4227, %v4229
        %v4413 = vunpack.c.l.s4 1983009808
        %v4414 = vunpack.c.0.s8 %v4413
        %v4415 = vlaneseq
        %v4416 = vshrl.u32 %v4415, 7
        %v4417 = vsub.s32 %v4414, %v4416
        %v4418 = vrot.slane %v4411, %v4417
        %v4419 = vcombine.low %v4228, %v4230
        %v4421 = vunpack.c.l.s4 1983009808
        %v4422 = vunpack.c.0.s8 %v4421
        %v4423 = vlaneseq
        %v4424 = vshrl.u32 %v4423, 7
        %v4425 = vsub.s32 %v4422, %v4424
        %v4426 = vrot.slane %v4419, %v4425
        %v4427 = vcombine.low %v4231, %v4233
        %v4429 = vunpack.c.l.s4 1983009808
        %v4430 = vunpack.c.0.s8 %v4429
        %v4431 = vlaneseq
        %v4432 = vshrl.u32 %v4431, 7
        %v4433 = vsub.s32 %v4430, %v4432
        %v4434 = vrot.slane %v4427, %v4433
        %v4435 = vcombine.low %v4232, %v4234
        %v4437 = vunpack.c.l.s4 1983009808
        %v4438 = vunpack.c.0.s8 %v4437
        %v4439 = vlaneseq
        %v4440 = vshrl.u32 %v4439, 7
        %v4441 = vsub.s32 %v4438, %v4440
        %v4442 = vrot.slane %v4435, %v4441
        %v4443 = vcombine.low %v4418, %v4426
        %v4444 = vcombine.high %v4418, %v4426
        %v4446 = vunpack.c.l.s4 1934713408
        %v4447 = vunpack.c.0.s8 %v4446
        %v4448 = vlaneseq
        %v4449 = vshrl.u32 %v4448, 7
        %v4450 = vsub.s32 %v4447, %v4449
        %v4451 = vrot.slane %v4443, %v4450
        %v4453 = vunpack.c.l.s4 1934713408
        %v4454 = vunpack.c.0.s8 %v4453
        %v4455 = vlaneseq
        %v4456 = vshrl.u32 %v4455, 7
        %v4457 = vsub.s32 %v4454, %v4456
        %v4458 = vrot.slane %v4444, %v4457
        %v4459 = vcombine.low %v4434, %v4442
        %v4460 = vcombine.high %v4434, %v4442
        %v4462 = vunpack.c.l.s4 1934713408
        %v4463 = vunpack.c.0.s8 %v4462
        %v4464 = vlaneseq
        %v4465 = vshrl.u32 %v4464, 7
        %v4466 = vsub.s32 %v4463, %v4465
        %v4467 = vrot.slane %v4459, %v4466
        %v4469 = vunpack.c.l.s4 1934713408
        %v4470 = vunpack.c.0.s8 %v4469
        %v4471 = vlaneseq
        %v4472 = vshrl.u32 %v4471, 7
        %v4473 = vsub.s32 %v4470, %v4472
        %v4474 = vrot.slane %v4460, %v4473
        %v4475 = vcombine.low %v4451, %v4467
        %v4476 = vcombine.high %v4451, %v4467
        %v4477 = vcombine.low %v4458, %v4474
        %v4478 = vcombine.high %v4458, %v4474
        %v4479 = vcombine.low %v4235, %v4237
        %v4481 = vunpack.c.l.s4 1983009808
        %v4482 = vunpack.c.0.s8 %v4481
        %v4483 = vlaneseq
        %v4484 = vshrl.u32 %v4483, 7
        %v4485 = vsub.s32 %v4482, %v4484
        %v4486 = vrot.slane %v4479, %v4485
        %v4487 = vcombine.low %v4236, %v4238
        %v4489 = vunpack.c.l.s4 1983009808
        %v4490 = vunpack.c.0.s8 %v4489
        %v4491 = vlaneseq
        %v4492 = vshrl.u32 %v4491, 7
        %v4493 = vsub.s32 %v4490, %v4492
        %v4494 = vrot.slane %v4487, %v4493
        %v4495 = vcombine.low %v4239, %v4241
        %v4497 = vunpack.c.l.s4 1983009808
        %v4498 = vunpack.c.0.s8 %v4497
        %v4499 = vlaneseq
        %v4500 = vshrl.u32 %v4499, 7
        %v4501 = vsub.s32 %v4498, %v4500
        %v4502 = vrot.slane %v4495, %v4501
        %v4503 = vcombine.low %v4240, %v4242
        %v4505 = vunpack.c.l.s4 1983009808
        %v4506 = vunpack.c.0.s8 %v4505
        %v4507 = vlaneseq
        %v4508 = vshrl.u32 %v4507, 7
        %v4509 = vsub.s32 %v4506, %v4508
        %v4510 = vrot.slane %v4503, %v4509
        %v4511 = vcombine.low %v4486, %v4494
        %v4512 = vcombine.high %v4486, %v4494
        %v4514 = vunpack.c.l.s4 1934713408
        %v4515 = vunpack.c.0.s8 %v4514
        %v4516 = vlaneseq
        %v4517 = vshrl.u32 %v4516, 7
        %v4518 = vsub.s32 %v4515, %v4517
        %v4519 = vrot.slane %v4511, %v4518
        %v4521 = vunpack.c.l.s4 1934713408
        %v4522 = vunpack.c.0.s8 %v4521
        %v4523 = vlaneseq
        %v4524 = vshrl.u32 %v4523, 7
        %v4525 = vsub.s32 %v4522, %v4524
        %v4526 = vrot.slane %v4512, %v4525
        %v4527 = vcombine.low %v4502, %v4510
        %v4528 = vcombine.high %v4502, %v4510
        %v4530 = vunpack.c.l.s4 1934713408
        %v4531 = vunpack.c.0.s8 %v4530
        %v4532 = vlaneseq
        %v4533 = vshrl.u32 %v4532, 7
        %v4534 = vsub.s32 %v4531, %v4533
        %v4535 = vrot.slane %v4527, %v4534
        %v4537 = vunpack.c.l.s4 1934713408
        %v4538 = vunpack.c.0.s8 %v4537
        %v4539 = vlaneseq
        %v4540 = vshrl.u32 %v4539, 7
        %v4541 = vsub.s32 %v4538, %v4540
        %v4542 = vrot.slane %v4528, %v4541
        %v4543 = vcombine.low %v4519, %v4535
        %v4544 = vcombine.high %v4519, %v4535
        %v4545 = vcombine.low %v4526, %v4542
        %v4546 = vcombine.high %v4526, %v4542
        %v4547 = vcombine.low %v4243, %v4245
        %v4549 = vunpack.c.l.s4 1983009808
        %v4550 = vunpack.c.0.s8 %v4549
        %v4551 = vlaneseq
        %v4552 = vshrl.u32 %v4551, 7
        %v4553 = vsub.s32 %v4550, %v4552
        %v4554 = vrot.slane %v4547, %v4553
        %v4555 = vcombine.low %v4244, %v4246
        %v4557 = vunpack.c.l.s4 1983009808
        %v4558 = vunpack.c.0.s8 %v4557
        %v4559 = vlaneseq
        %v4560 = vshrl.u32 %v4559, 7
        %v4561 = vsub.s32 %v4558, %v4560
        %v4562 = vrot.slane %v4555, %v4561
        %v4563 = vcombine.low %v4247, %v4249
        %v4565 = vunpack.c.l.s4 1983009808
        %v4566 = vunpack.c.0.s8 %v4565
        %v4567 = vlaneseq
        %v4568 = vshrl.u32 %v4567, 7
        %v4569 = vsub.s32 %v4566, %v4568
        %v4570 = vrot.slane %v4563, %v4569
        %v4571 = vcombine.low %v4248, %v4250
        %v4573 = vunpack.c.l.s4 1983009808
        %v4574 = vunpack.c.0.s8 %v4573
        %v4575 = vlaneseq
        %v4576 = vshrl.u32 %v4575, 7
        %v4577 = vsub.s32 %v4574, %v4576
        %v4578 = vrot.slane %v4571, %v4577
        %v4579 = vcombine.low %v4554, %v4562
        %v4580 = vcombine.high %v4554, %v4562
        %v4582 = vunpack.c.l.s4 1934713408
        %v4583 = vunpack.c.0.s8 %v4582
        %v4584 = vlaneseq
        %v4585 = vshrl.u32 %v4584, 7
        %v4586 = vsub.s32 %v4583, %v4585
        %v4587 = vrot.slane %v4579, %v4586
        %v4589 = vunpack.c.l.s4 1934713408
        %v4590 = vunpack.c.0.s8 %v4589
        %v4591 = vlaneseq
        %v4592 = vshrl.u32 %v4591, 7
        %v4593 = vsub.s32 %v4590, %v4592
        %v4594 = vrot.slane %v4580, %v4593
        %v4595 = vcombine.low %v4570, %v4578
        %v4596 = vcombine.high %v4570, %v4578
        %v4598 = vunpack.c.l.s4 1934713408
        %v4599 = vunpack.c.0.s8 %v4598
        %v4600 = vlaneseq
        %v4601 = vshrl.u32 %v4600, 7
        %v4602 = vsub.s32 %v4599, %v4601
        %v4603 = vrot.slane %v4595, %v4602
        %v4605 = vunpack.c.l.s4 1934713408
        %v4606 = vunpack.c.0.s8 %v4605
        %v4607 = vlaneseq
        %v4608 = vshrl.u32 %v4607, 7
        %v4609 = vsub.s32 %v4606, %v4608
        %v4610 = vrot.slane %v4596, %v4609
        %v4611 = vcombine.low %v4587, %v4603
        %v4612 = vcombine.high %v4587, %v4603
        %v4613 = vcombine.low %v4594, %v4610
        %v4614 = vcombine.high %v4594, %v4610
        %v4615 = vcombine.low %v4251, %v4253
        %v4617 = vunpack.c.l.s4 1983009808
        %v4618 = vunpack.c.0.s8 %v4617
        %v4619 = vlaneseq
        %v4620 = vshrl.u32 %v4619, 7
        %v4621 = vsub.s32 %v4618, %v4620
        %v4622 = vrot.slane %v4615, %v4621
        %v4623 = vcombine.low %v4252, %v4254
        %v4625 = vunpack.c.l.s4 1983009808
        %v4626 = vunpack.c.0.s8 %v4625
        %v4627 = vlaneseq
        %v4628 = vshrl.u32 %v4627, 7
        %v4629 = vsub.s32 %v4626, %v4628
        %v4630 = vrot.slane %v4623, %v4629
        %v4631 = vcombine.low %v4255, %v4257
        %v4633 = vunpack.c.l.s4 1983009808
        %v4634 = vunpack.c.0.s8 %v4633
        %v4635 = vlaneseq
        %v4636 = vshrl.u32 %v4635, 7
        %v4637 = vsub.s32 %v4634, %v4636
        %v4638 = vrot.slane %v4631, %v4637
        %v4639 = vcombine.low %v4256, %v4258
        %v4641 = vunpack.c.l.s4 1983009808
        %v4642 = vunpack.c.0.s8 %v4641
        %v4643 = vlaneseq
        %v4644 = vshrl.u32 %v4643, 7
        %v4645 = vsub.s32 %v4642, %v4644
        %v4646 = vrot.slane %v4639, %v4645
        %v4647 = vcombine.low %v4622, %v4630
        %v4648 = vcombine.high %v4622, %v4630
        %v4650 = vunpack.c.l.s4 1934713408
        %v4651 = vunpack.c.0.s8 %v4650
        %v4652 = vlaneseq
        %v4653 = vshrl.u32 %v4652, 7
        %v4654 = vsub.s32 %v4651, %v4653
        %v4655 = vrot.slane %v4647, %v4654
        %v4657 = vunpack.c.l.s4 1934713408
        %v4658 = vunpack.c.0.s8 %v4657
        %v4659 = vlaneseq
        %v4660 = vshrl.u32 %v4659, 7
        %v4661 = vsub.s32 %v4658, %v4660
        %v4662 = vrot.slane %v4648, %v4661
        %v4663 = vcombine.low %v4638, %v4646
        %v4664 = vcombine.high %v4638, %v4646
        %v4666 = vunpack.c.l.s4 1934713408
        %v4667 = vunpack.c.0.s8 %v4666
        %v4668 = vlaneseq
        %v4669 = vshrl.u32 %v4668, 7
        %v4670 = vsub.s32 %v4667, %v4669
        %v4671 = vrot.slane %v4663, %v4670
        %v4673 = vunpack.c.l.s4 1934713408
        %v4674 = vunpack.c.0.s8 %v4673
        %v4675 = vlaneseq
        %v4676 = vshrl.u32 %v4675, 7
        %v4677 = vsub.s32 %v4674, %v4676
        %v4678 = vrot.slane %v4664, %v4677
        %v4679 = vcombine.low %v4655, %v4671
        %v4680 = vcombine.high %v4655, %v4671
        %v4681 = vcombine.low %v4662, %v4678
        %v4682 = vcombine.high %v4662, %v4678
        %v4683 = vcombine.low %v4259, %v4261
        %v4685 = vunpack.c.l.s4 1983009808
        %v4686 = vunpack.c.0.s8 %v4685
        %v4687 = vlaneseq
        %v4688 = vshrl.u32 %v4687, 7
        %v4689 = vsub.s32 %v4686, %v4688
        %v4690 = vrot.slane %v4683, %v4689
        %v4691 = vcombine.low %v4260, %v4262
        %v4693 = vunpack.c.l.s4 1983009808
        %v4694 = vunpack.c.0.s8 %v4693
        %v4695 = vlaneseq
        %v4696 = vshrl.u32 %v4695, 7
        %v4697 = vsub.s32 %v4694, %v4696
        %v4698 = vrot.slane %v4691, %v4697
        %v4699 = vcombine.low %v4263, %v4265
        %v4701 = vunpack.c.l.s4 1983009808
        %v4702 = vunpack.c.0.s8 %v4701
        %v4703 = vlaneseq
        %v4704 = vshrl.u32 %v4703, 7
        %v4705 = vsub.s32 %v4702, %v4704
        %v4706 = vrot.slane %v4699, %v4705
        %v4707 = vcombine.low %v4264, %v4266
        %v4709 = vunpack.c.l.s4 1983009808
        %v4710 = vunpack.c.0.s8 %v4709
        %v4711 = vlaneseq
        %v4712 = vshrl.u32 %v4711, 7
        %v4713 = vsub.s32 %v4710, %v4712
        %v4714 = vrot.slane %v4707, %v4713
        %v4715 = vcombine.low %v4690, %v4698
        %v4716 = vcombine.high %v4690, %v4698
        %v4718 = vunpack.c.l.s4 1934713408
        %v4719 = vunpack.c.0.s8 %v4718
        %v4720 = vlaneseq
        %v4721 = vshrl.u32 %v4720, 7
        %v4722 = vsub.s32 %v4719, %v4721
        %v4723 = vrot.slane %v4715, %v4722
        %v4725 = vunpack.c.l.s4 1934713408
        %v4726 = vunpack.c.0.s8 %v4725
        %v4727 = vlaneseq
        %v4728 = vshrl.u32 %v4727, 7
        %v4729 = vsub.s32 %v4726, %v4728
        %v4730 = vrot.slane %v4716, %v4729
        %v4731 = vcombine.low %v4706, %v4714
        %v4732 = vcombine.high %v4706, %v4714
        %v4734 = vunpack.c.l.s4 1934713408
        %v4735 = vunpack.c.0.s8 %v4734
        %v4736 = vlaneseq
        %v4737 = vshrl.u32 %v4736, 7
        %v4738 = vsub.s32 %v4735, %v4737
        %v4739 = vrot.slane %v4731, %v4738
        %v4741 = vunpack.c.l.s4 1934713408
        %v4742 = vunpack.c.0.s8 %v4741
        %v4743 = vlaneseq
        %v4744 = vshrl.u32 %v4743, 7
        %v4745 = vsub.s32 %v4742, %v4744
        %v4746 = vrot.slane %v4732, %v4745
        %v4747 = vcombine.low %v4723, %v4739
        %v4748 = vcombine.high %v4723, %v4739
        %v4749 = vcombine.low %v4730, %v4746
        %v4750 = vcombine.high %v4730, %v4746
        %v4751 = vcombine.low %v4267, %v4269
        %v4753 = vunpack.c.l.s4 1983009808
        %v4754 = vunpack.c.0.s8 %v4753
        %v4755 = vlaneseq
        %v4756 = vshrl.u32 %v4755, 7
        %v4757 = vsub.s32 %v4754, %v4756
        %v4758 = vrot.slane %v4751, %v4757
        %v4759 = vcombine.low %v4268, %v4270
        %v4761 = vunpack.c.l.s4 1983009808
        %v4762 = vunpack.c.0.s8 %v4761
        %v4763 = vlaneseq
        %v4764 = vshrl.u32 %v4763, 7
        %v4765 = vsub.s32 %v4762, %v4764
        %v4766 = vrot.slane %v4759, %v4765
        %v4767 = vcombine.low %v4271, %v4273
        %v4769 = vunpack.c.l.s4 1983009808
        %v4770 = vunpack.c.0.s8 %v4769
        %v4771 = vlaneseq
        %v4772 = vshrl.u32 %v4771, 7
        %v4773 = vsub.s32 %v4770, %v4772
        %v4774 = vrot.slane %v4767, %v4773
        %v4775 = vcombine.low %v4272, %v4274
        %v4777 = vunpack.c.l.s4 1983009808
        %v4778 = vunpack.c.0.s8 %v4777
        %v4779 = vlaneseq
        %v4780 = vshrl.u32 %v4779, 7
        %v4781 = vsub.s32 %v4778, %v4780
        %v4782 = vrot.slane %v4775, %v4781
        %v4783 = vcombine.low %v4758, %v4766
        %v4784 = vcombine.high %v4758, %v4766
        %v4786 = vunpack.c.l.s4 1934713408
        %v4787 = vunpack.c.0.s8 %v4786
        %v4788 = vlaneseq
        %v4789 = vshrl.u32 %v4788, 7
        %v4790 = vsub.s32 %v4787, %v4789
        %v4791 = vrot.slane %v4783, %v4790
        %v4793 = vunpack.c.l.s4 1934713408
        %v4794 = vunpack.c.0.s8 %v4793
        %v4795 = vlaneseq
        %v4796 = vshrl.u32 %v4795, 7
        %v4797 = vsub.s32 %v4794, %v4796
        %v4798 = vrot.slane %v4784, %v4797
        %v4799 = vcombine.low %v4774, %v4782
        %v4800 = vcombine.high %v4774, %v4782
        %v4802 = vunpack.c.l.s4 1934713408
        %v4803 = vunpack.c.0.s8 %v4802
        %v4804 = vlaneseq
        %v4805 = vshrl.u32 %v4804, 7
        %v4806 = vsub.s32 %v4803, %v4805
        %v4807 = vrot.slane %v4799, %v4806
        %v4809 = vunpack.c.l.s4 1934713408
        %v4810 = vunpack.c.0.s8 %v4809
        %v4811 = vlaneseq
        %v4812 = vshrl.u32 %v4811, 7
        %v4813 = vsub.s32 %v4810, %v4812
        %v4814 = vrot.slane %v4800, %v4813
        %v4815 = vcombine.low %v4791, %v4807
        %v4816 = vcombine.high %v4791, %v4807
        %v4817 = vcombine.low %v4798, %v4814
        %v4818 = vcombine.high %v4798, %v4814
        %4819 = vst [vmem:[%s263] sm:$0xff] %v4339
        %4820 = vst [vmem:[%s263 + $0x8] sm:$0xff] %v4340
        %4821 = vst [vmem:[%s263 + $0x10] sm:$0xff] %v4341
        %4822 = vst [vmem:[%s263 + $0x18] sm:$0xff] %v4342
        %4823 = vst [vmem:[%s263 + $0x20] sm:$0xff] %v4407
        %4824 = vst [vmem:[%s263 + $0x28] sm:$0xff] %v4408
        %4825 = vst [vmem:[%s263 + $0x30] sm:$0xff] %v4409
        %4826 = vst [vmem:[%s263 + $0x38] sm:$0xff] %v4410
        %4827 = vst [vmem:[%s263 + $0x40] sm:$0xff] %v4475
        %4828 = vst [vmem:[%s263 + $0x48] sm:$0xff] %v4476
        %4829 = vst [vmem:[%s263 + $0x50] sm:$0xff] %v4477
        %4830 = vst [vmem:[%s263 + $0x58] sm:$0xff] %v4478
        %4831 = vst [vmem:[%s263 + $0x60] sm:$0xff] %v4543
        %4832 = vst [vmem:[%s263 + $0x68] sm:$0xff] %v4544
        %4833 = vst [vmem:[%s263 + $0x70] sm:$0xff] %v4545
        %4834 = vst [vmem:[%s263 + $0x78] sm:$0xff] %v4546
        %4835 = vst [vmem:[%s263 + $0x80] sm:$0xff] %v4611
        %4836 = vst [vmem:[%s263 + $0x88] sm:$0xff] %v4612
        %4837 = vst [vmem:[%s263 + $0x90] sm:$0xff] %v4613
        %4838 = vst [vmem:[%s263 + $0x98] sm:$0xff] %v4614
        %4839 = vst [vmem:[%s263 + $0xa0] sm:$0xff] %v4679
        %4840 = vst [vmem:[%s263 + $0xa8] sm:$0xff] %v4680
        %4841 = vst [vmem:[%s263 + $0xb0] sm:$0xff] %v4681
        %4842 = vst [vmem:[%s263 + $0xb8] sm:$0xff] %v4682
        %4843 = vst [vmem:[%s263 + $0xc0] sm:$0xff] %v4747
        %4844 = vst [vmem:[%s263 + $0xc8] sm:$0xff] %v4748
        %4845 = vst [vmem:[%s263 + $0xd0] sm:$0xff] %v4749
        %4846 = vst [vmem:[%s263 + $0xd8] sm:$0xff] %v4750
        %4847 = vst [vmem:[%s263 + $0xe0] sm:$0xff] %v4815
        %4848 = vst [vmem:[%s263 + $0xe8] sm:$0xff] %v4816
        %4849 = vst [vmem:[%s263 + $0xf0] sm:$0xff] %v4817
        %4850 = vst [vmem:[%s263 + $0xf8] sm:$0xff] %v4818
        %s4851 = sand.u32 %s135, 1
        %s4852 = scalar_lea.sflag [#allocation7], %s4851
        %s4853 = sand.u32 %s135, 1
        %s4854 = smul.addr %s4853, 256
        %s4855 = scalar_lea.vmem [#allocation11], %s4854
        // Predicated region
        $region53: #{tpu_custom_call.1} parent=35 // pred_check
          %p4856 = pneg %p145
        $region54: #{tpu_custom_call.1} parent=35 // pred_check_branch
          %4858 = sbr.rel (%p4856) target = $region56
        $region55: #{tpu_custom_call.1} parent=35 // pred_region
          %s4859 = smul.u32 2, %s26
          %s4860 = smul.u32 4, %s27
          %s4862 = ssub.s32 4096, 4096
          %4863 = vsyncadd %s4852, %s4862
          %s4864 = smul.addr %s4859, 32
          %s4865 = sadd.s32 %s4860, %s4864
          %s4866 = smul.addr %s4865, 128
          %s4867 = scalar_lea.hbm %s4, %s4866
          %s4868 = sshll.u32 %s4855, 4
          %s4869 = int_to_ptr.vmem [resolvable:$true] %s4868
          %4874 = dma.vmem_to_hbm [thread:$0]  %s4869, 4096, %s4867, %s4852, 512, 1024, 32
        $region56: #{tpu_custom_call.1} parent=35 // pred_fallthru
          _
      $region36: #{tpu_custom_call.1} parent=5 // pred_fallthru
        _
      %p4875 = scmp.le.s32.totalorder 2, %s17
      // Predicated region
      $region57: #{tpu_custom_call.1} parent=5 // pred_check
        %p4876 = pneg %p4875
      $region58: #{tpu_custom_call.1} parent=5 // pred_check_branch
        %4878 = sbr.rel (%p4876) target = $region60
      $region59: #{tpu_custom_call.1} parent=5 // pred_region
        %s4879 = ssub.s32 %s17, 2
        // Predicated region
        $region61: #{tpu_custom_call.1} parent=59 // pred_check
          %p4880 = pneg %p151
        $region62: #{tpu_custom_call.1} parent=59 // pred_check_branch
          %4882 = sbr.rel (%p4880) target = $region64
        $region63: #{tpu_custom_call.1} parent=59 // pred_region
          %s4883 = sand.u32 %s136, 1
          %s4884 = scalar_lea.sflag [#allocation7], %s4883
          %s4885 = sand.u32 %s136, 1
          %s4886 = smul.addr %s4885, 256
          %s4887 = scalar_lea.vmem [#allocation11], %s4886
          %4888 = dma.done %s4884, 4096
        $region64: #{tpu_custom_call.1} parent=59 // pred_fallthru
          _
      $region60: #{tpu_custom_call.1} parent=5 // pred_fallthru
        _
    $region6: #{tpu_custom_call.1} parent=1 // loop_footer
      %s21 = sadd.s32 1, %s17
    $region7: #{tpu_custom_call.1} parent=1 // loop_footer_branch
      %16 = sbr.rel target = $region3
    $region8: #{tpu_custom_call.1} parent=1 // loop_exit
      _
    %4889 = vsyncpa [#allocation6], 1
    %s4890 = scalar_lea.sflag [#allocation6], 1
    %4891 = vsyncpa %s4890, 1
    %4892 = vsyncpa [#allocation9], 1
    %4893 = vsyncpa [#allocation7], 1
    %s4894 = scalar_lea.sflag [#allocation7], 1
    %4895 = vsyncpa %s4894, 1

</llo_original>
